<compile_context>
chip_gen: v6e
topology: v6e:2x2x1
jax: 0.10.0
libtpu: 0.0.40
codegen_flags: <defaults>
</compile_context>

<pallas_src>
import math

import jax
import jax.numpy as jnp
from jax.experimental import pallas as pl
from jax.experimental.pallas import tpu as pltpu

# ----------------------------- static model config -----------------------------
# ntypes = (A[target], B, C); canonical etypes = (A->B, B->A, A->C, C->A)
N_A, N_B, N_C = 8, 6, 6
REAL_COUNTS = (N_A, N_B, N_C)
PAD = 8                              # per-type row block, sublane-tile aligned
NT = 3
N_PAD = NT * PAD                     # 24
E = 4
ETYPES = ((0, 1), (1, 0), (0, 2), (2, 0))          # (src_type, dst_type)
# incoming etypes per destination type: dst A <- {B->A, C->A}, dst B <- A->B, dst C <- A->C
INCOMING = tuple(tuple((e, s) for e, (s, d) in enumerate(ETYPES) if d == t)
                 for t in range(NT))

FEAT = (12, 10, 14)                  # raw feature sizes per ntype
EMB, AUG_NUM = 8, 3                  # embedding_size, augmentated_num
IN_DIM = FEAT[0] + EMB               # 20 (target feat + 1 aug type, method='mean')
HID, HEADS = 16, 2                   # hidden_dim, num_heads
LABELS = 4                           # label_num
L0_OUT = HID * HEADS                 # 32
L1_OUT = LABELS                      # 4 (last HGTConv: head_size=label_num, 1 head)

F32 = jnp.float32
MXU_DTYPE = jnp.bfloat16             # MXU operands; accumulation / softmax stay f32

VMEM = pl.BlockSpec(memory_space=pltpu.MemorySpace.VMEM)
SMEM = pl.BlockSpec(memory_space=pltpu.MemorySpace.SMEM)


def _dot(a, b):
    # MXU matmul with bf16 operands and f32 accumulation.
    return jnp.dot(a.astype(MXU_DTYPE), b.astype(MXU_DTYPE),
                   preferred_element_type=F32)


# ----------------------------- fused forward kernel -----------------------------

def _hgt_aug_fused_kernel(
    # SMEM scalars
    alpha_ref,             # [2*NT] sigmoid(skip), layer0 | layer1
    # VMEM tensors (data)
    hA_ref, aug_ref, hB_ref, hC_ref, mask_ref,
    # VMEM tensors (pre-packed weights)
    lutBw_ref, lutBb_ref, lutCw_ref, lutCb_ref,
    wkqv0_ref, watt0_ref, wmsg0_ref, wa0_ref, resw0_ref,
    wkqv1_ref, watt1_ref, wmsg1_ref, wa1_ref, resw1_ref,
    # output
    out_ref,               # [N_A, LABELS]
):
    # Static row / column type-block indicators (rows padded to 8 per type).
    ridx = jax.lax.broadcasted_iota(jnp.int32, (N_PAD, 1), 0)
    cidx = jax.lax.broadcasted_iota(jnp.int32, (1, N_PAD), 1)
    row_m = [((ridx >= PAD * t) & (ridx < PAD * (t + 1))).astype(F32)
             for t in range(NT)]
    col_m = [((cidx >= PAD * t) & (cidx < PAD * (t + 1))).astype(F32)
             for t in range(NT)]
    any_mask = mask_ref[...]                          # [N_PAD, N_PAD] combined adjacency

    def block_diag(x):
        # [N_PAD, F] -> block-diagonal [N_PAD, NT*F]: rows of type t live in block t.
        return jnp.concatenate([x * row_m[t] for t in range(NT)], axis=-1)

    # ---- 1) mean over augmentated_num (method='mean') + look_up_table ----
    acc = aug_ref[0]
    for i in range(1, AUG_NUM):
        acc = acc + aug_ref[i]
    aug_mean = acc * (1.0 / AUG_NUM)                  # [PAD, EMB]

    xA = jnp.concatenate([hA_ref[...], aug_mean], axis=-1)          # identical_map + aug
    xB = _dot(hB_ref[...], lutBw_ref[...]) + lutBb_ref[...]         # Linear look_up_table
    xC = _dot(hC_ref[...], lutCw_ref[...]) + lutCb_ref[...]
    x0 = jnp.concatenate([xA, xB, xC], axis=0)                      # [N_PAD, IN_DIM]

    # ---- 2) one HGTConv layer (block-structured, mask-free per-etype path) ----
    def hgt_layer(x, wkqv_ref, watt_ref, wmsg_ref, wa_ref, resw_ref,
                  alpha_base, heads, dim):
        hd = heads * dim
        x_blk = block_diag(x)                                       # [N_PAD, NT*in]
        # fused K|Q|V for ALL node types: one block-diag matmul (TypedLinear merged)
        kqv = _dot(x_blk, wkqv_ref[...])                            # [N_PAD, 3*hd]
        # one K transpose per layer, hoisted out of the head loop
        kT = kqv[:, 0:hd].T.astype(MXU_DTYPE)                       # [hd, N_PAD]

        def attend(h):
            q_h = kqv[:, hd + h * dim: hd + (h + 1) * dim]          # [N_PAD, D]
            v_h = kqv[:, 2 * hd + h * dim: 2 * hd + (h + 1) * dim]
            kT_h = kT[h * dim:(h + 1) * dim, :]                     # aligned sublane slice
            blocks = []
            for t_d in range(NT):                                   # per destination type
                rows = slice(PAD * t_d, PAD * (t_d + 1))
                inc = INCOMING[t_d]
                if not inc:
                    blocks.append(jnp.zeros((PAD, dim), F32))
                    continue
                q_d = q_h[rows, :]                                  # [PAD, D]
                score = None                                        # [PAD, N_PAD]
                vm = None                                           # [N_PAD, D]
                for (e, t_s) in inc:
                    # relation_att (pri/sqrt(D) pre-folded) on the query side
                    qw = _dot(q_d, watt_ref[h, e]).astype(MXU_DTYPE)
                    s_e = col_m[t_s] * jnp.dot(qw, kT_h, preferred_element_type=F32)
                    score = s_e if score is None else score + s_e
                    # relation_msg on the source-type rows only (row mask is static)
                    vm_e = _dot(v_h * row_m[t_s], wmsg_ref[h, e])
                    vm = vm_e if vm is None else vm + vm_e
                # edge_softmax over incoming edges (lane-axis reduction), f32 path
                am = any_mask[rows, :]
                score = jnp.where(am > 0.0, score, jnp.float32(-1e30))
                mx = jnp.max(score, axis=-1, keepdims=True)
                p = jnp.exp(score - mx) * am
                denom = jnp.sum(p, axis=-1, keepdims=True)
                agg_un = jnp.dot(p.astype(MXU_DTYPE), vm.astype(MXU_DTYPE),
                                 preferred_element_type=F32)        # [PAD, D]
                blocks.append(agg_un / jnp.where(denom > 0.0, denom, 1.0))
            return jnp.concatenate(blocks, axis=0)                  # [N_PAD, D]

        heads_out = [attend(h) for h in range(heads)]
        agg = heads_out[0] if heads == 1 else jnp.concatenate(heads_out, axis=-1)

        # target-specific aggregation: linear_a for all ntypes in ONE block-diag matmul
        o = _dot(block_diag(agg), wa_ref[...])                      # [N_PAD, out]
        # TODO(synk): DGL uses exact (erf) GELU; tanh approximation kept for Mosaic.
        o = jax.nn.gelu(o, approximate=True)
        # residual projection (row-tiled resW -> one matmul for all types).
        # TODO(synk): stock dgl.nn.HGTConv only alpha-skips when shapes match;
        #             resW mixing kept to preserve the original HGT_AUG port.
        res = _dot(x_blk, resw_ref[...])                            # [N_PAD, out]
        a_rows = alpha_ref[alpha_base] * row_m[0]
        for t in range(1, NT):
            a_rows = a_rows + alpha_ref[alpha_base + t] * row_m[t]
        return o * a_rows + res * (1.0 - a_rows)

    # layer 0: HGTConv(20 -> 16, heads=2); layer 1: HGTConv(32 -> 4, heads=1)
    x1 = hgt_layer(x0, wkqv0_ref, watt0_ref, wmsg0_ref, wa0_ref, resw0_ref,
                   0, HEADS, HID)
    x2 = hgt_layer(x1, wkqv1_ref, watt1_ref, wmsg1_ref, wa1_ref, resw1_ref,
                   NT, 1, L1_OUT)
    # only the target category's (type A) rows are returned
    out_ref[...] = x2[0:N_A, :].astype(out_ref.dtype)


# ----------------------------- weight packing (once) -----------------------------

def _pack_layer(p, heads, dim):
    nt, in_dim, hd = p['Wk'].shape
    # K|Q|V fused along output dim, per-type weights stacked along contraction dim
    wkqv = jnp.concatenate([p['Wk'], p['Wq'], p['Wv']], axis=-1)     # [NT, in, 3*hd]
    wkqv = wkqv.reshape(nt * in_dim, 3 * hd)
    # relation_pri / sqrt(D) folded into relation_att (applied as q @ Watt^T)
    scale = p['pri'][:, :, None, None] * (1.0 / math.sqrt(dim))
    watt = scale * jnp.swapaxes(p['Watt'], -1, -2)                   # [H, E, D, D]
    wmsg = p['Wmsg']                                                 # [H, E, D, D]
    wa = p['Wa'].reshape(nt * hd, -1)                                # [NT*hd, out]
    resw = jnp.concatenate([p['resW']] * nt, axis=0)                 # [NT*in, out]
    return (wkqv.astype(MXU_DTYPE), watt.astype(MXU_DTYPE), wmsg.astype(MXU_DTYPE),
            wa.astype(MXU_DTYPE), resw.astype(MXU_DTYPE))


def pack_params(params):
    """Pre-pack / pre-cast all weights ONCE (hoisted out of the per-call jit)."""
    p0, p1 = params['layer0'], params['layer1']
    return {
        'alpha': jax.nn.sigmoid(jnp.concatenate([p0['skip'], p1['skip']])).astype(F32),
        'lutBw': params['lut_B_w'].astype(MXU_DTYPE),
        'lutBb': params['lut_B_b'].reshape(1, IN_DIM).astype(F32),
        'lutCw': params['lut_C_w'].astype(MXU_DTYPE),
        'lutCb': params['lut_C_b'].reshape(1, IN_DIM).astype(F32),
        'layer0': _pack_layer(p0, HEADS, HID),
        'layer1': _pack_layer(p1, 1, L1_OUT),
    }


# ----------------------------- per-call wrapper -----------------------------

@jax.jit
def hgt_aug_forward(packed, h_dict, aug_features, any_mask):
    """Full HGT_AUG forward (method='mean', eval: dropout=id, norm=False)."""
    hA = h_dict['A']                                                 # [8, 12]
    hB = jnp.zeros((PAD, FEAT[1]), F32).at[:N_B].set(h_dict['B'])    # pad to 8 rows
    hC = jnp.zeros((PAD, FEAT[2]), F32).at[:N_C].set(h_dict['C'])
    aug = aug_features['t1']                                         # [AUG_NUM, 8, EMB]

    return pl.pallas_call(
        _hgt_aug_fused_kernel,
        out_shape=jax.ShapeDtypeStruct((N_A, LABELS), F32),
        in_specs=[SMEM] + [VMEM] * 19,
        out_specs=VMEM,
    )(
        packed['alpha'],
        hA, aug, hB, hC, any_mask,
        packed['lutBw'], packed['lutBb'], packed['lutCw'], packed['lutCb'],
        *packed['layer0'], *packed['layer1'],
    )


# ----------------------------- parameters & demo -----------------------------

def init_params(key):
    keys = iter(jax.random.split(key, 64))

    def nrm(shape):
        return 0.1 * jax.random.normal(next(keys), shape, jnp.float32)

    return {
        'lut_B_w': nrm((FEAT[1], IN_DIM)), 'lut_B_b': nrm((IN_DIM,)),
        'lut_C_w': nrm((FEAT[2], IN_DIM)), 'lut_C_b': nrm((IN_DIM,)),
        'layer0': {
            'Wk': nrm((NT, IN_DIM, L0_OUT)), 'Wq': nrm((NT, IN_DIM, L0_OUT)),
            'Wv': nrm((NT, IN_DIM, L0_OUT)), 'Wa': nrm((NT, L0_OUT, L0_OUT)),
            'pri': jnp.ones((HEADS, E), jnp.float32),        # relation_pri init = 1
            'Watt': nrm((HEADS, E, HID, HID)), 'Wmsg': nrm((HEADS, E, HID, HID)),
            'skip': jnp.ones((NT,), jnp.float32),            # skip init = 1
            'resW': nrm((IN_DIM, L0_OUT)),
        },
        'layer1': {
            'Wk': nrm((NT, L0_OUT, L1_OUT)), 'Wq': nrm((NT, L0_OUT, L1_OUT)),
            'Wv': nrm((NT, L0_OUT, L1_OUT)), 'Wa': nrm((NT, L1_OUT, L1_OUT)),
            'pri': jnp.ones((1, E), jnp.float32),
            'Watt': nrm((1, E, L1_OUT, L1_OUT)), 'Wmsg': nrm((1, E, L1_OUT, L1_OUT)),
            'skip': jnp.ones((NT,), jnp.float32),
            'resW': nrm((L0_OUT, L1_OUT)),
        },
    }


if __name__ == "__main__":
    key = jax.random.PRNGKey(0)
    k_feat, k_aug, k_mask, k_param = jax.random.split(key, 4)
    kA, kB, kC = jax.random.split(k_feat, 3)
    h_dict = {
        'A': jax.random.normal(kA, (N_A, FEAT[0]), jnp.float32),
        'B': jax.random.normal(kB, (N_B, FEAT[1]), jnp.float32),
        'C': jax.random.normal(kC, (N_C, FEAT[2]), jnp.float32),
    }
    aug_features = {'t1': jax.random.normal(k_aug, (AUG_NUM, N_A, EMB), jnp.float32)}

    # Combined adjacency in (dst, src) orientation at the PADDED row layout.
    # Per-etype structure is implicit in the (src_type, dst_type) blocks; the kernel
    # never needs dense per-etype masks.
    any_mask = jnp.zeros((N_PAD, N_PAD), jnp.float32)
    mk = k_mask
    for (st, dt) in ETYPES:
        mk, sub = jax.random.split(mk)
        ns, nd = REAL_COUNTS[st], REAL_COUNTS[dt]
        block = (jax.random.uniform(sub, (nd, ns)) < 0.5).astype(jnp.float32)
        any_mask = any_mask.at[PAD * dt:PAD * dt + nd,
                               PAD * st:PAD * st + ns].set(block)

    params = init_params(k_param)
    packed = pack_params(params)            # weight repack done ONCE, outside the jit

    logits = hgt_aug_forward(packed, h_dict, aug_features, any_mask)
    logits = jax.block_until_ready(logits)
    assert logits.shape == (N_A, LABELS), logits.shape
    assert bool(jnp.all(jnp.isfinite(logits)))
    print("KERNEL_OK")
</pallas_src>

<mosaic_0001>
module attributes {stable_mosaic.version = 11 : i64} {
  func.func @_hgt_aug_fused_kernel(%arg0: memref<6xf32, #tpu.memory_space<smem>>, %arg1: memref<8x12xf32, #tpu.memory_space<vmem>>, %arg2: memref<3x8x8xf32, #tpu.memory_space<vmem>>, %arg3: memref<8x10xf32, #tpu.memory_space<vmem>>, %arg4: memref<8x14xf32, #tpu.memory_space<vmem>>, %arg5: memref<24x24xf32, #tpu.memory_space<vmem>>, %arg6: memref<10x20xbf16, #tpu.memory_space<vmem>>, %arg7: memref<1x20xf32, #tpu.memory_space<vmem>>, %arg8: memref<14x20xbf16, #tpu.memory_space<vmem>>, %arg9: memref<1x20xf32, #tpu.memory_space<vmem>>, %arg10: memref<60x96xbf16, #tpu.memory_space<vmem>>, %arg11: memref<2x4x16x16xbf16, #tpu.memory_space<vmem>>, %arg12: memref<2x4x16x16xbf16, #tpu.memory_space<vmem>>, %arg13: memref<96x32xbf16, #tpu.memory_space<vmem>>, %arg14: memref<60x32xbf16, #tpu.memory_space<vmem>>, %arg15: memref<96x12xbf16, #tpu.memory_space<vmem>>, %arg16: memref<1x4x4x4xbf16, #tpu.memory_space<vmem>>, %arg17: memref<1x4x4x4xbf16, #tpu.memory_space<vmem>>, %arg18: memref<12x4xbf16, #tpu.memory_space<vmem>>, %arg19: memref<96x4xbf16, #tpu.memory_space<vmem>>, %arg20: memref<8x4xf32, #tpu.memory_space<vmem>>) attributes {dimension_semantics = [], scalar_prefetch = 0 : i64, scratch_operands = 0 : i64, tpu.core_type = #tpu.core_type<tc>} {
    %0 = tpu.iota {dimensions = array<i32: 0>} : vector<24x1xi32>
    %1 = tpu.iota {dimensions = array<i32: 1>} : vector<1x24xi32>
    %c0_i32 = arith.constant 0 : i32
    %2 = vector.broadcast %c0_i32 : i32 to vector<24x1xi32>
    %3 = arith.cmpi sge, %0, %2 : vector<24x1xi32>
    %c8_i32 = arith.constant 8 : i32
    %4 = vector.broadcast %c8_i32 : i32 to vector<24x1xi32>
    %5 = arith.cmpi slt, %0, %4 : vector<24x1xi32>
    %6 = arith.andi %3, %5 : vector<24x1xi1>
    %7 = arith.extui %6 : vector<24x1xi1> to vector<24x1xi32>
    %8 = arith.sitofp %7 : vector<24x1xi32> to vector<24x1xf32>
    %c8_i32_0 = arith.constant 8 : i32
    %9 = vector.broadcast %c8_i32_0 : i32 to vector<24x1xi32>
    %10 = arith.cmpi sge, %0, %9 : vector<24x1xi32>
    %c16_i32 = arith.constant 16 : i32
    %11 = vector.broadcast %c16_i32 : i32 to vector<24x1xi32>
    %12 = arith.cmpi slt, %0, %11 : vector<24x1xi32>
    %13 = arith.andi %10, %12 : vector<24x1xi1>
    %14 = arith.extui %13 : vector<24x1xi1> to vector<24x1xi32>
    %15 = arith.sitofp %14 : vector<24x1xi32> to vector<24x1xf32>
    %c16_i32_1 = arith.constant 16 : i32
    %16 = vector.broadcast %c16_i32_1 : i32 to vector<24x1xi32>
    %17 = arith.cmpi sge, %0, %16 : vector<24x1xi32>
    %c24_i32 = arith.constant 24 : i32
    %18 = vector.broadcast %c24_i32 : i32 to vector<24x1xi32>
    %19 = arith.cmpi slt, %0, %18 : vector<24x1xi32>
    %20 = arith.andi %17, %19 : vector<24x1xi1>
    %21 = arith.extui %20 : vector<24x1xi1> to vector<24x1xi32>
    %22 = arith.sitofp %21 : vector<24x1xi32> to vector<24x1xf32>
    %c0_i32_2 = arith.constant 0 : i32
    %23 = vector.broadcast %c0_i32_2 : i32 to vector<1x24xi32>
    %24 = arith.cmpi sge, %1, %23 : vector<1x24xi32>
    %c8_i32_3 = arith.constant 8 : i32
    %25 = vector.broadcast %c8_i32_3 : i32 to vector<1x24xi32>
    %26 = arith.cmpi slt, %1, %25 : vector<1x24xi32>
    %27 = arith.andi %24, %26 : vector<1x24xi1>
    %28 = arith.extui %27 : vector<1x24xi1> to vector<1x24xi32>
    %29 = arith.sitofp %28 : vector<1x24xi32> to vector<1x24xf32>
    %c8_i32_4 = arith.constant 8 : i32
    %30 = vector.broadcast %c8_i32_4 : i32 to vector<1x24xi32>
    %31 = arith.cmpi sge, %1, %30 : vector<1x24xi32>
    %c16_i32_5 = arith.constant 16 : i32
    %32 = vector.broadcast %c16_i32_5 : i32 to vector<1x24xi32>
    %33 = arith.cmpi slt, %1, %32 : vector<1x24xi32>
    %34 = arith.andi %31, %33 : vector<1x24xi1>
    %35 = arith.extui %34 : vector<1x24xi1> to vector<1x24xi32>
    %36 = arith.sitofp %35 : vector<1x24xi32> to vector<1x24xf32>
    %c16_i32_6 = arith.constant 16 : i32
    %37 = vector.broadcast %c16_i32_6 : i32 to vector<1x24xi32>
    %38 = arith.cmpi sge, %1, %37 : vector<1x24xi32>
    %c24_i32_7 = arith.constant 24 : i32
    %39 = vector.broadcast %c24_i32_7 : i32 to vector<1x24xi32>
    %40 = arith.cmpi slt, %1, %39 : vector<1x24xi32>
    %41 = arith.andi %38, %40 : vector<1x24xi1>
    %42 = arith.extui %41 : vector<1x24xi1> to vector<1x24xi32>
    %43 = arith.sitofp %42 : vector<1x24xi32> to vector<1x24xf32>
    %c0 = arith.constant 0 : index
    %c0_8 = arith.constant 0 : index
    %44 = vector.load %arg5[%c0, %c0_8] : memref<24x24xf32, #tpu.memory_space<vmem>>, vector<24x24xf32>
    %c0_9 = arith.constant 0 : index
    %c0_10 = arith.constant 0 : index
    %c0_11 = arith.constant 0 : index
    %45 = vector.load %arg2[%c0_9, %c0_10, %c0_11] : memref<3x8x8xf32, #tpu.memory_space<vmem>>, vector<1x8x8xf32>
    %46 = vector.shape_cast %45 : vector<1x8x8xf32> to vector<8x8xf32>
    %c1 = arith.constant 1 : index
    %c0_12 = arith.constant 0 : index
    %c0_13 = arith.constant 0 : index
    %47 = vector.load %arg2[%c1, %c0_12, %c0_13] : memref<3x8x8xf32, #tpu.memory_space<vmem>>, vector<1x8x8xf32>
    %48 = vector.shape_cast %47 : vector<1x8x8xf32> to vector<8x8xf32>
    %49 = arith.addf %46, %48 : vector<8x8xf32>
    %c2 = arith.constant 2 : index
    %c0_14 = arith.constant 0 : index
    %c0_15 = arith.constant 0 : index
    %50 = vector.load %arg2[%c2, %c0_14, %c0_15] : memref<3x8x8xf32, #tpu.memory_space<vmem>>, vector<1x8x8xf32>
    %51 = vector.shape_cast %50 : vector<1x8x8xf32> to vector<8x8xf32>
    %52 = arith.addf %49, %51 : vector<8x8xf32>
    %cst = arith.constant 0.333333343 : f32
    %53 = vector.broadcast %cst : f32 to vector<8x8xf32>
    %54 = arith.mulf %52, %53 : vector<8x8xf32>
    %c0_16 = arith.constant 0 : index
    %c0_17 = arith.constant 0 : index
    %55 = vector.load %arg1[%c0_16, %c0_17] : memref<8x12xf32, #tpu.memory_space<vmem>>, vector<8x12xf32>
    %56 = tpu.concatenate %55, %54 in 1 : vector<8x12xf32>, vector<8x8xf32> -> vector<8x20xf32>
    %c0_18 = arith.constant 0 : index
    %c0_19 = arith.constant 0 : index
    %57 = vector.load %arg3[%c0_18, %c0_19] : memref<8x10xf32, #tpu.memory_space<vmem>>, vector<8x10xf32>
    %c0_20 = arith.constant 0 : index
    %c0_21 = arith.constant 0 : index
    %58 = vector.load %arg6[%c0_20, %c0_21] : memref<10x20xbf16, #tpu.memory_space<vmem>>, vector<10x20xbf16>
    %59 = arith.truncf %57 : vector<8x10xf32> to vector<8x10xbf16>
    %cst_22 = arith.constant dense<0.000000e+00> : vector<8x20xf32>
    %60 = tpu.matmul %59, %58, %cst_22 {dimension_numbers = #tpu.dot_dimension_numbers<[1], [0], [0], [1], [0, 0, 1, 1], [], []>} : vector<8x10xbf16>, vector<10x20xbf16>, vector<8x20xf32> -> vector<8x20xf32>
    %c0_23 = arith.constant 0 : index
    %c0_24 = arith.constant 0 : index
    %61 = vector.load %arg7[%c0_23, %c0_24] : memref<1x20xf32, #tpu.memory_space<vmem>>, vector<1x20xf32>
    %62 = vector.broadcast %61 : vector<1x20xf32> to vector<8x20xf32>
    %63 = arith.addf %60, %62 : vector<8x20xf32>
    %c0_25 = arith.constant 0 : index
    %c0_26 = arith.constant 0 : index
    %64 = vector.load %arg4[%c0_25, %c0_26] : memref<8x14xf32, #tpu.memory_space<vmem>>, vector<8x14xf32>
    %c0_27 = arith.constant 0 : index
    %c0_28 = arith.constant 0 : index
    %65 = vector.load %arg8[%c0_27, %c0_28] : memref<14x20xbf16, #tpu.memory_space<vmem>>, vector<14x20xbf16>
    %66 = arith.truncf %64 : vector<8x14xf32> to vector<8x14xbf16>
    %cst_29 = arith.constant dense<0.000000e+00> : vector<8x20xf32>
    %67 = tpu.matmul %66, %65, %cst_29 {dimension_numbers = #tpu.dot_dimension_numbers<[1], [0], [0], [1], [0, 0, 1, 1], [], []>} : vector<8x14xbf16>, vector<14x20xbf16>, vector<8x20xf32> -> vector<8x20xf32>
    %c0_30 = arith.constant 0 : index
    %c0_31 = arith.constant 0 : index
    %68 = vector.load %arg9[%c0_30, %c0_31] : memref<1x20xf32, #tpu.memory_space<vmem>>, vector<1x20xf32>
    %69 = vector.broadcast %68 : vector<1x20xf32> to vector<8x20xf32>
    %70 = arith.addf %67, %69 : vector<8x20xf32>
    %71 = tpu.concatenate %56, %63, %70 in 0 : vector<8x20xf32>, vector<8x20xf32>, vector<8x20xf32> -> vector<24x20xf32>
    %72 = vector.broadcast %8 : vector<24x1xf32> to vector<24x20xf32>
    %73 = arith.mulf %71, %72 : vector<24x20xf32>
    %74 = vector.broadcast %15 : vector<24x1xf32> to vector<24x20xf32>
    %75 = arith.mulf %71, %74 : vector<24x20xf32>
    %76 = vector.broadcast %22 : vector<24x1xf32> to vector<24x20xf32>
    %77 = arith.mulf %71, %76 : vector<24x20xf32>
    %78 = tpu.concatenate %73, %75, %77 in 1 : vector<24x20xf32>, vector<24x20xf32>, vector<24x20xf32> -> vector<24x60xf32>
    %c0_32 = arith.constant 0 : index
    %c0_33 = arith.constant 0 : index
    %79 = vector.load %arg10[%c0_32, %c0_33] : memref<60x96xbf16, #tpu.memory_space<vmem>>, vector<60x96xbf16>
    %80 = arith.truncf %78 : vector<24x60xf32> to vector<24x60xbf16>
    %cst_34 = arith.constant dense<0.000000e+00> : vector<24x96xf32>
    %81 = tpu.matmul %80, %79, %cst_34 {dimension_numbers = #tpu.dot_dimension_numbers<[1], [0], [0], [1], [0, 0, 1, 1], [], []>} : vector<24x60xbf16>, vector<60x96xbf16>, vector<24x96xf32> -> vector<24x96xf32>
    %82 = vector.extract_strided_slice %81 {offsets = [0, 0], sizes = [24, 32], strides = [1, 1]} : vector<24x96xf32> to vector<24x32xf32>
    %83 = tpu.transpose %82, [1, 0] : vector<24x32xf32> -> vector<32x24xf32>
    %84 = arith.truncf %83 : vector<32x24xf32> to vector<32x24xbf16>
    %85 = vector.extract_strided_slice %81 {offsets = [0, 32], sizes = [24, 16], strides = [1, 1]} : vector<24x96xf32> to vector<24x16xf32>
    %86 = vector.extract_strided_slice %81 {offsets = [0, 64], sizes = [24, 16], strides = [1, 1]} : vector<24x96xf32> to vector<24x16xf32>
    %87 = vector.extract_strided_slice %84 {offsets = [0, 0], sizes = [16, 24], strides = [1, 1]} : vector<32x24xbf16> to vector<16x24xbf16>
    %88 = vector.extract_strided_slice %85 {offsets = [0, 0], sizes = [8, 16], strides = [1, 1]} : vector<24x16xf32> to vector<8x16xf32>
    %c0_35 = arith.constant 0 : index
    %c1_36 = arith.constant 1 : index
    %c0_37 = arith.constant 0 : index
    %c0_38 = arith.constant 0 : index
    %89 = vector.load %arg11[%c0_35, %c1_36, %c0_37, %c0_38] : memref<2x4x16x16xbf16, #tpu.memory_space<vmem>>, vector<1x1x16x16xbf16>
    %90 = vector.shape_cast %89 : vector<1x1x16x16xbf16> to vector<16x16xbf16>
    %91 = arith.truncf %88 : vector<8x16xf32> to vector<8x16xbf16>
    %cst_39 = arith.constant dense<0.000000e+00> : vector<8x16xf32>
    %92 = tpu.matmul %91, %90, %cst_39 {dimension_numbers = #tpu.dot_dimension_numbers<[1], [0], [0], [1], [0, 0, 1, 1], [], []>} : vector<8x16xbf16>, vector<16x16xbf16>, vector<8x16xf32> -> vector<8x16xf32>
    %93 = arith.truncf %92 : vector<8x16xf32> to vector<8x16xbf16>
    %cst_40 = arith.constant dense<0.000000e+00> : vector<8x24xf32>
    %94 = tpu.matmul %93, %87, %cst_40 {dimension_numbers = #tpu.dot_dimension_numbers<[1], [0], [0], [1], [0, 0, 1, 1], [], []>} : vector<8x16xbf16>, vector<16x24xbf16>, vector<8x24xf32> -> vector<8x24xf32>
    %95 = vector.broadcast %36 : vector<1x24xf32> to vector<8x24xf32>
    %96 = arith.mulf %95, %94 : vector<8x24xf32>
    %97 = vector.broadcast %15 : vector<24x1xf32> to vector<24x16xf32>
    %98 = arith.mulf %86, %97 : vector<24x16xf32>
    %c0_41 = arith.constant 0 : index
    %c1_42 = arith.constant 1 : index
    %c0_43 = arith.constant 0 : index
    %c0_44 = arith.constant 0 : index
    %99 = vector.load %arg12[%c0_41, %c1_42, %c0_43, %c0_44] : memref<2x4x16x16xbf16, #tpu.memory_space<vmem>>, vector<1x1x16x16xbf16>
    %100 = vector.shape_cast %99 : vector<1x1x16x16xbf16> to vector<16x16xbf16>
    %101 = arith.truncf %98 : vector<24x16xf32> to vector<24x16xbf16>
    %cst_45 = arith.constant dense<0.000000e+00> : vector<24x16xf32>
    %102 = tpu.matmul %101, %100, %cst_45 {dimension_numbers = #tpu.dot_dimension_numbers<[1], [0], [0], [1], [0, 0, 1, 1], [], []>} : vector<24x16xbf16>, vector<16x16xbf16>, vector<24x16xf32> -> vector<24x16xf32>
    %c0_46 = arith.constant 0 : index
    %c3 = arith.constant 3 : index
    %c0_47 = arith.constant 0 : index
    %c0_48 = arith.constant 0 : index
    %103 = vector.load %arg11[%c0_46, %c3, %c0_47, %c0_48] : memref<2x4x16x16xbf16, #tpu.memory_space<vmem>>, vector<1x1x16x16xbf16>
    %104 = vector.shape_cast %103 : vector<1x1x16x16xbf16> to vector<16x16xbf16>
    %105 = arith.truncf %88 : vector<8x16xf32> to vector<8x16xbf16>
    %cst_49 = arith.constant dense<0.000000e+00> : vector<8x16xf32>
    %106 = tpu.matmul %105, %104, %cst_49 {dimension_numbers = #tpu.dot_dimension_numbers<[1], [0], [0], [1], [0, 0, 1, 1], [], []>} : vector<8x16xbf16>, vector<16x16xbf16>, vector<8x16xf32> -> vector<8x16xf32>
    %107 = arith.truncf %106 : vector<8x16xf32> to vector<8x16xbf16>
    %cst_50 = arith.constant dense<0.000000e+00> : vector<8x24xf32>
    %108 = tpu.matmul %107, %87, %cst_50 {dimension_numbers = #tpu.dot_dimension_numbers<[1], [0], [0], [1], [0, 0, 1, 1], [], []>} : vector<8x16xbf16>, vector<16x24xbf16>, vector<8x24xf32> -> vector<8x24xf32>
    %109 = vector.broadcast %43 : vector<1x24xf32> to vector<8x24xf32>
    %110 = arith.mulf %109, %108 : vector<8x24xf32>
    %111 = arith.addf %96, %110 : vector<8x24xf32>
    %112 = vector.broadcast %22 : vector<24x1xf32> to vector<24x16xf32>
    %113 = arith.mulf %86, %112 : vector<24x16xf32>
    %c0_51 = arith.constant 0 : index
    %c3_52 = arith.constant 3 : index
    %c0_53 = arith.constant 0 : index
    %c0_54 = arith.constant 0 : index
    %114 = vector.load %arg12[%c0_51, %c3_52, %c0_53, %c0_54] : memref<2x4x16x16xbf16, #tpu.memory_space<vmem>>, vector<1x1x16x16xbf16>
    %115 = vector.shape_cast %114 : vector<1x1x16x16xbf16> to vector<16x16xbf16>
    %116 = arith.truncf %113 : vector<24x16xf32> to vector<24x16xbf16>
    %cst_55 = arith.constant dense<0.000000e+00> : vector<24x16xf32>
    %117 = tpu.matmul %116, %115, %cst_55 {dimension_numbers = #tpu.dot_dimension_numbers<[1], [0], [0], [1], [0, 0, 1, 1], [], []>} : vector<24x16xbf16>, vector<16x16xbf16>, vector<24x16xf32> -> vector<24x16xf32>
    %118 = arith.addf %102, %117 : vector<24x16xf32>
    %119 = vector.extract_strided_slice %44 {offsets = [0, 0], sizes = [8, 24], strides = [1, 1]} : vector<24x24xf32> to vector<8x24xf32>
    %cst_56 = arith.constant 0.000000e+00 : f32
    %120 = vector.broadcast %cst_56 : f32 to vector<8x24xf32>
    %121 = arith.cmpf ogt, %119, %120 : vector<8x24xf32>
    %cst_57 = arith.constant -1.000000e+30 : f32
    %122 = vector.broadcast %cst_57 : f32 to vector<8x24xf32>
    %123 = arith.select %121, %111, %122 : vector<8x24xi1>, vector<8x24xf32>
    %cst_58 = arith.constant dense<0xFF800000> : vector<8xf32>
    %124 = vector.multi_reduction <maximumf>, %123, %cst_58 [1] : vector<8x24xf32> to vector<8xf32>
    %125 = vector.shape_cast %124 : vector<8xf32> to vector<8x1xf32>
    %126 = vector.broadcast %125 : vector<8x1xf32> to vector<8x24xf32>
    %127 = arith.subf %123, %126 : vector<8x24xf32>
    %128 = math.exp %127 : vector<8x24xf32>
    %129 = arith.mulf %128, %119 : vector<8x24xf32>
    %cst_59 = arith.constant dense<0.000000e+00> : vector<8xf32>
    %130 = vector.multi_reduction <add>, %129, %cst_59 [1] : vector<8x24xf32> to vector<8xf32>
    %131 = vector.shape_cast %130 : vector<8xf32> to vector<8x1xf32>
    %132 = arith.truncf %129 : vector<8x24xf32> to vector<8x24xbf16>
    %133 = arith.truncf %118 : vector<24x16xf32> to vector<24x16xbf16>
    %cst_60 = arith.constant dense<0.000000e+00> : vector<8x16xf32>
    %134 = tpu.matmul %132, %133, %cst_60 {dimension_numbers = #tpu.dot_dimension_numbers<[1], [0], [0], [1], [0, 0, 1, 1], [], []>} : vector<8x24xbf16>, vector<24x16xbf16>, vector<8x16xf32> -> vector<8x16xf32>
    %cst_61 = arith.constant 0.000000e+00 : f32
    %135 = vector.broadcast %cst_61 : f32 to vector<8x1xf32>
    %136 = arith.cmpf ogt, %131, %135 : vector<8x1xf32>
    %cst_62 = arith.constant 1.000000e+00 : f32
    %137 = vector.broadcast %cst_62 : f32 to vector<8x1xf32>
    %138 = arith.select %136, %131, %137 : vector<8x1xi1>, vector<8x1xf32>
    %139 = vector.broadcast %138 : vector<8x1xf32> to vector<8x16xf32>
    %140 = arith.divf %134, %139 : vector<8x16xf32>
    %141 = vector.extract_strided_slice %85 {offsets = [8, 0], sizes = [8, 16], strides = [1, 1]} : vector<24x16xf32> to vector<8x16xf32>
    %c0_63 = arith.constant 0 : index
    %c0_64 = arith.constant 0 : index
    %c0_65 = arith.constant 0 : index
    %c0_66 = arith.constant 0 : index
    %142 = vector.load %arg11[%c0_63, %c0_64, %c0_65, %c0_66] : memref<2x4x16x16xbf16, #tpu.memory_space<vmem>>, vector<1x1x16x16xbf16>
    %143 = vector.shape_cast %142 : vector<1x1x16x16xbf16> to vector<16x16xbf16>
    %144 = arith.truncf %141 : vector<8x16xf32> to vector<8x16xbf16>
    %cst_67 = arith.constant dense<0.000000e+00> : vector<8x16xf32>
    %145 = tpu.matmul %144, %143, %cst_67 {dimension_numbers = #tpu.dot_dimension_numbers<[1], [0], [0], [1], [0, 0, 1, 1], [], []>} : vector<8x16xbf16>, vector<16x16xbf16>, vector<8x16xf32> -> vector<8x16xf32>
    %146 = arith.truncf %145 : vector<8x16xf32> to vector<8x16xbf16>
    %cst_68 = arith.constant dense<0.000000e+00> : vector<8x24xf32>
    %147 = tpu.matmul %146, %87, %cst_68 {dimension_numbers = #tpu.dot_dimension_numbers<[1], [0], [0], [1], [0, 0, 1, 1], [], []>} : vector<8x16xbf16>, vector<16x24xbf16>, vector<8x24xf32> -> vector<8x24xf32>
    %148 = vector.broadcast %29 : vector<1x24xf32> to vector<8x24xf32>
    %149 = arith.mulf %148, %147 : vector<8x24xf32>
    %150 = vector.broadcast %8 : vector<24x1xf32> to vector<24x16xf32>
    %151 = arith.mulf %86, %150 : vector<24x16xf32>
    %c0_69 = arith.constant 0 : index
    %c0_70 = arith.constant 0 : index
    %c0_71 = arith.constant 0 : index
    %c0_72 = arith.constant 0 : index
    %152 = vector.load %arg12[%c0_69, %c0_70, %c0_71, %c0_72] : memref<2x4x16x16xbf16, #tpu.memory_space<vmem>>, vector<1x1x16x16xbf16>
    %153 = vector.shape_cast %152 : vector<1x1x16x16xbf16> to vector<16x16xbf16>
    %154 = arith.truncf %151 : vector<24x16xf32> to vector<24x16xbf16>
    %cst_73 = arith.constant dense<0.000000e+00> : vector<24x16xf32>
    %155 = tpu.matmul %154, %153, %cst_73 {dimension_numbers = #tpu.dot_dimension_numbers<[1], [0], [0], [1], [0, 0, 1, 1], [], []>} : vector<24x16xbf16>, vector<16x16xbf16>, vector<24x16xf32> -> vector<24x16xf32>
    %156 = vector.extract_strided_slice %44 {offsets = [8, 0], sizes = [8, 24], strides = [1, 1]} : vector<24x24xf32> to vector<8x24xf32>
    %cst_74 = arith.constant 0.000000e+00 : f32
    %157 = vector.broadcast %cst_74 : f32 to vector<8x24xf32>
    %158 = arith.cmpf ogt, %156, %157 : vector<8x24xf32>
    %cst_75 = arith.constant -1.000000e+30 : f32
    %159 = vector.broadcast %cst_75 : f32 to vector<8x24xf32>
    %160 = arith.select %158, %149, %159 : vector<8x24xi1>, vector<8x24xf32>
    %cst_76 = arith.constant dense<0xFF800000> : vector<8xf32>
    %161 = vector.multi_reduction <maximumf>, %160, %cst_76 [1] : vector<8x24xf32> to vector<8xf32>
    %162 = vector.shape_cast %161 : vector<8xf32> to vector<8x1xf32>
    %163 = vector.broadcast %162 : vector<8x1xf32> to vector<8x24xf32>
    %164 = arith.subf %160, %163 : vector<8x24xf32>
    %165 = math.exp %164 : vector<8x24xf32>
    %166 = arith.mulf %165, %156 : vector<8x24xf32>
    %cst_77 = arith.constant dense<0.000000e+00> : vector<8xf32>
    %167 = vector.multi_reduction <add>, %166, %cst_77 [1] : vector<8x24xf32> to vector<8xf32>
    %168 = vector.shape_cast %167 : vector<8xf32> to vector<8x1xf32>
    %169 = arith.truncf %166 : vector<8x24xf32> to vector<8x24xbf16>
    %170 = arith.truncf %155 : vector<24x16xf32> to vector<24x16xbf16>
    %cst_78 = arith.constant dense<0.000000e+00> : vector<8x16xf32>
    %171 = tpu.matmul %169, %170, %cst_78 {dimension_numbers = #tpu.dot_dimension_numbers<[1], [0], [0], [1], [0, 0, 1, 1], [], []>} : vector<8x24xbf16>, vector<24x16xbf16>, vector<8x16xf32> -> vector<8x16xf32>
    %cst_79 = arith.constant 0.000000e+00 : f32
    %172 = vector.broadcast %cst_79 : f32 to vector<8x1xf32>
    %173 = arith.cmpf ogt, %168, %172 : vector<8x1xf32>
    %cst_80 = arith.constant 1.000000e+00 : f32
    %174 = vector.broadcast %cst_80 : f32 to vector<8x1xf32>
    %175 = arith.select %173, %168, %174 : vector<8x1xi1>, vector<8x1xf32>
    %176 = vector.broadcast %175 : vector<8x1xf32> to vector<8x16xf32>
    %177 = arith.divf %171, %176 : vector<8x16xf32>
    %178 = vector.extract_strided_slice %85 {offsets = [16, 0], sizes = [8, 16], strides = [1, 1]} : vector<24x16xf32> to vector<8x16xf32>
    %c0_81 = arith.constant 0 : index
    %c2_82 = arith.constant 2 : index
    %c0_83 = arith.constant 0 : index
    %c0_84 = arith.constant 0 : index
    %179 = vector.load %arg11[%c0_81, %c2_82, %c0_83, %c0_84] : memref<2x4x16x16xbf16, #tpu.memory_space<vmem>>, vector<1x1x16x16xbf16>
    %180 = vector.shape_cast %179 : vector<1x1x16x16xbf16> to vector<16x16xbf16>
    %181 = arith.truncf %178 : vector<8x16xf32> to vector<8x16xbf16>
    %cst_85 = arith.constant dense<0.000000e+00> : vector<8x16xf32>
    %182 = tpu.matmul %181, %180, %cst_85 {dimension_numbers = #tpu.dot_dimension_numbers<[1], [0], [0], [1], [0, 0, 1, 1], [], []>} : vector<8x16xbf16>, vector<16x16xbf16>, vector<8x16xf32> -> vector<8x16xf32>
    %183 = arith.truncf %182 : vector<8x16xf32> to vector<8x16xbf16>
    %cst_86 = arith.constant dense<0.000000e+00> : vector<8x24xf32>
    %184 = tpu.matmul %183, %87, %cst_86 {dimension_numbers = #tpu.dot_dimension_numbers<[1], [0], [0], [1], [0, 0, 1, 1], [], []>} : vector<8x16xbf16>, vector<16x24xbf16>, vector<8x24xf32> -> vector<8x24xf32>
    %185 = vector.broadcast %29 : vector<1x24xf32> to vector<8x24xf32>
    %186 = arith.mulf %185, %184 : vector<8x24xf32>
    %187 = vector.broadcast %8 : vector<24x1xf32> to vector<24x16xf32>
    %188 = arith.mulf %86, %187 : vector<24x16xf32>
    %c0_87 = arith.constant 0 : index
    %c2_88 = arith.constant 2 : index
    %c0_89 = arith.constant 0 : index
    %c0_90 = arith.constant 0 : index
    %189 = vector.load %arg12[%c0_87, %c2_88, %c0_89, %c0_90] : memref<2x4x16x16xbf16, #tpu.memory_space<vmem>>, vector<1x1x16x16xbf16>
    %190 = vector.shape_cast %189 : vector<1x1x16x16xbf16> to vector<16x16xbf16>
    %191 = arith.truncf %188 : vector<24x16xf32> to vector<24x16xbf16>
    %cst_91 = arith.constant dense<0.000000e+00> : vector<24x16xf32>
    %192 = tpu.matmul %191, %190, %cst_91 {dimension_numbers = #tpu.dot_dimension_numbers<[1], [0], [0], [1], [0, 0, 1, 1], [], []>} : vector<24x16xbf16>, vector<16x16xbf16>, vector<24x16xf32> -> vector<24x16xf32>
    %193 = vector.extract_strided_slice %44 {offsets = [16, 0], sizes = [8, 24], strides = [1, 1]} : vector<24x24xf32> to vector<8x24xf32>
    %cst_92 = arith.constant 0.000000e+00 : f32
    %194 = vector.broadcast %cst_92 : f32 to vector<8x24xf32>
    %195 = arith.cmpf ogt, %193, %194 : vector<8x24xf32>
    %cst_93 = arith.constant -1.000000e+30 : f32
    %196 = vector.broadcast %cst_93 : f32 to vector<8x24xf32>
    %197 = arith.select %195, %186, %196 : vector<8x24xi1>, vector<8x24xf32>
    %cst_94 = arith.constant dense<0xFF800000> : vector<8xf32>
    %198 = vector.multi_reduction <maximumf>, %197, %cst_94 [1] : vector<8x24xf32> to vector<8xf32>
    %199 = vector.shape_cast %198 : vector<8xf32> to vector<8x1xf32>
    %200 = vector.broadcast %199 : vector<8x1xf32> to vector<8x24xf32>
    %201 = arith.subf %197, %200 : vector<8x24xf32>
    %202 = math.exp %201 : vector<8x24xf32>
    %203 = arith.mulf %202, %193 : vector<8x24xf32>
    %cst_95 = arith.constant dense<0.000000e+00> : vector<8xf32>
    %204 = vector.multi_reduction <add>, %203, %cst_95 [1] : vector<8x24xf32> to vector<8xf32>
    %205 = vector.shape_cast %204 : vector<8xf32> to vector<8x1xf32>
    %206 = arith.truncf %203 : vector<8x24xf32> to vector<8x24xbf16>
    %207 = arith.truncf %192 : vector<24x16xf32> to vector<24x16xbf16>
    %cst_96 = arith.constant dense<0.000000e+00> : vector<8x16xf32>
    %208 = tpu.matmul %206, %207, %cst_96 {dimension_numbers = #tpu.dot_dimension_numbers<[1], [0], [0], [1], [0, 0, 1, 1], [], []>} : vector<8x24xbf16>, vector<24x16xbf16>, vector<8x16xf32> -> vector<8x16xf32>
    %cst_97 = arith.constant 0.000000e+00 : f32
    %209 = vector.broadcast %cst_97 : f32 to vector<8x1xf32>
    %210 = arith.cmpf ogt, %205, %209 : vector<8x1xf32>
    %cst_98 = arith.constant 1.000000e+00 : f32
    %211 = vector.broadcast %cst_98 : f32 to vector<8x1xf32>
    %212 = arith.select %210, %205, %211 : vector<8x1xi1>, vector<8x1xf32>
    %213 = vector.broadcast %212 : vector<8x1xf32> to vector<8x16xf32>
    %214 = arith.divf %208, %213 : vector<8x16xf32>
    %215 = tpu.concatenate %140, %177, %214 in 0 : vector<8x16xf32>, vector<8x16xf32>, vector<8x16xf32> -> vector<24x16xf32>
    %216 = vector.extract_strided_slice %81 {offsets = [0, 48], sizes = [24, 16], strides = [1, 1]} : vector<24x96xf32> to vector<24x16xf32>
    %217 = vector.extract_strided_slice %81 {offsets = [0, 80], sizes = [24, 16], strides = [1, 1]} : vector<24x96xf32> to vector<24x16xf32>
    %218 = vector.extract_strided_slice %84 {offsets = [16, 0], sizes = [16, 24], strides = [1, 1]} : vector<32x24xbf16> to vector<16x24xbf16>
    %219 = vector.extract_strided_slice %216 {offsets = [0, 0], sizes = [8, 16], strides = [1, 1]} : vector<24x16xf32> to vector<8x16xf32>
    %c1_99 = arith.constant 1 : index
    %c1_100 = arith.constant 1 : index
    %c0_101 = arith.constant 0 : index
    %c0_102 = arith.constant 0 : index
    %220 = vector.load %arg11[%c1_99, %c1_100, %c0_101, %c0_102] : memref<2x4x16x16xbf16, #tpu.memory_space<vmem>>, vector<1x1x16x16xbf16>
    %221 = vector.shape_cast %220 : vector<1x1x16x16xbf16> to vector<16x16xbf16>
    %222 = arith.truncf %219 : vector<8x16xf32> to vector<8x16xbf16>
    %cst_103 = arith.constant dense<0.000000e+00> : vector<8x16xf32>
    %223 = tpu.matmul %222, %221, %cst_103 {dimension_numbers = #tpu.dot_dimension_numbers<[1], [0], [0], [1], [0, 0, 1, 1], [], []>} : vector<8x16xbf16>, vector<16x16xbf16>, vector<8x16xf32> -> vector<8x16xf32>
    %224 = arith.truncf %223 : vector<8x16xf32> to vector<8x16xbf16>
    %cst_104 = arith.constant dense<0.000000e+00> : vector<8x24xf32>
    %225 = tpu.matmul %224, %218, %cst_104 {dimension_numbers = #tpu.dot_dimension_numbers<[1], [0], [0], [1], [0, 0, 1, 1], [], []>} : vector<8x16xbf16>, vector<16x24xbf16>, vector<8x24xf32> -> vector<8x24xf32>
    %226 = vector.broadcast %36 : vector<1x24xf32> to vector<8x24xf32>
    %227 = arith.mulf %226, %225 : vector<8x24xf32>
    %228 = vector.broadcast %15 : vector<24x1xf32> to vector<24x16xf32>
    %229 = arith.mulf %217, %228 : vector<24x16xf32>
    %c1_105 = arith.constant 1 : index
    %c1_106 = arith.constant 1 : index
    %c0_107 = arith.constant 0 : index
    %c0_108 = arith.constant 0 : index
    %230 = vector.load %arg12[%c1_105, %c1_106, %c0_107, %c0_108] : memref<2x4x16x16xbf16, #tpu.memory_space<vmem>>, vector<1x1x16x16xbf16>
    %231 = vector.shape_cast %230 : vector<1x1x16x16xbf16> to vector<16x16xbf16>
    %232 = arith.truncf %229 : vector<24x16xf32> to vector<24x16xbf16>
    %cst_109 = arith.constant dense<0.000000e+00> : vector<24x16xf32>
    %233 = tpu.matmul %232, %231, %cst_109 {dimension_numbers = #tpu.dot_dimension_numbers<[1], [0], [0], [1], [0, 0, 1, 1], [], []>} : vector<24x16xbf16>, vector<16x16xbf16>, vector<24x16xf32> -> vector<24x16xf32>
    %c1_110 = arith.constant 1 : index
    %c3_111 = arith.constant 3 : index
    %c0_112 = arith.constant 0 : index
    %c0_113 = arith.constant 0 : index
    %234 = vector.load %arg11[%c1_110, %c3_111, %c0_112, %c0_113] : memref<2x4x16x16xbf16, #tpu.memory_space<vmem>>, vector<1x1x16x16xbf16>
    %235 = vector.shape_cast %234 : vector<1x1x16x16xbf16> to vector<16x16xbf16>
    %236 = arith.truncf %219 : vector<8x16xf32> to vector<8x16xbf16>
    %cst_114 = arith.constant dense<0.000000e+00> : vector<8x16xf32>
    %237 = tpu.matmul %236, %235, %cst_114 {dimension_numbers = #tpu.dot_dimension_numbers<[1], [0], [0], [1], [0, 0, 1, 1], [], []>} : vector<8x16xbf16>, vector<16x16xbf16>, vector<8x16xf32> -> vector<8x16xf32>
    %238 = arith.truncf %237 : vector<8x16xf32> to vector<8x16xbf16>
    %cst_115 = arith.constant dense<0.000000e+00> : vector<8x24xf32>
    %239 = tpu.matmul %238, %218, %cst_115 {dimension_numbers = #tpu.dot_dimension_numbers<[1], [0], [0], [1], [0, 0, 1, 1], [], []>} : vector<8x16xbf16>, vector<16x24xbf16>, vector<8x24xf32> -> vector<8x24xf32>
    %240 = vector.broadcast %43 : vector<1x24xf32> to vector<8x24xf32>
    %241 = arith.mulf %240, %239 : vector<8x24xf32>
    %242 = arith.addf %227, %241 : vector<8x24xf32>
    %243 = vector.broadcast %22 : vector<24x1xf32> to vector<24x16xf32>
    %244 = arith.mulf %217, %243 : vector<24x16xf32>
    %c1_116 = arith.constant 1 : index
    %c3_117 = arith.constant 3 : index
    %c0_118 = arith.constant 0 : index
    %c0_119 = arith.constant 0 : index
    %245 = vector.load %arg12[%c1_116, %c3_117, %c0_118, %c0_119] : memref<2x4x16x16xbf16, #tpu.memory_space<vmem>>, vector<1x1x16x16xbf16>
    %246 = vector.shape_cast %245 : vector<1x1x16x16xbf16> to vector<16x16xbf16>
    %247 = arith.truncf %244 : vector<24x16xf32> to vector<24x16xbf16>
    %cst_120 = arith.constant dense<0.000000e+00> : vector<24x16xf32>
    %248 = tpu.matmul %247, %246, %cst_120 {dimension_numbers = #tpu.dot_dimension_numbers<[1], [0], [0], [1], [0, 0, 1, 1], [], []>} : vector<24x16xbf16>, vector<16x16xbf16>, vector<24x16xf32> -> vector<24x16xf32>
    %249 = arith.addf %233, %248 : vector<24x16xf32>
    %250 = vector.extract_strided_slice %44 {offsets = [0, 0], sizes = [8, 24], strides = [1, 1]} : vector<24x24xf32> to vector<8x24xf32>
    %cst_121 = arith.constant 0.000000e+00 : f32
    %251 = vector.broadcast %cst_121 : f32 to vector<8x24xf32>
    %252 = arith.cmpf ogt, %250, %251 : vector<8x24xf32>
    %cst_122 = arith.constant -1.000000e+30 : f32
    %253 = vector.broadcast %cst_122 : f32 to vector<8x24xf32>
    %254 = arith.select %252, %242, %253 : vector<8x24xi1>, vector<8x24xf32>
    %cst_123 = arith.constant dense<0xFF800000> : vector<8xf32>
    %255 = vector.multi_reduction <maximumf>, %254, %cst_123 [1] : vector<8x24xf32> to vector<8xf32>
    %256 = vector.shape_cast %255 : vector<8xf32> to vector<8x1xf32>
    %257 = vector.broadcast %256 : vector<8x1xf32> to vector<8x24xf32>
    %258 = arith.subf %254, %257 : vector<8x24xf32>
    %259 = math.exp %258 : vector<8x24xf32>
    %260 = arith.mulf %259, %250 : vector<8x24xf32>
    %cst_124 = arith.constant dense<0.000000e+00> : vector<8xf32>
    %261 = vector.multi_reduction <add>, %260, %cst_124 [1] : vector<8x24xf32> to vector<8xf32>
    %262 = vector.shape_cast %261 : vector<8xf32> to vector<8x1xf32>
    %263 = arith.truncf %260 : vector<8x24xf32> to vector<8x24xbf16>
    %264 = arith.truncf %249 : vector<24x16xf32> to vector<24x16xbf16>
    %cst_125 = arith.constant dense<0.000000e+00> : vector<8x16xf32>
    %265 = tpu.matmul %263, %264, %cst_125 {dimension_numbers = #tpu.dot_dimension_numbers<[1], [0], [0], [1], [0, 0, 1, 1], [], []>} : vector<8x24xbf16>, vector<24x16xbf16>, vector<8x16xf32> -> vector<8x16xf32>
    %cst_126 = arith.constant 0.000000e+00 : f32
    %266 = vector.broadcast %cst_126 : f32 to vector<8x1xf32>
    %267 = arith.cmpf ogt, %262, %266 : vector<8x1xf32>
    %cst_127 = arith.constant 1.000000e+00 : f32
    %268 = vector.broadcast %cst_127 : f32 to vector<8x1xf32>
    %269 = arith.select %267, %262, %268 : vector<8x1xi1>, vector<8x1xf32>
    %270 = vector.broadcast %269 : vector<8x1xf32> to vector<8x16xf32>
    %271 = arith.divf %265, %270 : vector<8x16xf32>
    %272 = vector.extract_strided_slice %216 {offsets = [8, 0], sizes = [8, 16], strides = [1, 1]} : vector<24x16xf32> to vector<8x16xf32>
    %c1_128 = arith.constant 1 : index
    %c0_129 = arith.constant 0 : index
    %c0_130 = arith.constant 0 : index
    %c0_131 = arith.constant 0 : index
    %273 = vector.load %arg11[%c1_128, %c0_129, %c0_130, %c0_131] : memref<2x4x16x16xbf16, #tpu.memory_space<vmem>>, vector<1x1x16x16xbf16>
    %274 = vector.shape_cast %273 : vector<1x1x16x16xbf16> to vector<16x16xbf16>
    %275 = arith.truncf %272 : vector<8x16xf32> to vector<8x16xbf16>
    %cst_132 = arith.constant dense<0.000000e+00> : vector<8x16xf32>
    %276 = tpu.matmul %275, %274, %cst_132 {dimension_numbers = #tpu.dot_dimension_numbers<[1], [0], [0], [1], [0, 0, 1, 1], [], []>} : vector<8x16xbf16>, vector<16x16xbf16>, vector<8x16xf32> -> vector<8x16xf32>
    %277 = arith.truncf %276 : vector<8x16xf32> to vector<8x16xbf16>
    %cst_133 = arith.constant dense<0.000000e+00> : vector<8x24xf32>
    %278 = tpu.matmul %277, %218, %cst_133 {dimension_numbers = #tpu.dot_dimension_numbers<[1], [0], [0], [1], [0, 0, 1, 1], [], []>} : vector<8x16xbf16>, vector<16x24xbf16>, vector<8x24xf32> -> vector<8x24xf32>
    %279 = vector.broadcast %29 : vector<1x24xf32> to vector<8x24xf32>
    %280 = arith.mulf %279, %278 : vector<8x24xf32>
    %281 = vector.broadcast %8 : vector<24x1xf32> to vector<24x16xf32>
    %282 = arith.mulf %217, %281 : vector<24x16xf32>
    %c1_134 = arith.constant 1 : index
    %c0_135 = arith.constant 0 : index
    %c0_136 = arith.constant 0 : index
    %c0_137 = arith.constant 0 : index
    %283 = vector.load %arg12[%c1_134, %c0_135, %c0_136, %c0_137] : memref<2x4x16x16xbf16, #tpu.memory_space<vmem>>, vector<1x1x16x16xbf16>
    %284 = vector.shape_cast %283 : vector<1x1x16x16xbf16> to vector<16x16xbf16>
    %285 = arith.truncf %282 : vector<24x16xf32> to vector<24x16xbf16>
    %cst_138 = arith.constant dense<0.000000e+00> : vector<24x16xf32>
    %286 = tpu.matmul %285, %284, %cst_138 {dimension_numbers = #tpu.dot_dimension_numbers<[1], [0], [0], [1], [0, 0, 1, 1], [], []>} : vector<24x16xbf16>, vector<16x16xbf16>, vector<24x16xf32> -> vector<24x16xf32>
    %287 = vector.extract_strided_slice %44 {offsets = [8, 0], sizes = [8, 24], strides = [1, 1]} : vector<24x24xf32> to vector<8x24xf32>
    %cst_139 = arith.constant 0.000000e+00 : f32
    %288 = vector.broadcast %cst_139 : f32 to vector<8x24xf32>
    %289 = arith.cmpf ogt, %287, %288 : vector<8x24xf32>
    %cst_140 = arith.constant -1.000000e+30 : f32
    %290 = vector.broadcast %cst_140 : f32 to vector<8x24xf32>
    %291 = arith.select %289, %280, %290 : vector<8x24xi1>, vector<8x24xf32>
    %cst_141 = arith.constant dense<0xFF800000> : vector<8xf32>
    %292 = vector.multi_reduction <maximumf>, %291, %cst_141 [1] : vector<8x24xf32> to vector<8xf32>
    %293 = vector.shape_cast %292 : vector<8xf32> to vector<8x1xf32>
    %294 = vector.broadcast %293 : vector<8x1xf32> to vector<8x24xf32>
    %295 = arith.subf %291, %294 : vector<8x24xf32>
    %296 = math.exp %295 : vector<8x24xf32>
    %297 = arith.mulf %296, %287 : vector<8x24xf32>
    %cst_142 = arith.constant dense<0.000000e+00> : vector<8xf32>
    %298 = vector.multi_reduction <add>, %297, %cst_142 [1] : vector<8x24xf32> to vector<8xf32>
    %299 = vector.shape_cast %298 : vector<8xf32> to vector<8x1xf32>
    %300 = arith.truncf %297 : vector<8x24xf32> to vector<8x24xbf16>
    %301 = arith.truncf %286 : vector<24x16xf32> to vector<24x16xbf16>
    %cst_143 = arith.constant dense<0.000000e+00> : vector<8x16xf32>
    %302 = tpu.matmul %300, %301, %cst_143 {dimension_numbers = #tpu.dot_dimension_numbers<[1], [0], [0], [1], [0, 0, 1, 1], [], []>} : vector<8x24xbf16>, vector<24x16xbf16>, vector<8x16xf32> -> vector<8x16xf32>
    %cst_144 = arith.constant 0.000000e+00 : f32
    %303 = vector.broadcast %cst_144 : f32 to vector<8x1xf32>
    %304 = arith.cmpf ogt, %299, %303 : vector<8x1xf32>
    %cst_145 = arith.constant 1.000000e+00 : f32
    %305 = vector.broadcast %cst_145 : f32 to vector<8x1xf32>
    %306 = arith.select %304, %299, %305 : vector<8x1xi1>, vector<8x1xf32>
    %307 = vector.broadcast %306 : vector<8x1xf32> to vector<8x16xf32>
    %308 = arith.divf %302, %307 : vector<8x16xf32>
    %309 = vector.extract_strided_slice %216 {offsets = [16, 0], sizes = [8, 16], strides = [1, 1]} : vector<24x16xf32> to vector<8x16xf32>
    %c1_146 = arith.constant 1 : index
    %c2_147 = arith.constant 2 : index
    %c0_148 = arith.constant 0 : index
    %c0_149 = arith.constant 0 : index
    %310 = vector.load %arg11[%c1_146, %c2_147, %c0_148, %c0_149] : memref<2x4x16x16xbf16, #tpu.memory_space<vmem>>, vector<1x1x16x16xbf16>
    %311 = vector.shape_cast %310 : vector<1x1x16x16xbf16> to vector<16x16xbf16>
    %312 = arith.truncf %309 : vector<8x16xf32> to vector<8x16xbf16>
    %cst_150 = arith.constant dense<0.000000e+00> : vector<8x16xf32>
    %313 = tpu.matmul %312, %311, %cst_150 {dimension_numbers = #tpu.dot_dimension_numbers<[1], [0], [0], [1], [0, 0, 1, 1], [], []>} : vector<8x16xbf16>, vector<16x16xbf16>, vector<8x16xf32> -> vector<8x16xf32>
    %314 = arith.truncf %313 : vector<8x16xf32> to vector<8x16xbf16>
    %cst_151 = arith.constant dense<0.000000e+00> : vector<8x24xf32>
    %315 = tpu.matmul %314, %218, %cst_151 {dimension_numbers = #tpu.dot_dimension_numbers<[1], [0], [0], [1], [0, 0, 1, 1], [], []>} : vector<8x16xbf16>, vector<16x24xbf16>, vector<8x24xf32> -> vector<8x24xf32>
    %316 = vector.broadcast %29 : vector<1x24xf32> to vector<8x24xf32>
    %317 = arith.mulf %316, %315 : vector<8x24xf32>
    %318 = vector.broadcast %8 : vector<24x1xf32> to vector<24x16xf32>
    %319 = arith.mulf %217, %318 : vector<24x16xf32>
    %c1_152 = arith.constant 1 : index
    %c2_153 = arith.constant 2 : index
    %c0_154 = arith.constant 0 : index
    %c0_155 = arith.constant 0 : index
    %320 = vector.load %arg12[%c1_152, %c2_153, %c0_154, %c0_155] : memref<2x4x16x16xbf16, #tpu.memory_space<vmem>>, vector<1x1x16x16xbf16>
    %321 = vector.shape_cast %320 : vector<1x1x16x16xbf16> to vector<16x16xbf16>
    %322 = arith.truncf %319 : vector<24x16xf32> to vector<24x16xbf16>
    %cst_156 = arith.constant dense<0.000000e+00> : vector<24x16xf32>
    %323 = tpu.matmul %322, %321, %cst_156 {dimension_numbers = #tpu.dot_dimension_numbers<[1], [0], [0], [1], [0, 0, 1, 1], [], []>} : vector<24x16xbf16>, vector<16x16xbf16>, vector<24x16xf32> -> vector<24x16xf32>
    %324 = vector.extract_strided_slice %44 {offsets = [16, 0], sizes = [8, 24], strides = [1, 1]} : vector<24x24xf32> to vector<8x24xf32>
    %cst_157 = arith.constant 0.000000e+00 : f32
    %325 = vector.broadcast %cst_157 : f32 to vector<8x24xf32>
    %326 = arith.cmpf ogt, %324, %325 : vector<8x24xf32>
    %cst_158 = arith.constant -1.000000e+30 : f32
    %327 = vector.broadcast %cst_158 : f32 to vector<8x24xf32>
    %328 = arith.select %326, %317, %327 : vector<8x24xi1>, vector<8x24xf32>
    %cst_159 = arith.constant dense<0xFF800000> : vector<8xf32>
    %329 = vector.multi_reduction <maximumf>, %328, %cst_159 [1] : vector<8x24xf32> to vector<8xf32>
    %330 = vector.shape_cast %329 : vector<8xf32> to vector<8x1xf32>
    %331 = vector.broadcast %330 : vector<8x1xf32> to vector<8x24xf32>
    %332 = arith.subf %328, %331 : vector<8x24xf32>
    %333 = math.exp %332 : vector<8x24xf32>
    %334 = arith.mulf %333, %324 : vector<8x24xf32>
    %cst_160 = arith.constant dense<0.000000e+00> : vector<8xf32>
    %335 = vector.multi_reduction <add>, %334, %cst_160 [1] : vector<8x24xf32> to vector<8xf32>
    %336 = vector.shape_cast %335 : vector<8xf32> to vector<8x1xf32>
    %337 = arith.truncf %334 : vector<8x24xf32> to vector<8x24xbf16>
    %338 = arith.truncf %323 : vector<24x16xf32> to vector<24x16xbf16>
    %cst_161 = arith.constant dense<0.000000e+00> : vector<8x16xf32>
    %339 = tpu.matmul %337, %338, %cst_161 {dimension_numbers = #tpu.dot_dimension_numbers<[1], [0], [0], [1], [0, 0, 1, 1], [], []>} : vector<8x24xbf16>, vector<24x16xbf16>, vector<8x16xf32> -> vector<8x16xf32>
    %cst_162 = arith.constant 0.000000e+00 : f32
    %340 = vector.broadcast %cst_162 : f32 to vector<8x1xf32>
    %341 = arith.cmpf ogt, %336, %340 : vector<8x1xf32>
    %cst_163 = arith.constant 1.000000e+00 : f32
    %342 = vector.broadcast %cst_163 : f32 to vector<8x1xf32>
    %343 = arith.select %341, %336, %342 : vector<8x1xi1>, vector<8x1xf32>
    %344 = vector.broadcast %343 : vector<8x1xf32> to vector<8x16xf32>
    %345 = arith.divf %339, %344 : vector<8x16xf32>
    %346 = tpu.concatenate %271, %308, %345 in 0 : vector<8x16xf32>, vector<8x16xf32>, vector<8x16xf32> -> vector<24x16xf32>
    %347 = tpu.concatenate %215, %346 in 1 : vector<24x16xf32>, vector<24x16xf32> -> vector<24x32xf32>
    %348 = vector.broadcast %8 : vector<24x1xf32> to vector<24x32xf32>
    %349 = arith.mulf %347, %348 : vector<24x32xf32>
    %350 = vector.broadcast %15 : vector<24x1xf32> to vector<24x32xf32>
    %351 = arith.mulf %347, %350 : vector<24x32xf32>
    %352 = vector.broadcast %22 : vector<24x1xf32> to vector<24x32xf32>
    %353 = arith.mulf %347, %352 : vector<24x32xf32>
    %354 = tpu.concatenate %349, %351, %353 in 1 : vector<24x32xf32>, vector<24x32xf32>, vector<24x32xf32> -> vector<24x96xf32>
    %c0_164 = arith.constant 0 : index
    %c0_165 = arith.constant 0 : index
    %355 = vector.load %arg13[%c0_164, %c0_165] : memref<96x32xbf16, #tpu.memory_space<vmem>>, vector<96x32xbf16>
    %356 = arith.truncf %354 : vector<24x96xf32> to vector<24x96xbf16>
    %cst_166 = arith.constant dense<0.000000e+00> : vector<24x32xf32>
    %357 = tpu.matmul %356, %355, %cst_166 {dimension_numbers = #tpu.dot_dimension_numbers<[1], [0], [0], [1], [0, 0, 1, 1], [], []>} : vector<24x96xbf16>, vector<96x32xbf16>, vector<24x32xf32> -> vector<24x32xf32>
    %358 = arith.mulf %357, %357 : vector<24x32xf32>
    %359 = arith.mulf %357, %358 : vector<24x32xf32>
    %cst_167 = arith.constant 4.471500e-02 : f32
    %360 = vector.broadcast %cst_167 : f32 to vector<24x32xf32>
    %361 = arith.mulf %360, %359 : vector<24x32xf32>
    %362 = arith.addf %357, %361 : vector<24x32xf32>
    %cst_168 = arith.constant 0.797884583 : f32
    %363 = vector.broadcast %cst_168 : f32 to vector<24x32xf32>
    %364 = arith.mulf %363, %362 : vector<24x32xf32>
    %365 = math.tanh %364 : vector<24x32xf32>
    %cst_169 = arith.constant 1.000000e+00 : f32
    %366 = vector.broadcast %cst_169 : f32 to vector<24x32xf32>
    %367 = arith.addf %366, %365 : vector<24x32xf32>
    %cst_170 = arith.constant 5.000000e-01 : f32
    %368 = vector.broadcast %cst_170 : f32 to vector<24x32xf32>
    %369 = arith.mulf %368, %367 : vector<24x32xf32>
    %370 = arith.mulf %357, %369 : vector<24x32xf32>
    %c0_171 = arith.constant 0 : index
    %c0_172 = arith.constant 0 : index
    %371 = vector.load %arg14[%c0_171, %c0_172] : memref<60x32xbf16, #tpu.memory_space<vmem>>, vector<60x32xbf16>
    %372 = arith.truncf %78 : vector<24x60xf32> to vector<24x60xbf16>
    %cst_173 = arith.constant dense<0.000000e+00> : vector<24x32xf32>
    %373 = tpu.matmul %372, %371, %cst_173 {dimension_numbers = #tpu.dot_dimension_numbers<[1], [0], [0], [1], [0, 0, 1, 1], [], []>} : vector<24x60xbf16>, vector<60x32xbf16>, vector<24x32xf32> -> vector<24x32xf32>
    %c0_174 = arith.constant 0 : index
    %374 = memref.load %arg0[%c0_174] : memref<6xf32, #tpu.memory_space<smem>>
    %375 = vector.broadcast %374 : f32 to vector<24x1xf32>
    %376 = arith.mulf %375, %8 : vector<24x1xf32>
    %c1_175 = arith.constant 1 : index
    %377 = memref.load %arg0[%c1_175] : memref<6xf32, #tpu.memory_space<smem>>
    %378 = vector.broadcast %377 : f32 to vector<24x1xf32>
    %379 = arith.mulf %378, %15 : vector<24x1xf32>
    %380 = arith.addf %376, %379 : vector<24x1xf32>
    %c2_176 = arith.constant 2 : index
    %381 = memref.load %arg0[%c2_176] : memref<6xf32, #tpu.memory_space<smem>>
    %382 = vector.broadcast %381 : f32 to vector<24x1xf32>
    %383 = arith.mulf %382, %22 : vector<24x1xf32>
    %384 = arith.addf %380, %383 : vector<24x1xf32>
    %385 = vector.broadcast %384 : vector<24x1xf32> to vector<24x32xf32>
    %386 = arith.mulf %370, %385 : vector<24x32xf32>
    %cst_177 = arith.constant 1.000000e+00 : f32
    %387 = vector.broadcast %cst_177 : f32 to vector<24x1xf32>
    %388 = arith.subf %387, %384 : vector<24x1xf32>
    %389 = vector.broadcast %388 : vector<24x1xf32> to vector<24x32xf32>
    %390 = arith.mulf %373, %389 : vector<24x32xf32>
    %391 = arith.addf %386, %390 : vector<24x32xf32>
    %392 = vector.broadcast %8 : vector<24x1xf32> to vector<24x32xf32>
    %393 = arith.mulf %391, %392 : vector<24x32xf32>
    %394 = vector.broadcast %15 : vector<24x1xf32> to vector<24x32xf32>
    %395 = arith.mulf %391, %394 : vector<24x32xf32>
    %396 = vector.broadcast %22 : vector<24x1xf32> to vector<24x32xf32>
    %397 = arith.mulf %391, %396 : vector<24x32xf32>
    %398 = tpu.concatenate %393, %395, %397 in 1 : vector<24x32xf32>, vector<24x32xf32>, vector<24x32xf32> -> vector<24x96xf32>
    %c0_178 = arith.constant 0 : index
    %c0_179 = arith.constant 0 : index
    %399 = vector.load %arg15[%c0_178, %c0_179] : memref<96x12xbf16, #tpu.memory_space<vmem>>, vector<96x12xbf16>
    %400 = arith.truncf %398 : vector<24x96xf32> to vector<24x96xbf16>
    %cst_180 = arith.constant dense<0.000000e+00> : vector<24x12xf32>
    %401 = tpu.matmul %400, %399, %cst_180 {dimension_numbers = #tpu.dot_dimension_numbers<[1], [0], [0], [1], [0, 0, 1, 1], [], []>} : vector<24x96xbf16>, vector<96x12xbf16>, vector<24x12xf32> -> vector<24x12xf32>
    %402 = vector.extract_strided_slice %401 {offsets = [0, 0], sizes = [24, 4], strides = [1, 1]} : vector<24x12xf32> to vector<24x4xf32>
    %403 = tpu.transpose %402, [1, 0] : vector<24x4xf32> -> vector<4x24xf32>
    %404 = arith.truncf %403 : vector<4x24xf32> to vector<4x24xbf16>
    %405 = vector.extract_strided_slice %401 {offsets = [0, 4], sizes = [24, 4], strides = [1, 1]} : vector<24x12xf32> to vector<24x4xf32>
    %406 = vector.extract_strided_slice %401 {offsets = [0, 8], sizes = [24, 4], strides = [1, 1]} : vector<24x12xf32> to vector<24x4xf32>
    %407 = vector.extract_strided_slice %405 {offsets = [0, 0], sizes = [8, 4], strides = [1, 1]} : vector<24x4xf32> to vector<8x4xf32>
    %c0_181 = arith.constant 0 : index
    %c1_182 = arith.constant 1 : index
    %c0_183 = arith.constant 0 : index
    %c0_184 = arith.constant 0 : index
    %408 = vector.load %arg16[%c0_181, %c1_182, %c0_183, %c0_184] : memref<1x4x4x4xbf16, #tpu.memory_space<vmem>>, vector<1x1x4x4xbf16>
    %409 = vector.shape_cast %408 : vector<1x1x4x4xbf16> to vector<4x4xbf16>
    %410 = arith.truncf %407 : vector<8x4xf32> to vector<8x4xbf16>
    %cst_185 = arith.constant dense<0.000000e+00> : vector<8x4xf32>
    %411 = tpu.matmul %410, %409, %cst_185 {dimension_numbers = #tpu.dot_dimension_numbers<[1], [0], [0], [1], [0, 0, 1, 1], [], []>} : vector<8x4xbf16>, vector<4x4xbf16>, vector<8x4xf32> -> vector<8x4xf32>
    %412 = arith.truncf %411 : vector<8x4xf32> to vector<8x4xbf16>
    %cst_186 = arith.constant dense<0.000000e+00> : vector<8x24xf32>
    %413 = tpu.matmul %412, %404, %cst_186 {dimension_numbers = #tpu.dot_dimension_numbers<[1], [0], [0], [1], [0, 0, 1, 1], [], []>} : vector<8x4xbf16>, vector<4x24xbf16>, vector<8x24xf32> -> vector<8x24xf32>
    %414 = vector.broadcast %36 : vector<1x24xf32> to vector<8x24xf32>
    %415 = arith.mulf %414, %413 : vector<8x24xf32>
    %416 = vector.broadcast %15 : vector<24x1xf32> to vector<24x4xf32>
    %417 = arith.mulf %406, %416 : vector<24x4xf32>
    %c0_187 = arith.constant 0 : index
    %c1_188 = arith.constant 1 : index
    %c0_189 = arith.constant 0 : index
    %c0_190 = arith.constant 0 : index
    %418 = vector.load %arg17[%c0_187, %c1_188, %c0_189, %c0_190] : memref<1x4x4x4xbf16, #tpu.memory_space<vmem>>, vector<1x1x4x4xbf16>
    %419 = vector.shape_cast %418 : vector<1x1x4x4xbf16> to vector<4x4xbf16>
    %420 = arith.truncf %417 : vector<24x4xf32> to vector<24x4xbf16>
    %cst_191 = arith.constant dense<0.000000e+00> : vector<24x4xf32>
    %421 = tpu.matmul %420, %419, %cst_191 {dimension_numbers = #tpu.dot_dimension_numbers<[1], [0], [0], [1], [0, 0, 1, 1], [], []>} : vector<24x4xbf16>, vector<4x4xbf16>, vector<24x4xf32> -> vector<24x4xf32>
    %c0_192 = arith.constant 0 : index
    %c3_193 = arith.constant 3 : index
    %c0_194 = arith.constant 0 : index
    %c0_195 = arith.constant 0 : index
    %422 = vector.load %arg16[%c0_192, %c3_193, %c0_194, %c0_195] : memref<1x4x4x4xbf16, #tpu.memory_space<vmem>>, vector<1x1x4x4xbf16>
    %423 = vector.shape_cast %422 : vector<1x1x4x4xbf16> to vector<4x4xbf16>
    %424 = arith.truncf %407 : vector<8x4xf32> to vector<8x4xbf16>
    %cst_196 = arith.constant dense<0.000000e+00> : vector<8x4xf32>
    %425 = tpu.matmul %424, %423, %cst_196 {dimension_numbers = #tpu.dot_dimension_numbers<[1], [0], [0], [1], [0, 0, 1, 1], [], []>} : vector<8x4xbf16>, vector<4x4xbf16>, vector<8x4xf32> -> vector<8x4xf32>
    %426 = arith.truncf %425 : vector<8x4xf32> to vector<8x4xbf16>
    %cst_197 = arith.constant dense<0.000000e+00> : vector<8x24xf32>
    %427 = tpu.matmul %426, %404, %cst_197 {dimension_numbers = #tpu.dot_dimension_numbers<[1], [0], [0], [1], [0, 0, 1, 1], [], []>} : vector<8x4xbf16>, vector<4x24xbf16>, vector<8x24xf32> -> vector<8x24xf32>
    %428 = vector.broadcast %43 : vector<1x24xf32> to vector<8x24xf32>
    %429 = arith.mulf %428, %427 : vector<8x24xf32>
    %430 = arith.addf %415, %429 : vector<8x24xf32>
    %431 = vector.broadcast %22 : vector<24x1xf32> to vector<24x4xf32>
    %432 = arith.mulf %406, %431 : vector<24x4xf32>
    %c0_198 = arith.constant 0 : index
    %c3_199 = arith.constant 3 : index
    %c0_200 = arith.constant 0 : index
    %c0_201 = arith.constant 0 : index
    %433 = vector.load %arg17[%c0_198, %c3_199, %c0_200, %c0_201] : memref<1x4x4x4xbf16, #tpu.memory_space<vmem>>, vector<1x1x4x4xbf16>
    %434 = vector.shape_cast %433 : vector<1x1x4x4xbf16> to vector<4x4xbf16>
    %435 = arith.truncf %432 : vector<24x4xf32> to vector<24x4xbf16>
    %cst_202 = arith.constant dense<0.000000e+00> : vector<24x4xf32>
    %436 = tpu.matmul %435, %434, %cst_202 {dimension_numbers = #tpu.dot_dimension_numbers<[1], [0], [0], [1], [0, 0, 1, 1], [], []>} : vector<24x4xbf16>, vector<4x4xbf16>, vector<24x4xf32> -> vector<24x4xf32>
    %437 = arith.addf %421, %436 : vector<24x4xf32>
    %438 = vector.extract_strided_slice %44 {offsets = [0, 0], sizes = [8, 24], strides = [1, 1]} : vector<24x24xf32> to vector<8x24xf32>
    %cst_203 = arith.constant 0.000000e+00 : f32
    %439 = vector.broadcast %cst_203 : f32 to vector<8x24xf32>
    %440 = arith.cmpf ogt, %438, %439 : vector<8x24xf32>
    %cst_204 = arith.constant -1.000000e+30 : f32
    %441 = vector.broadcast %cst_204 : f32 to vector<8x24xf32>
    %442 = arith.select %440, %430, %441 : vector<8x24xi1>, vector<8x24xf32>
    %cst_205 = arith.constant dense<0xFF800000> : vector<8xf32>
    %443 = vector.multi_reduction <maximumf>, %442, %cst_205 [1] : vector<8x24xf32> to vector<8xf32>
    %444 = vector.shape_cast %443 : vector<8xf32> to vector<8x1xf32>
    %445 = vector.broadcast %444 : vector<8x1xf32> to vector<8x24xf32>
    %446 = arith.subf %442, %445 : vector<8x24xf32>
    %447 = math.exp %446 : vector<8x24xf32>
    %448 = arith.mulf %447, %438 : vector<8x24xf32>
    %cst_206 = arith.constant dense<0.000000e+00> : vector<8xf32>
    %449 = vector.multi_reduction <add>, %448, %cst_206 [1] : vector<8x24xf32> to vector<8xf32>
    %450 = vector.shape_cast %449 : vector<8xf32> to vector<8x1xf32>
    %451 = arith.truncf %448 : vector<8x24xf32> to vector<8x24xbf16>
    %452 = arith.truncf %437 : vector<24x4xf32> to vector<24x4xbf16>
    %cst_207 = arith.constant dense<0.000000e+00> : vector<8x4xf32>
    %453 = tpu.matmul %451, %452, %cst_207 {dimension_numbers = #tpu.dot_dimension_numbers<[1], [0], [0], [1], [0, 0, 1, 1], [], []>} : vector<8x24xbf16>, vector<24x4xbf16>, vector<8x4xf32> -> vector<8x4xf32>
    %cst_208 = arith.constant 0.000000e+00 : f32
    %454 = vector.broadcast %cst_208 : f32 to vector<8x1xf32>
    %455 = arith.cmpf ogt, %450, %454 : vector<8x1xf32>
    %cst_209 = arith.constant 1.000000e+00 : f32
    %456 = vector.broadcast %cst_209 : f32 to vector<8x1xf32>
    %457 = arith.select %455, %450, %456 : vector<8x1xi1>, vector<8x1xf32>
    %458 = vector.broadcast %457 : vector<8x1xf32> to vector<8x4xf32>
    %459 = arith.divf %453, %458 : vector<8x4xf32>
    %460 = vector.extract_strided_slice %405 {offsets = [8, 0], sizes = [8, 4], strides = [1, 1]} : vector<24x4xf32> to vector<8x4xf32>
    %c0_210 = arith.constant 0 : index
    %c0_211 = arith.constant 0 : index
    %c0_212 = arith.constant 0 : index
    %c0_213 = arith.constant 0 : index
    %461 = vector.load %arg16[%c0_210, %c0_211, %c0_212, %c0_213] : memref<1x4x4x4xbf16, #tpu.memory_space<vmem>>, vector<1x1x4x4xbf16>
    %462 = vector.shape_cast %461 : vector<1x1x4x4xbf16> to vector<4x4xbf16>
    %463 = arith.truncf %460 : vector<8x4xf32> to vector<8x4xbf16>
    %cst_214 = arith.constant dense<0.000000e+00> : vector<8x4xf32>
    %464 = tpu.matmul %463, %462, %cst_214 {dimension_numbers = #tpu.dot_dimension_numbers<[1], [0], [0], [1], [0, 0, 1, 1], [], []>} : vector<8x4xbf16>, vector<4x4xbf16>, vector<8x4xf32> -> vector<8x4xf32>
    %465 = arith.truncf %464 : vector<8x4xf32> to vector<8x4xbf16>
    %cst_215 = arith.constant dense<0.000000e+00> : vector<8x24xf32>
    %466 = tpu.matmul %465, %404, %cst_215 {dimension_numbers = #tpu.dot_dimension_numbers<[1], [0], [0], [1], [0, 0, 1, 1], [], []>} : vector<8x4xbf16>, vector<4x24xbf16>, vector<8x24xf32> -> vector<8x24xf32>
    %467 = vector.broadcast %29 : vector<1x24xf32> to vector<8x24xf32>
    %468 = arith.mulf %467, %466 : vector<8x24xf32>
    %469 = vector.broadcast %8 : vector<24x1xf32> to vector<24x4xf32>
    %470 = arith.mulf %406, %469 : vector<24x4xf32>
    %c0_216 = arith.constant 0 : index
    %c0_217 = arith.constant 0 : index
    %c0_218 = arith.constant 0 : index
    %c0_219 = arith.constant 0 : index
    %471 = vector.load %arg17[%c0_216, %c0_217, %c0_218, %c0_219] : memref<1x4x4x4xbf16, #tpu.memory_space<vmem>>, vector<1x1x4x4xbf16>
    %472 = vector.shape_cast %471 : vector<1x1x4x4xbf16> to vector<4x4xbf16>
    %473 = arith.truncf %470 : vector<24x4xf32> to vector<24x4xbf16>
    %cst_220 = arith.constant dense<0.000000e+00> : vector<24x4xf32>
    %474 = tpu.matmul %473, %472, %cst_220 {dimension_numbers = #tpu.dot_dimension_numbers<[1], [0], [0], [1], [0, 0, 1, 1], [], []>} : vector<24x4xbf16>, vector<4x4xbf16>, vector<24x4xf32> -> vector<24x4xf32>
    %475 = vector.extract_strided_slice %44 {offsets = [8, 0], sizes = [8, 24], strides = [1, 1]} : vector<24x24xf32> to vector<8x24xf32>
    %cst_221 = arith.constant 0.000000e+00 : f32
    %476 = vector.broadcast %cst_221 : f32 to vector<8x24xf32>
    %477 = arith.cmpf ogt, %475, %476 : vector<8x24xf32>
    %cst_222 = arith.constant -1.000000e+30 : f32
    %478 = vector.broadcast %cst_222 : f32 to vector<8x24xf32>
    %479 = arith.select %477, %468, %478 : vector<8x24xi1>, vector<8x24xf32>
    %cst_223 = arith.constant dense<0xFF800000> : vector<8xf32>
    %480 = vector.multi_reduction <maximumf>, %479, %cst_223 [1] : vector<8x24xf32> to vector<8xf32>
    %481 = vector.shape_cast %480 : vector<8xf32> to vector<8x1xf32>
    %482 = vector.broadcast %481 : vector<8x1xf32> to vector<8x24xf32>
    %483 = arith.subf %479, %482 : vector<8x24xf32>
    %484 = math.exp %483 : vector<8x24xf32>
    %485 = arith.mulf %484, %475 : vector<8x24xf32>
    %cst_224 = arith.constant dense<0.000000e+00> : vector<8xf32>
    %486 = vector.multi_reduction <add>, %485, %cst_224 [1] : vector<8x24xf32> to vector<8xf32>
    %487 = vector.shape_cast %486 : vector<8xf32> to vector<8x1xf32>
    %488 = arith.truncf %485 : vector<8x24xf32> to vector<8x24xbf16>
    %489 = arith.truncf %474 : vector<24x4xf32> to vector<24x4xbf16>
    %cst_225 = arith.constant dense<0.000000e+00> : vector<8x4xf32>
    %490 = tpu.matmul %488, %489, %cst_225 {dimension_numbers = #tpu.dot_dimension_numbers<[1], [0], [0], [1], [0, 0, 1, 1], [], []>} : vector<8x24xbf16>, vector<24x4xbf16>, vector<8x4xf32> -> vector<8x4xf32>
    %cst_226 = arith.constant 0.000000e+00 : f32
    %491 = vector.broadcast %cst_226 : f32 to vector<8x1xf32>
    %492 = arith.cmpf ogt, %487, %491 : vector<8x1xf32>
    %cst_227 = arith.constant 1.000000e+00 : f32
    %493 = vector.broadcast %cst_227 : f32 to vector<8x1xf32>
    %494 = arith.select %492, %487, %493 : vector<8x1xi1>, vector<8x1xf32>
    %495 = vector.broadcast %494 : vector<8x1xf32> to vector<8x4xf32>
    %496 = arith.divf %490, %495 : vector<8x4xf32>
    %497 = vector.extract_strided_slice %405 {offsets = [16, 0], sizes = [8, 4], strides = [1, 1]} : vector<24x4xf32> to vector<8x4xf32>
    %c0_228 = arith.constant 0 : index
    %c2_229 = arith.constant 2 : index
    %c0_230 = arith.constant 0 : index
    %c0_231 = arith.constant 0 : index
    %498 = vector.load %arg16[%c0_228, %c2_229, %c0_230, %c0_231] : memref<1x4x4x4xbf16, #tpu.memory_space<vmem>>, vector<1x1x4x4xbf16>
    %499 = vector.shape_cast %498 : vector<1x1x4x4xbf16> to vector<4x4xbf16>
    %500 = arith.truncf %497 : vector<8x4xf32> to vector<8x4xbf16>
    %cst_232 = arith.constant dense<0.000000e+00> : vector<8x4xf32>
    %501 = tpu.matmul %500, %499, %cst_232 {dimension_numbers = #tpu.dot_dimension_numbers<[1], [0], [0], [1], [0, 0, 1, 1], [], []>} : vector<8x4xbf16>, vector<4x4xbf16>, vector<8x4xf32> -> vector<8x4xf32>
    %502 = arith.truncf %501 : vector<8x4xf32> to vector<8x4xbf16>
    %cst_233 = arith.constant dense<0.000000e+00> : vector<8x24xf32>
    %503 = tpu.matmul %502, %404, %cst_233 {dimension_numbers = #tpu.dot_dimension_numbers<[1], [0], [0], [1], [0, 0, 1, 1], [], []>} : vector<8x4xbf16>, vector<4x24xbf16>, vector<8x24xf32> -> vector<8x24xf32>
    %504 = vector.broadcast %29 : vector<1x24xf32> to vector<8x24xf32>
    %505 = arith.mulf %504, %503 : vector<8x24xf32>
    %506 = vector.broadcast %8 : vector<24x1xf32> to vector<24x4xf32>
    %507 = arith.mulf %406, %506 : vector<24x4xf32>
    %c0_234 = arith.constant 0 : index
    %c2_235 = arith.constant 2 : index
    %c0_236 = arith.constant 0 : index
    %c0_237 = arith.constant 0 : index
    %508 = vector.load %arg17[%c0_234, %c2_235, %c0_236, %c0_237] : memref<1x4x4x4xbf16, #tpu.memory_space<vmem>>, vector<1x1x4x4xbf16>
    %509 = vector.shape_cast %508 : vector<1x1x4x4xbf16> to vector<4x4xbf16>
    %510 = arith.truncf %507 : vector<24x4xf32> to vector<24x4xbf16>
    %cst_238 = arith.constant dense<0.000000e+00> : vector<24x4xf32>
    %511 = tpu.matmul %510, %509, %cst_238 {dimension_numbers = #tpu.dot_dimension_numbers<[1], [0], [0], [1], [0, 0, 1, 1], [], []>} : vector<24x4xbf16>, vector<4x4xbf16>, vector<24x4xf32> -> vector<24x4xf32>
    %512 = vector.extract_strided_slice %44 {offsets = [16, 0], sizes = [8, 24], strides = [1, 1]} : vector<24x24xf32> to vector<8x24xf32>
    %cst_239 = arith.constant 0.000000e+00 : f32
    %513 = vector.broadcast %cst_239 : f32 to vector<8x24xf32>
    %514 = arith.cmpf ogt, %512, %513 : vector<8x24xf32>
    %cst_240 = arith.constant -1.000000e+30 : f32
    %515 = vector.broadcast %cst_240 : f32 to vector<8x24xf32>
    %516 = arith.select %514, %505, %515 : vector<8x24xi1>, vector<8x24xf32>
    %cst_241 = arith.constant dense<0xFF800000> : vector<8xf32>
    %517 = vector.multi_reduction <maximumf>, %516, %cst_241 [1] : vector<8x24xf32> to vector<8xf32>
    %518 = vector.shape_cast %517 : vector<8xf32> to vector<8x1xf32>
    %519 = vector.broadcast %518 : vector<8x1xf32> to vector<8x24xf32>
    %520 = arith.subf %516, %519 : vector<8x24xf32>
    %521 = math.exp %520 : vector<8x24xf32>
    %522 = arith.mulf %521, %512 : vector<8x24xf32>
    %cst_242 = arith.constant dense<0.000000e+00> : vector<8xf32>
    %523 = vector.multi_reduction <add>, %522, %cst_242 [1] : vector<8x24xf32> to vector<8xf32>
    %524 = vector.shape_cast %523 : vector<8xf32> to vector<8x1xf32>
    %525 = arith.truncf %522 : vector<8x24xf32> to vector<8x24xbf16>
    %526 = arith.truncf %511 : vector<24x4xf32> to vector<24x4xbf16>
    %cst_243 = arith.constant dense<0.000000e+00> : vector<8x4xf32>
    %527 = tpu.matmul %525, %526, %cst_243 {dimension_numbers = #tpu.dot_dimension_numbers<[1], [0], [0], [1], [0, 0, 1, 1], [], []>} : vector<8x24xbf16>, vector<24x4xbf16>, vector<8x4xf32> -> vector<8x4xf32>
    %cst_244 = arith.constant 0.000000e+00 : f32
    %528 = vector.broadcast %cst_244 : f32 to vector<8x1xf32>
    %529 = arith.cmpf ogt, %524, %528 : vector<8x1xf32>
    %cst_245 = arith.constant 1.000000e+00 : f32
    %530 = vector.broadcast %cst_245 : f32 to vector<8x1xf32>
    %531 = arith.select %529, %524, %530 : vector<8x1xi1>, vector<8x1xf32>
    %532 = vector.broadcast %531 : vector<8x1xf32> to vector<8x4xf32>
    %533 = arith.divf %527, %532 : vector<8x4xf32>
    %534 = tpu.concatenate %459, %496, %533 in 0 : vector<8x4xf32>, vector<8x4xf32>, vector<8x4xf32> -> vector<24x4xf32>
    %535 = vector.broadcast %8 : vector<24x1xf32> to vector<24x4xf32>
    %536 = arith.mulf %534, %535 : vector<24x4xf32>
    %537 = vector.broadcast %15 : vector<24x1xf32> to vector<24x4xf32>
    %538 = arith.mulf %534, %537 : vector<24x4xf32>
    %539 = vector.broadcast %22 : vector<24x1xf32> to vector<24x4xf32>
    %540 = arith.mulf %534, %539 : vector<24x4xf32>
    %541 = tpu.concatenate %536, %538, %540 in 1 : vector<24x4xf32>, vector<24x4xf32>, vector<24x4xf32> -> vector<24x12xf32>
    %c0_246 = arith.constant 0 : index
    %c0_247 = arith.constant 0 : index
    %542 = vector.load %arg18[%c0_246, %c0_247] : memref<12x4xbf16, #tpu.memory_space<vmem>>, vector<12x4xbf16>
    %543 = arith.truncf %541 : vector<24x12xf32> to vector<24x12xbf16>
    %cst_248 = arith.constant dense<0.000000e+00> : vector<24x4xf32>
    %544 = tpu.matmul %543, %542, %cst_248 {dimension_numbers = #tpu.dot_dimension_numbers<[1], [0], [0], [1], [0, 0, 1, 1], [], []>} : vector<24x12xbf16>, vector<12x4xbf16>, vector<24x4xf32> -> vector<24x4xf32>
    %545 = arith.mulf %544, %544 : vector<24x4xf32>
    %546 = arith.mulf %544, %545 : vector<24x4xf32>
    %cst_249 = arith.constant 4.471500e-02 : f32
    %547 = vector.broadcast %cst_249 : f32 to vector<24x4xf32>
    %548 = arith.mulf %547, %546 : vector<24x4xf32>
    %549 = arith.addf %544, %548 : vector<24x4xf32>
    %cst_250 = arith.constant 0.797884583 : f32
    %550 = vector.broadcast %cst_250 : f32 to vector<24x4xf32>
    %551 = arith.mulf %550, %549 : vector<24x4xf32>
    %552 = math.tanh %551 : vector<24x4xf32>
    %cst_251 = arith.constant 1.000000e+00 : f32
    %553 = vector.broadcast %cst_251 : f32 to vector<24x4xf32>
    %554 = arith.addf %553, %552 : vector<24x4xf32>
    %cst_252 = arith.constant 5.000000e-01 : f32
    %555 = vector.broadcast %cst_252 : f32 to vector<24x4xf32>
    %556 = arith.mulf %555, %554 : vector<24x4xf32>
    %557 = arith.mulf %544, %556 : vector<24x4xf32>
    %c0_253 = arith.constant 0 : index
    %c0_254 = arith.constant 0 : index
    %558 = vector.load %arg19[%c0_253, %c0_254] : memref<96x4xbf16, #tpu.memory_space<vmem>>, vector<96x4xbf16>
    %559 = arith.truncf %398 : vector<24x96xf32> to vector<24x96xbf16>
    %cst_255 = arith.constant dense<0.000000e+00> : vector<24x4xf32>
    %560 = tpu.matmul %559, %558, %cst_255 {dimension_numbers = #tpu.dot_dimension_numbers<[1], [0], [0], [1], [0, 0, 1, 1], [], []>} : vector<24x96xbf16>, vector<96x4xbf16>, vector<24x4xf32> -> vector<24x4xf32>
    %c3_256 = arith.constant 3 : index
    %561 = memref.load %arg0[%c3_256] : memref<6xf32, #tpu.memory_space<smem>>
    %562 = vector.broadcast %561 : f32 to vector<24x1xf32>
    %563 = arith.mulf %562, %8 : vector<24x1xf32>
    %c4 = arith.constant 4 : index
    %564 = memref.load %arg0[%c4] : memref<6xf32, #tpu.memory_space<smem>>
    %565 = vector.broadcast %564 : f32 to vector<24x1xf32>
    %566 = arith.mulf %565, %15 : vector<24x1xf32>
    %567 = arith.addf %563, %566 : vector<24x1xf32>
    %c5 = arith.constant 5 : index
    %568 = memref.load %arg0[%c5] : memref<6xf32, #tpu.memory_space<smem>>
    %569 = vector.broadcast %568 : f32 to vector<24x1xf32>
    %570 = arith.mulf %569, %22 : vector<24x1xf32>
    %571 = arith.addf %567, %570 : vector<24x1xf32>
    %572 = vector.broadcast %571 : vector<24x1xf32> to vector<24x4xf32>
    %573 = arith.mulf %557, %572 : vector<24x4xf32>
    %cst_257 = arith.constant 1.000000e+00 : f32
    %574 = vector.broadcast %cst_257 : f32 to vector<24x1xf32>
    %575 = arith.subf %574, %571 : vector<24x1xf32>
    %576 = vector.broadcast %575 : vector<24x1xf32> to vector<24x4xf32>
    %577 = arith.mulf %560, %576 : vector<24x4xf32>
    %578 = arith.addf %573, %577 : vector<24x4xf32>
    %579 = vector.extract_strided_slice %578 {offsets = [0, 0], sizes = [8, 4], strides = [1, 1]} : vector<24x4xf32> to vector<8x4xf32>
    %c0_258 = arith.constant 0 : index
    %c0_259 = arith.constant 0 : index
    %580 = vector.load %arg20[%c0_258, %c0_259] : memref<8x4xf32, #tpu.memory_space<vmem>>, vector<8x4xf32>
    tpu.vector_store %arg20[%c0_258, %c0_259], %579 {strides = array<i32>} : memref<8x4xf32, #tpu.memory_space<vmem>>, vector<8x4xf32>,
    return
  }
}

</mosaic_0001>

<llo_original>
// kernel: hgt_aug_forward.1
$region0: #{hgt_aug_forward.1}
  #allocation0 [shape = 'u32[]', space=smem, size = 0x4, offset = 0x4, fixed_abs, tag = 'smem constant byte address 0x4 - core index']
  #allocation1 [shape = 'u32[144,128]{1,0:T(1,128)}', space=vmem, size = 0x12000, scoped, tag = 'internal scratch']
  %s0 = inlined_call_operand.hbm [shape: f32[6], index: 0, kind: input, shape index: {}]
  %s1 = inlined_call_operand.vmem [shape: f32[8,12], index: 1, kind: input, shape index: {}]
  %s2 = inlined_call_operand.vmem [shape: f32[3,8,8], index: 2, kind: input, shape index: {}]
  %s3 = inlined_call_operand.vmem [shape: f32[8,10], index: 3, kind: input, shape index: {}]
  %s4 = inlined_call_operand.vmem [shape: f32[8,14], index: 4, kind: input, shape index: {}]
  %s5 = inlined_call_operand.vmem [shape: f32[24,24], index: 5, kind: input, shape index: {}]
  %s6 = inlined_call_operand.vmem [shape: bf16[10,20], index: 6, kind: input, shape index: {}]
  %s7 = inlined_call_operand.hbm [shape: f32[1,20], index: 7, kind: input, shape index: {}]
  %s8 = inlined_call_operand.hbm [shape: bf16[14,20], index: 8, kind: input, shape index: {}]
  %s9 = inlined_call_operand.vmem [shape: f32[1,20], index: 9, kind: input, shape index: {}]
  %s10 = inlined_call_operand.vmem [shape: bf16[60,96], index: 10, kind: input, shape index: {}]
  %s11 = inlined_call_operand.vmem [shape: bf16[2,4,16,16], index: 11, kind: input, shape index: {}]
  %s12 = inlined_call_operand.vmem [shape: bf16[2,4,16,16], index: 12, kind: input, shape index: {}]
  %s13 = inlined_call_operand.vmem [shape: bf16[96,32], index: 13, kind: input, shape index: {}]
  %s14 = inlined_call_operand.vmem [shape: bf16[60,32], index: 14, kind: input, shape index: {}]
  %s15 = inlined_call_operand.vmem [shape: bf16[96,12], index: 15, kind: input, shape index: {}]
  %s16 = inlined_call_operand.hbm [shape: bf16[1,4,4,4], index: 16, kind: input, shape index: {}]
  %s17 = inlined_call_operand.hbm [shape: bf16[1,4,4,4], index: 17, kind: input, shape index: {}]
  %s18 = inlined_call_operand.vmem [shape: bf16[12,4], index: 18, kind: input, shape index: {}]
  %s19 = inlined_call_operand.vmem [shape: bf16[96,4], index: 19, kind: input, shape index: {}]
  %s20 = inlined_call_operand.vmem [shape: f32[8,4], index: 20, kind: output, shape index: {}]
  %s21 = sld [smem:[#allocation0]]
  $region110: #{hgt_aug_forward.1} parent=0
    _
  %s23 = ssub.s32 1, %s21
  %s24 = scalar_select 0, %s23, %s21
  $region1: #{hgt_aug_forward.1} parent=0
    #allocation2 [shape = 'u8[512]{0}', space=smem, size = 0x200, scoped, tag = 'input window, operand 0, single buffered']
    #allocation3 [shape = 's32[1]{0}', space=sflag, size = 0x4, scoped, tag = 'scoped memory for hgt_aug_forward.1']
    #allocation4 [shape = 's32[1]{0}', space=sflag, size = 0x4, scoped, tag = 'scoped memory for hgt_aug_forward.1']
    #allocation5 [shape = 'u8[512]{0}', space=vmem, size = 0x400, scoped, tag = 'input window, operand 7, single buffered']
    #allocation6 [shape = 'u8[4096]{0}', space=vmem, size = 0x1000, scoped, tag = 'input window, operand 8, single buffered']
    #allocation7 [shape = 's32[1]{0}', space=sflag, size = 0x4, scoped, tag = 'scoped memory for hgt_aug_forward.1']
    #allocation8 [shape = 'u8[4096]{0}', space=vmem, size = 0x1000, scoped, tag = 'input window, operand 16, single buffered']
    #allocation9 [shape = 'u8[4096]{0}', space=vmem, size = 0x1000, scoped, tag = 'input window, operand 17, single buffered']
    #allocation10 [shape = 's32[1]{0}', space=sflag, size = 0x4, scoped, tag = 'scoped memory for hgt_aug_forward.1']
    %25 = vsyncpa [#allocation4], 0
    %26 = vsyncpa [#allocation3], 0
    %27 = vsyncpa [#allocation7], 0
    %28 = vsyncpa [#allocation10], 0
    // Predicated region
    $region2: #{hgt_aug_forward.1} parent=1 // pred_check
      _
    $region3: #{hgt_aug_forward.1} parent=1 // pred_check_branch
      %30 = sbr.rel (0) target = $region5
    $region4: #{hgt_aug_forward.1} parent=1 // pred_region
      %s32 = ssub.s32 16, 16
      %33 = vsyncadd [#allocation4], %s32
      %36 = dma.hbm_to_smem %s0, 16, [#allocation2], [#allocation4]
    $region5: #{hgt_aug_forward.1} parent=1 // pred_fallthru
      _
    // Predicated region
    $region6: #{hgt_aug_forward.1} parent=1 // pred_check
      _
    $region7: #{hgt_aug_forward.1} parent=1 // pred_check_branch
      %38 = sbr.rel (0) target = $region9
    $region8: #{hgt_aug_forward.1} parent=1 // pred_region
      _
    $region9: #{hgt_aug_forward.1} parent=1 // pred_fallthru
      _
    // Predicated region
    $region10: #{hgt_aug_forward.1} parent=1 // pred_check
      _
    $region11: #{hgt_aug_forward.1} parent=1 // pred_check_branch
      %40 = sbr.rel (0) target = $region13
    $region12: #{hgt_aug_forward.1} parent=1 // pred_region
      _
    $region13: #{hgt_aug_forward.1} parent=1 // pred_fallthru
      _
    // Predicated region
    $region14: #{hgt_aug_forward.1} parent=1 // pred_check
      _
    $region15: #{hgt_aug_forward.1} parent=1 // pred_check_branch
      %42 = sbr.rel (0) target = $region17
    $region16: #{hgt_aug_forward.1} parent=1 // pred_region
      _
    $region17: #{hgt_aug_forward.1} parent=1 // pred_fallthru
      _
    // Predicated region
    $region18: #{hgt_aug_forward.1} parent=1 // pred_check
      _
    $region19: #{hgt_aug_forward.1} parent=1 // pred_check_branch
      %44 = sbr.rel (0) target = $region21
    $region20: #{hgt_aug_forward.1} parent=1 // pred_region
      _
    $region21: #{hgt_aug_forward.1} parent=1 // pred_fallthru
      _
    // Predicated region
    $region22: #{hgt_aug_forward.1} parent=1 // pred_check
      _
    $region23: #{hgt_aug_forward.1} parent=1 // pred_check_branch
      %46 = sbr.rel (0) target = $region25
    $region24: #{hgt_aug_forward.1} parent=1 // pred_region
      _
    $region25: #{hgt_aug_forward.1} parent=1 // pred_fallthru
      _
    // Predicated region
    $region26: #{hgt_aug_forward.1} parent=1 // pred_check
      _
    $region27: #{hgt_aug_forward.1} parent=1 // pred_check_branch
      %48 = sbr.rel (0) target = $region29
    $region28: #{hgt_aug_forward.1} parent=1 // pred_region
      _
    $region29: #{hgt_aug_forward.1} parent=1 // pred_fallthru
      _
    // Predicated region
    $region30: #{hgt_aug_forward.1} parent=1 // pred_check
      _
    $region31: #{hgt_aug_forward.1} parent=1 // pred_check_branch
      %50 = sbr.rel (0) target = $region33
    $region32: #{hgt_aug_forward.1} parent=1 // pred_region
      %s52 = ssub.s32 16, 16
      %53 = vsyncadd [#allocation3], %s52
      %s55 = sshll.u32 [#allocation5], 4
      %s56 = int_to_ptr.vmem [resolvable:$true] %s55
      %58 = dma.hbm_to_vmem [thread:$0]  %s7, 16, %s56, [#allocation3]
    $region33: #{hgt_aug_forward.1} parent=1 // pred_fallthru
      _
    // Predicated region
    $region34: #{hgt_aug_forward.1} parent=1 // pred_check
      _
    $region35: #{hgt_aug_forward.1} parent=1 // pred_check_branch
      %60 = sbr.rel (0) target = $region37
    $region36: #{hgt_aug_forward.1} parent=1 // pred_region
      %s62 = ssub.s32 128, 128
      %63 = vsyncadd [#allocation7], %s62
      %s64 = sshll.u32 [#allocation6], 4
      %s65 = int_to_ptr.vmem [resolvable:$true] %s64
      %70 = dma.hbm_to_vmem [thread:$0]  %s8, 128, %s65, [#allocation7], 64, 64, 4
    $region37: #{hgt_aug_forward.1} parent=1 // pred_fallthru
      _
    // Predicated region
    $region38: #{hgt_aug_forward.1} parent=1 // pred_check
      _
    $region39: #{hgt_aug_forward.1} parent=1 // pred_check_branch
      %72 = sbr.rel (0) target = $region41
    $region40: #{hgt_aug_forward.1} parent=1 // pred_region
      _
    $region41: #{hgt_aug_forward.1} parent=1 // pred_fallthru
      _
    // Predicated region
    $region42: #{hgt_aug_forward.1} parent=1 // pred_check
      _
    $region43: #{hgt_aug_forward.1} parent=1 // pred_check_branch
      %74 = sbr.rel (0) target = $region45
    $region44: #{hgt_aug_forward.1} parent=1 // pred_region
      _
    $region45: #{hgt_aug_forward.1} parent=1 // pred_fallthru
      _
    // Predicated region
    $region46: #{hgt_aug_forward.1} parent=1 // pred_check
      _
    $region47: #{hgt_aug_forward.1} parent=1 // pred_check_branch
      %76 = sbr.rel (0) target = $region49
    $region48: #{hgt_aug_forward.1} parent=1 // pred_region
      _
    $region49: #{hgt_aug_forward.1} parent=1 // pred_fallthru
      _
    // Predicated region
    $region50: #{hgt_aug_forward.1} parent=1 // pred_check
      _
    $region51: #{hgt_aug_forward.1} parent=1 // pred_check_branch
      %78 = sbr.rel (0) target = $region53
    $region52: #{hgt_aug_forward.1} parent=1 // pred_region
      _
    $region53: #{hgt_aug_forward.1} parent=1 // pred_fallthru
      _
    // Predicated region
    $region54: #{hgt_aug_forward.1} parent=1 // pred_check
      _
    $region55: #{hgt_aug_forward.1} parent=1 // pred_check_branch
      %80 = sbr.rel (0) target = $region57
    $region56: #{hgt_aug_forward.1} parent=1 // pred_region
      _
    $region57: #{hgt_aug_forward.1} parent=1 // pred_fallthru
      _
    // Predicated region
    $region58: #{hgt_aug_forward.1} parent=1 // pred_check
      _
    $region59: #{hgt_aug_forward.1} parent=1 // pred_check_branch
      %82 = sbr.rel (0) target = $region61
    $region60: #{hgt_aug_forward.1} parent=1 // pred_region
      _
    $region61: #{hgt_aug_forward.1} parent=1 // pred_fallthru
      _
    // Predicated region
    $region62: #{hgt_aug_forward.1} parent=1 // pred_check
      _
    $region63: #{hgt_aug_forward.1} parent=1 // pred_check_branch
      %84 = sbr.rel (0) target = $region65
    $region64: #{hgt_aug_forward.1} parent=1 // pred_region
      _
    $region65: #{hgt_aug_forward.1} parent=1 // pred_fallthru
      _
    // Predicated region
    $region66: #{hgt_aug_forward.1} parent=1 // pred_check
      _
    $region67: #{hgt_aug_forward.1} parent=1 // pred_check_branch
      %86 = sbr.rel (0) target = $region69
    $region68: #{hgt_aug_forward.1} parent=1 // pred_region
      %s88 = ssub.s32 128, 128
      %89 = vsyncadd [#allocation7], %s88
      %s90 = sshll.u32 [#allocation8], 4
      %s91 = int_to_ptr.vmem [resolvable:$true] %s90
      %96 = dma.hbm_to_vmem [thread:$0]  %s16, 128, %s91, [#allocation7], 32, 32, 2
    $region69: #{hgt_aug_forward.1} parent=1 // pred_fallthru
      _
    // Predicated region
    $region70: #{hgt_aug_forward.1} parent=1 // pred_check
      _
    $region71: #{hgt_aug_forward.1} parent=1 // pred_check_branch
      %98 = sbr.rel (0) target = $region73
    $region72: #{hgt_aug_forward.1} parent=1 // pred_region
      %s100 = ssub.s32 128, 128
      %101 = vsyncadd [#allocation10], %s100
      %s102 = sshll.u32 [#allocation9], 4
      %s103 = int_to_ptr.vmem [resolvable:$true] %s102
      %108 = dma.hbm_to_vmem [thread:$0]  %s17, 128, %s103, [#allocation10], 32, 32, 2
    $region73: #{hgt_aug_forward.1} parent=1 // pred_fallthru
      _
    // Predicated region
    $region74: #{hgt_aug_forward.1} parent=1 // pred_check
      _
    $region75: #{hgt_aug_forward.1} parent=1 // pred_check_branch
      %110 = sbr.rel (0) target = $region77
    $region76: #{hgt_aug_forward.1} parent=1 // pred_region
      _
    $region77: #{hgt_aug_forward.1} parent=1 // pred_fallthru
      _
    // Predicated region
    $region78: #{hgt_aug_forward.1} parent=1 // pred_check
      _
    $region79: #{hgt_aug_forward.1} parent=1 // pred_check_branch
      %112 = sbr.rel (0) target = $region81
    $region80: #{hgt_aug_forward.1} parent=1 // pred_region
      _
    $region81: #{hgt_aug_forward.1} parent=1 // pred_fallthru
      _
    // Predicated region
    $region82: #{hgt_aug_forward.1} parent=1 // pred_check
      _
    $region83: #{hgt_aug_forward.1} parent=1 // pred_check_branch
      %114 = sbr.rel (0) target = $region85
    $region84: #{hgt_aug_forward.1} parent=1 // pred_region
      %115 = dma.done [#allocation4], 16
    $region85: #{hgt_aug_forward.1} parent=1 // pred_fallthru
      _
    // Predicated region
    $region86: #{hgt_aug_forward.1} parent=1 // pred_check
      _
    $region87: #{hgt_aug_forward.1} parent=1 // pred_check_branch
      %117 = sbr.rel (0) target = $region89
    $region88: #{hgt_aug_forward.1} parent=1 // pred_region
      %118 = dma.done [#allocation3], 16
    $region89: #{hgt_aug_forward.1} parent=1 // pred_fallthru
      _
    // Predicated region
    $region90: #{hgt_aug_forward.1} parent=1 // pred_check
      _
    $region91: #{hgt_aug_forward.1} parent=1 // pred_check_branch
      %120 = sbr.rel (0) target = $region93
    $region92: #{hgt_aug_forward.1} parent=1 // pred_region
      %121 = dma.done [#allocation7], 128
    $region93: #{hgt_aug_forward.1} parent=1 // pred_fallthru
      _
    // Predicated region
    $region94: #{hgt_aug_forward.1} parent=1 // pred_check
      _
    $region95: #{hgt_aug_forward.1} parent=1 // pred_check_branch
      %123 = sbr.rel (0) target = $region97
    $region96: #{hgt_aug_forward.1} parent=1 // pred_region
      %124 = dma.done [#allocation7], 128
    $region97: #{hgt_aug_forward.1} parent=1 // pred_fallthru
      _
    // Predicated region
    $region98: #{hgt_aug_forward.1} parent=1 // pred_check
      _
    $region99: #{hgt_aug_forward.1} parent=1 // pred_check_branch
      %126 = sbr.rel (0) target = $region101
    $region100: #{hgt_aug_forward.1} parent=1 // pred_region
      %127 = dma.done [#allocation10], 128
    $region101: #{hgt_aug_forward.1} parent=1 // pred_fallthru
      _
    %128 = sfence
    %v130 = vlaneseq
    %v131 = vshrl.u32 %v130, 7
    %v132 = vadd.s32 %v131, 8
    %v133 = vadd.s32 %v131, 16
    %v134 = vlaneseq
    %v135 = vand.u32 %v134, 127
    %vm136 = vcmp.ge.s32.totalorder %v131, 0
    %vm137 = vcmp.ge.s32.totalorder %v132, 0
    %vm138 = vcmp.ge.s32.totalorder %v133, 0
    %vm139 = vcmp.lt.s32.totalorder %v131, 8
    %vm140 = vcmp.lt.s32.totalorder %v132, 8
    %vm141 = vcmp.lt.s32.totalorder %v133, 8
    %vm142 = vmand %vm136, %vm139
    %vm143 = vmand %vm137, %vm140
    %vm144 = vmand %vm138, %vm141
    %v145 = vsel %vm142, 1, 0
    %v146 = vsel %vm143, 1, 0
    %v147 = vsel %vm144, 1, 0
    %v148 = vcvt.s32.f32 %v145
    %v149 = vcvt.s32.f32 %v146
    %v150 = vcvt.s32.f32 %v147
    %vm151 = vcmp.ge.s32.totalorder %v131, 8
    %vm152 = vcmp.ge.s32.totalorder %v132, 8
    %vm153 = vcmp.ge.s32.totalorder %v133, 8
    %vm154 = vcmp.lt.s32.totalorder %v131, 16
    %vm155 = vcmp.lt.s32.totalorder %v132, 16
    %vm156 = vcmp.lt.s32.totalorder %v133, 16
    %vm157 = vmand %vm151, %vm154
    %vm158 = vmand %vm152, %vm155
    %vm159 = vmand %vm153, %vm156
    %v160 = vsel %vm157, 1, 0
    %v161 = vsel %vm158, 1, 0
    %v162 = vsel %vm159, 1, 0
    %v163 = vcvt.s32.f32 %v160
    %v164 = vcvt.s32.f32 %v161
    %v165 = vcvt.s32.f32 %v162
    %vm166 = vcmp.ge.s32.totalorder %v131, 16
    %vm167 = vcmp.ge.s32.totalorder %v132, 16
    %vm168 = vcmp.ge.s32.totalorder %v133, 16
    %vm169 = vcmp.lt.s32.totalorder %v131, 24
    %vm170 = vcmp.lt.s32.totalorder %v132, 24
    %vm171 = vcmp.lt.s32.totalorder %v133, 24
    %vm172 = vmand %vm166, %vm169
    %vm173 = vmand %vm167, %vm170
    %vm174 = vmand %vm168, %vm171
    %v175 = vsel %vm172, 1, 0
    %v176 = vsel %vm173, 1, 0
    %v177 = vsel %vm174, 1, 0
    %v178 = vcvt.s32.f32 %v175
    %v179 = vcvt.s32.f32 %v176
    %v180 = vcvt.s32.f32 %v177
    %vm181 = vcmp.ge.s32.totalorder %v135, 0
    %vm182 = vcmp.lt.s32.totalorder %v135, 8
    %vm183 = vmand %vm181, %vm182
    %v184 = vsel %vm183, 1, 0
    %v185 = vcvt.s32.f32 %v184
    %vm186 = vcmp.ge.s32.totalorder %v135, 8
    %vm187 = vcmp.lt.s32.totalorder %v135, 16
    %vm188 = vmand %vm186, %vm187
    %v189 = vsel %vm188, 1, 0
    %v190 = vcvt.s32.f32 %v189
    %vm191 = vcmp.ge.s32.totalorder %v135, 16
    %vm192 = vcmp.lt.s32.totalorder %v135, 24
    %vm193 = vmand %vm191, %vm192
    %v194 = vsel %vm193, 1, 0
    %v195 = vcvt.s32.f32 %v194
    %v196 = vld [vmem:[%s5] sm:$0xff]
    %v197 = vld [vmem:[%s5 + $0x8] sm:$0xff]
    %v198 = vld [vmem:[%s5 + $0x10] sm:$0xff]
    %v199 = vld [vmem:[%s2] sm:$0xff]
    %s200 = scalar_lea.vmem %s2, 8
    %v201 = vld [vmem:[%s200] sm:$0xff]
    %v202 = vadd.f32 %v199, %v201
    %s203 = scalar_lea.vmem %s2, 16
    %v204 = vld [vmem:[%s203] sm:$0xff]
    %v205 = vadd.f32 %v202, %v204
    %v206 = vmul.f32 %v205, 0.33333334
    %v207 = vld [vmem:[%s1] sm:$0xff]
    %209 = vrot.lane.b32.xlu0 %v206, 12
    %v210 = vpop.permute.xlu0 %209
    %vm212 = vcmask 97280
    %v213 = vsel %vm212, %v207, %v210
    %v214 = vld [vmem:[%s3] sm:$0xff]
    %v215 = vld [vmem:[%s6] sm:$0xf]
    %v216 = vld [vmem:[%s6 + $0x4] sm:$0x1]
    %v217 = vpack.c.bf16 %v214, %v214
    %v218 = vld [vmem:[#allocation5] sm:$0x1]
    %v220 = vlaneseq
    %v221 = vshrl.u32 %v220, 7
    %v222 = vsub.s32 0, %v221
    %v223 = vrot.slane %v218, %v222
    %v227 = vunpack.c.l.b16 %v215
    %v228 = vunpack.c.l.b16 %v216
    %v229 = vpack.c.b16 %v228, %v227
    %vm230 = vcmask 80896
    %v232 = vsel %vm230, %v217, 0
    %vm234 = vcmask 1044480
    %v236 = vsel %vm234, %v229, 0
    %238 = vmatprep.subr.bf16.mxu0 0
    %239 = vmatpush1.bf16.msra.mxu0 0
    %240 = vmatprep.subr.bf16.mxu0 0
    %241 = vmatpush1.bf16.msra.mxu0 0
    %242 = vmatprep.subr.bf16.mxu0 0
    %243 = vmatpush1.bf16.msra.mxu0 0
    %244 = vmatprep.subr.bf16.mxu0 0
    %245 = vmatpush1.bf16.msra.mxu0 0
    %246 = vmatprep.subr.bf16.mxu0 0
    %247 = vmatpush1.bf16.msra.mxu0 0
    %248 = vmatprep.subr.bf16.mxu0 0
    %249 = vmatpush1.bf16.msra.mxu0 0
    %250 = vmatprep.subr.bf16.mxu0 0
    %251 = vmatpush1.bf16.msra.mxu0 0
    %252 = vmatprep.subr.bf16.mxu0 0
    %253 = vmatpush1.bf16.msra.mxu0 %v236
    %254 = vmatprep.subr.bf16.mxu0 0
    %255 = vmatpush2.bf16.msra.mxu0 0
    %256 = vmatprep.subr.bf16.mxu0 0
    %257 = vmatpush2.bf16.msra.mxu0 0
    %258 = vmatprep.subr.bf16.mxu0 0
    %259 = vmatpush2.bf16.msra.mxu0 0
    %260 = vmatprep.subr.bf16.mxu0 0
    %261 = vmatpush2.bf16.msra.mxu0 0
    %262 = vmatprep.subr.bf16.mxu0 0
    %263 = vmatpush2.bf16.msra.mxu0 0
    %264 = vmatprep.subr.bf16.mxu0 0
    %265 = vmatpush2.bf16.msra.mxu0 0
    %266 = vmatprep.subr.bf16.mxu0 0
    %267 = vmatpush2.bf16.msra.mxu0 0
    %268 = vmatprep.subr.bf16.mxu0 0
    %269 = vmatpush2.bf16.msra.mxu0 0
    %270 = vmatprep.mubr.bf16.mxu0 0
    %271 = vmatmul.mubr.bf16.gmra.mxu0 %v232
    %v272 = vpop.f32.mrf.mxu0
    %v273 = vadd.f32 %v223, %v272
    %v274 = vpop.f32.mrf.mxu0
    %v275 = vpop.f32.mrf.mxu0
    %v276 = vpop.f32.mrf.mxu0
    %277 = vdwg.mxu0
    %v278 = vld [vmem:[%s4] sm:$0xff]
    %v279 = vld [vmem:[#allocation6] sm:$0xf]
    %v280 = vld [vmem:[#allocation6 + $0x4] sm:$0x7]
    %v281 = vpack.c.bf16 %v278, %v278
    %v282 = vld [vmem:[%s9] sm:$0x1]
    %v284 = vlaneseq
    %v285 = vshrl.u32 %v284, 7
    %v286 = vsub.s32 0, %v285
    %v287 = vrot.slane %v282, %v286
    %v291 = vunpack.c.l.b16 %v279
    %v292 = vunpack.c.l.b16 %v280
    %v293 = vpack.c.b16 %v292, %v291
    %vm294 = vcmask 113664
    %v296 = vsel %vm294, %v281, 0
    %vm298 = vcmask 1046528
    %v300 = vsel %vm298, %v293, 0
    %302 = vmatprep.subr.bf16.mxu0 0
    %303 = vmatpush1.bf16.msra.mxu0 0
    %304 = vmatprep.subr.bf16.mxu0 0
    %305 = vmatpush1.bf16.msra.mxu0 0
    %306 = vmatprep.subr.bf16.mxu0 0
    %307 = vmatpush1.bf16.msra.mxu0 0
    %308 = vmatprep.subr.bf16.mxu0 0
    %309 = vmatpush1.bf16.msra.mxu0 0
    %310 = vmatprep.subr.bf16.mxu0 0
    %311 = vmatpush1.bf16.msra.mxu0 0
    %312 = vmatprep.subr.bf16.mxu0 0
    %313 = vmatpush1.bf16.msra.mxu0 0
    %314 = vmatprep.subr.bf16.mxu0 0
    %315 = vmatpush1.bf16.msra.mxu0 0
    %316 = vmatprep.subr.bf16.mxu0 0
    %317 = vmatpush1.bf16.msra.mxu0 %v300
    %318 = vmatprep.subr.bf16.mxu0 0
    %319 = vmatpush2.bf16.msra.mxu0 0
    %320 = vmatprep.subr.bf16.mxu0 0
    %321 = vmatpush2.bf16.msra.mxu0 0
    %322 = vmatprep.subr.bf16.mxu0 0
    %323 = vmatpush2.bf16.msra.mxu0 0
    %324 = vmatprep.subr.bf16.mxu0 0
    %325 = vmatpush2.bf16.msra.mxu0 0
    %326 = vmatprep.subr.bf16.mxu0 0
    %327 = vmatpush2.bf16.msra.mxu0 0
    %328 = vmatprep.subr.bf16.mxu0 0
    %329 = vmatpush2.bf16.msra.mxu0 0
    %330 = vmatprep.subr.bf16.mxu0 0
    %331 = vmatpush2.bf16.msra.mxu0 0
    %332 = vmatprep.subr.bf16.mxu0 0
    %333 = vmatpush2.bf16.msra.mxu0 0
    %334 = vmatprep.mubr.bf16.mxu0 0
    %335 = vmatmul.mubr.bf16.gmra.mxu0 %v296
    %v336 = vpop.f32.mrf.mxu0
    %v337 = vadd.f32 %v287, %v336
    %v338 = vpop.f32.mrf.mxu0
    %v339 = vpop.f32.mrf.mxu0
    %v340 = vpop.f32.mrf.mxu0
    %341 = vdwg.mxu0
    %v342 = vmul.f32 %v213, %v148
    %v343 = vmul.f32 %v273, %v149
    %v344 = vmul.f32 %v337, %v150
    %v345 = vmul.f32 %v213, %v163
    %v346 = vmul.f32 %v273, %v164
    %v347 = vmul.f32 %v337, %v165
    %v348 = vmul.f32 %v213, %v178
    %v349 = vmul.f32 %v273, %v179
    %v350 = vmul.f32 %v337, %v180
    %354 = vrot.lane.b32.xlu0 %v345, 20
    %v355 = vpop.permute.xlu0 %354
    %356 = vrot.lane.b32.xlu0 %v346, 20
    %v357 = vpop.permute.xlu0 %356
    %358 = vrot.lane.b32.xlu0 %v347, 20
    %v359 = vpop.permute.xlu0 %358
    %366 = vrot.lane.b32.xlu0 %v348, 40
    %v367 = vpop.permute.xlu0 %366
    %368 = vrot.lane.b32.xlu0 %v349, 40
    %v369 = vpop.permute.xlu0 %368
    %370 = vrot.lane.b32.xlu0 %v350, 40
    %v371 = vpop.permute.xlu0 %370
    %vm375 = vcmask 162816
    %v376 = vsel %vm375, %v342, %v355
    %v377 = vsel %vm375, %v343, %v357
    %v378 = vsel %vm375, %v344, %v359
    %vm379 = vcmask 326656
    %v380 = vsel %vm379, %v376, %v367
    %v381 = vsel %vm379, %v377, %v369
    %v382 = vsel %vm379, %v378, %v371
    %v383 = vld [vmem:[%s10] sm:$0xf]
    %v384 = vld [vmem:[%s10 + $0x4] sm:$0xf]
    %v385 = vld [vmem:[%s10 + $0x8] sm:$0xf]
    %v386 = vld [vmem:[%s10 + $0xc] sm:$0xf]
    %v387 = vld [vmem:[%s10 + $0x10] sm:$0xf]
    %v388 = vld [vmem:[%s10 + $0x14] sm:$0xf]
    %v389 = vld [vmem:[%s10 + $0x18] sm:$0xf]
    %v390 = vld [vmem:[%s10 + $0x1c] sm:$0x3]
    %v391 = vpack.c.bf16 %v381, %v380
    %v392 = vpack.c.bf16 %v382, %v382
    %v401 = vunpack.c.l.b16 %v383
    %v402 = vunpack.c.l.b16 %v384
    %v403 = vunpack.c.l.b16 %v385
    %v404 = vunpack.c.l.b16 %v386
    %v405 = vunpack.c.l.b16 %v387
    %v406 = vunpack.c.l.b16 %v388
    %v407 = vunpack.c.l.b16 %v389
    %v408 = vunpack.c.l.b16 %v390
    %v409 = vpack.c.b16 %v402, %v401
    %v410 = vpack.c.b16 %v404, %v403
    %v411 = vpack.c.b16 %v406, %v405
    %v412 = vpack.c.b16 %v408, %v407
    %vm416 = vcmask 490496
    %v418 = vsel %vm416, %v391, 0
    %v421 = vsel %vm416, %v392, 0
    %vm423 = vcmask 1045504
    %v425 = vsel %vm423, %v412, 0
    %427 = vmatprep.subr.bf16.mxu0 0
    %428 = vmatpush1.bf16.msra.mxu0 0
    %429 = vmatprep.subr.bf16.mxu0 0
    %430 = vmatpush1.bf16.msra.mxu0 0
    %431 = vmatprep.subr.bf16.mxu0 0
    %432 = vmatpush1.bf16.msra.mxu0 0
    %433 = vmatprep.subr.bf16.mxu0 0
    %434 = vmatpush1.bf16.msra.mxu0 0
    %435 = vmatprep.subr.bf16.mxu0 0
    %436 = vmatpush1.bf16.msra.mxu0 %v425
    %437 = vmatprep.subr.bf16.mxu0 0
    %438 = vmatpush1.bf16.msra.mxu0 %v411
    %439 = vmatprep.subr.bf16.mxu0 0
    %440 = vmatpush1.bf16.msra.mxu0 %v410
    %441 = vmatprep.subr.bf16.mxu0 0
    %442 = vmatpush1.bf16.msra.mxu0 %v409
    %443 = vmatprep.subr.bf16.mxu0 0
    %444 = vmatpush2.bf16.msra.mxu0 0
    %445 = vmatprep.subr.bf16.mxu0 0
    %446 = vmatpush2.bf16.msra.mxu0 0
    %447 = vmatprep.subr.bf16.mxu0 0
    %448 = vmatpush2.bf16.msra.mxu0 0
    %449 = vmatprep.subr.bf16.mxu0 0
    %450 = vmatpush2.bf16.msra.mxu0 0
    %451 = vmatprep.subr.bf16.mxu0 0
    %452 = vmatpush2.bf16.msra.mxu0 0
    %453 = vmatprep.subr.bf16.mxu0 0
    %454 = vmatpush2.bf16.msra.mxu0 0
    %455 = vmatprep.subr.bf16.mxu0 0
    %456 = vmatpush2.bf16.msra.mxu0 0
    %457 = vmatprep.subr.bf16.mxu0 0
    %458 = vmatpush2.bf16.msra.mxu0 0
    %459 = vmatprep.mubr.bf16.mxu0 0
    %460 = vmatmul.mubr.bf16.gmra.mxu0 %v418
    %v461 = vpop.f32.mrf.mxu0
    %v462 = vadd.f32 0.0, %v461
    %v463 = vpop.f32.mrf.mxu0
    %v464 = vpop.f32.mrf.mxu0
    %v465 = vadd.f32 0.0, %v464
    %v466 = vpop.f32.mrf.mxu0
    %467 = vmatprep.mubr.bf16.mxu0 0
    %468 = vmatmul.mubr.bf16.gmra.mxu0 %v421
    %v469 = vpop.f32.mrf.mxu0
    %v470 = vadd.f32 0.0, %v469
    %v471 = vpop.f32.mrf.mxu0
    %v472 = vpop.f32.mrf.mxu0
    %v473 = vpop.f32.mrf.mxu0
    %474 = vdwg.mxu0
    %475 = vxpose.xlu0.b32.start [1/16] %v462, 128
    %476 = vxpose.xlu0.b32.cont [2/16] %v465, 128
    %477 = vxpose.xlu0.b32.cont [3/16] %v470, 128
    %478 = vxpose.xlu0.b32.cont [4/16] 0.0, 128
    %479 = vxpose.xlu0.b32.cont [5/16] 0.0, 128
    %480 = vxpose.xlu0.b32.cont [6/16] 0.0, 128
    %481 = vxpose.xlu0.b32.cont [7/16] 0.0, 128
    %482 = vxpose.xlu0.b32.cont [8/16] 0.0, 128
    %483 = vxpose.xlu0.b32.cont [9/16] 0.0, 128
    %484 = vxpose.xlu0.b32.cont [10/16] 0.0, 128
    %485 = vxpose.xlu0.b32.cont [11/16] 0.0, 128
    %486 = vxpose.xlu0.b32.cont [12/16] 0.0, 128
    %487 = vxpose.xlu0.b32.cont [13/16] 0.0, 128
    %488 = vxpose.xlu0.b32.cont [14/16] 0.0, 128
    %489 = vxpose.xlu0.b32.cont [15/16] 0.0, 128
    %490 = vxpose.xlu0.b32.end [16/16] 0.0, 128
    %v491 = vpop.trf.xlu0
    %v492 = vpop.trf.xlu0
    %v493 = vpop.trf.xlu0
    %v494 = vpop.trf.xlu0
    %v495 = vpop.trf.xlu0
    %v496 = vpop.trf.xlu0
    %v497 = vpop.trf.xlu0
    %v498 = vpop.trf.xlu0
    %v499 = vpop.trf.xlu0
    %v500 = vpop.trf.xlu0
    %v501 = vpop.trf.xlu0
    %v502 = vpop.trf.xlu0
    %v503 = vpop.trf.xlu0
    %v504 = vpop.trf.xlu0
    %v505 = vpop.trf.xlu0
    %v506 = vpop.trf.xlu0
    %v507 = vpack.c.bf16 %v492, %v491
    %v508 = vpack.c.bf16 %v494, %v493
    %s509 = scalar_lea.vmem %s11, 8
    %v510 = vld [vmem:[%s509] sm:$0xf]
    %v511 = vld [vmem:[%s509 + $0x4] sm:$0xf]
    %v512 = vpack.c.bf16 %v462, %v462
    %514 = vrot.lane.b32.xlu0 %v512, 96
    %v515 = vpop.permute.xlu0 %514
    %v518 = vunpack.c.l.b16 %v510
    %v519 = vunpack.c.l.b16 %v511
    %v520 = vpack.c.b16 %v519, %v518
    %vm522 = vcmask 130048
    %v524 = vsel %vm522, %v515, 0
    %526 = vmatprep.subr.bf16.mxu0 0
    %527 = vmatpush1.bf16.msra.mxu0 0
    %528 = vmatprep.subr.bf16.mxu0 0
    %529 = vmatpush1.bf16.msra.mxu0 0
    %530 = vmatprep.subr.bf16.mxu0 0
    %531 = vmatpush1.bf16.msra.mxu0 0
    %532 = vmatprep.subr.bf16.mxu0 0
    %533 = vmatpush1.bf16.msra.mxu0 0
    %534 = vmatprep.subr.bf16.mxu0 0
    %535 = vmatpush1.bf16.msra.mxu0 0
    %536 = vmatprep.subr.bf16.mxu0 0
    %537 = vmatpush1.bf16.msra.mxu0 0
    %538 = vmatprep.subr.bf16.mxu0 0
    %539 = vmatpush1.bf16.msra.mxu0 0
    %540 = vmatprep.subr.bf16.mxu0 0
    %541 = vmatpush1.bf16.msra.mxu0 %v520
    %542 = vmatprep.subr.bf16.mxu0 0
    %543 = vmatpush2.bf16.msra.mxu0 0
    %544 = vmatprep.subr.bf16.mxu0 0
    %545 = vmatpush2.bf16.msra.mxu0 0
    %546 = vmatprep.subr.bf16.mxu0 0
    %547 = vmatpush2.bf16.msra.mxu0 0
    %548 = vmatprep.subr.bf16.mxu0 0
    %549 = vmatpush2.bf16.msra.mxu0 0
    %550 = vmatprep.subr.bf16.mxu0 0
    %551 = vmatpush2.bf16.msra.mxu0 0
    %552 = vmatprep.subr.bf16.mxu0 0
    %553 = vmatpush2.bf16.msra.mxu0 0
    %554 = vmatprep.subr.bf16.mxu0 0
    %555 = vmatpush2.bf16.msra.mxu0 0
    %556 = vmatprep.subr.bf16.mxu0 0
    %557 = vmatpush2.bf16.msra.mxu0 0
    %558 = vmatprep.mubr.bf16.mxu0 0
    %559 = vmatmul.mubr.bf16.gmra.mxu0 %v524
    %v560 = vpop.f32.mrf.mxu0
    %v561 = vadd.f32 0.0, %v560
    %v562 = vpop.f32.mrf.mxu0
    %v563 = vpop.f32.mrf.mxu0
    %v564 = vpop.f32.mrf.mxu0
    %565 = vdwg.mxu0
    %v566 = vpack.c.bf16 %v561, %v561
    %v568 = vsel %vm522, %v566, 0
    %570 = vmatprep.subr.bf16.mxu0 0
    %571 = vmatpush1.bf16.msra.mxu0 0
    %572 = vmatprep.subr.bf16.mxu0 0
    %573 = vmatpush1.bf16.msra.mxu0 0
    %574 = vmatprep.subr.bf16.mxu0 0
    %575 = vmatpush1.bf16.msra.mxu0 0
    %576 = vmatprep.subr.bf16.mxu0 0
    %577 = vmatpush1.bf16.msra.mxu0 0
    %578 = vmatprep.subr.bf16.mxu0 0
    %579 = vmatpush1.bf16.msra.mxu0 0
    %580 = vmatprep.subr.bf16.mxu0 0
    %581 = vmatpush1.bf16.msra.mxu0 0
    %582 = vmatprep.subr.bf16.mxu0 0
    %583 = vmatpush1.bf16.msra.mxu0 0
    %584 = vmatprep.subr.bf16.mxu0 0
    %585 = vmatpush1.bf16.msra.mxu0 %v507
    %586 = vmatprep.subr.bf16.mxu0 0
    %587 = vmatpush2.bf16.msra.mxu0 0
    %588 = vmatprep.subr.bf16.mxu0 0
    %589 = vmatpush2.bf16.msra.mxu0 0
    %590 = vmatprep.subr.bf16.mxu0 0
    %591 = vmatpush2.bf16.msra.mxu0 0
    %592 = vmatprep.subr.bf16.mxu0 0
    %593 = vmatpush2.bf16.msra.mxu0 0
    %594 = vmatprep.subr.bf16.mxu0 0
    %595 = vmatpush2.bf16.msra.mxu0 0
    %596 = vmatprep.subr.bf16.mxu0 0
    %597 = vmatpush2.bf16.msra.mxu0 0
    %598 = vmatprep.subr.bf16.mxu0 0
    %599 = vmatpush2.bf16.msra.mxu0 0
    %600 = vmatprep.subr.bf16.mxu0 0
    %601 = vmatpush2.bf16.msra.mxu0 0
    %602 = vmatprep.mubr.bf16.mxu0 0
    %603 = vmatmul.mubr.bf16.gmra.mxu0 %v568
    %v604 = vpop.f32.mrf.mxu0
    %v605 = vadd.f32 0.0, %v604
    %v606 = vpop.f32.mrf.mxu0
    %v607 = vpop.f32.mrf.mxu0
    %v608 = vpop.f32.mrf.mxu0
    %609 = vdwg.mxu0
    %v610 = vmul.f32 %v190, %v605
    %v611 = vmul.f32 %v462, %v163
    %v612 = vmul.f32 %v465, %v164
    %v613 = vmul.f32 %v470, %v165
    %s614 = scalar_lea.vmem %s12, 8
    %v615 = vld [vmem:[%s614] sm:$0xf]
    %v616 = vld [vmem:[%s614 + $0x4] sm:$0xf]
    %v617 = vpack.c.bf16 %v612, %v611
    %v618 = vpack.c.bf16 %v613, %v613
    %s619 = scalar_lea.vmem %s11, 24
    %v620 = vld [vmem:[%s619] sm:$0xf]
    %v621 = vld [vmem:[%s619 + $0x4] sm:$0xf]
    %v624 = vunpack.c.l.b16 %v620
    %v625 = vunpack.c.l.b16 %v621
    %v626 = vpack.c.b16 %v625, %v624
    %628 = vmatprep.subr.bf16.mxu0 0
    %629 = vmatpush1.bf16.msra.mxu0 0
    %630 = vmatprep.subr.bf16.mxu0 0
    %631 = vmatpush1.bf16.msra.mxu0 0
    %632 = vmatprep.subr.bf16.mxu0 0
    %633 = vmatpush1.bf16.msra.mxu0 0
    %634 = vmatprep.subr.bf16.mxu0 0
    %635 = vmatpush1.bf16.msra.mxu0 0
    %636 = vmatprep.subr.bf16.mxu0 0
    %637 = vmatpush1.bf16.msra.mxu0 0
    %638 = vmatprep.subr.bf16.mxu0 0
    %639 = vmatpush1.bf16.msra.mxu0 0
    %640 = vmatprep.subr.bf16.mxu0 0
    %641 = vmatpush1.bf16.msra.mxu0 0
    %642 = vmatprep.subr.bf16.mxu0 0
    %643 = vmatpush1.bf16.msra.mxu0 %v626
    %644 = vmatprep.subr.bf16.mxu0 0
    %645 = vmatpush2.bf16.msra.mxu0 0
    %646 = vmatprep.subr.bf16.mxu0 0
    %647 = vmatpush2.bf16.msra.mxu0 0
    %648 = vmatprep.subr.bf16.mxu0 0
    %649 = vmatpush2.bf16.msra.mxu0 0
    %650 = vmatprep.subr.bf16.mxu0 0
    %651 = vmatpush2.bf16.msra.mxu0 0
    %652 = vmatprep.subr.bf16.mxu0 0
    %653 = vmatpush2.bf16.msra.mxu0 0
    %654 = vmatprep.subr.bf16.mxu0 0
    %655 = vmatpush2.bf16.msra.mxu0 0
    %656 = vmatprep.subr.bf16.mxu0 0
    %657 = vmatpush2.bf16.msra.mxu0 0
    %658 = vmatprep.subr.bf16.mxu0 0
    %659 = vmatpush2.bf16.msra.mxu0 0
    %660 = vmatprep.mubr.bf16.mxu0 0
    %661 = vmatmul.mubr.bf16.gmra.mxu0 %v524
    %v662 = vpop.f32.mrf.mxu0
    %v663 = vadd.f32 0.0, %v662
    %v664 = vpop.f32.mrf.mxu0
    %v665 = vpop.f32.mrf.mxu0
    %v666 = vpop.f32.mrf.mxu0
    %667 = vdwg.mxu0
    %v668 = vpack.c.bf16 %v663, %v663
    %v670 = vsel %vm522, %v668, 0
    %672 = vmatprep.subr.bf16.mxu0 0
    %673 = vmatpush1.bf16.msra.mxu0 0
    %674 = vmatprep.subr.bf16.mxu0 0
    %675 = vmatpush1.bf16.msra.mxu0 0
    %676 = vmatprep.subr.bf16.mxu0 0
    %677 = vmatpush1.bf16.msra.mxu0 0
    %678 = vmatprep.subr.bf16.mxu0 0
    %679 = vmatpush1.bf16.msra.mxu0 0
    %680 = vmatprep.subr.bf16.mxu0 0
    %681 = vmatpush1.bf16.msra.mxu0 0
    %682 = vmatprep.subr.bf16.mxu0 0
    %683 = vmatpush1.bf16.msra.mxu0 0
    %684 = vmatprep.subr.bf16.mxu0 0
    %685 = vmatpush1.bf16.msra.mxu0 0
    %686 = vmatprep.subr.bf16.mxu0 0
    %687 = vmatpush1.bf16.msra.mxu0 %v507
    %688 = vmatprep.subr.bf16.mxu0 0
    %689 = vmatpush2.bf16.msra.mxu0 0
    %690 = vmatprep.subr.bf16.mxu0 0
    %691 = vmatpush2.bf16.msra.mxu0 0
    %692 = vmatprep.subr.bf16.mxu0 0
    %693 = vmatpush2.bf16.msra.mxu0 0
    %694 = vmatprep.subr.bf16.mxu0 0
    %695 = vmatpush2.bf16.msra.mxu0 0
    %696 = vmatprep.subr.bf16.mxu0 0
    %697 = vmatpush2.bf16.msra.mxu0 0
    %698 = vmatprep.subr.bf16.mxu0 0
    %699 = vmatpush2.bf16.msra.mxu0 0
    %700 = vmatprep.subr.bf16.mxu0 0
    %701 = vmatpush2.bf16.msra.mxu0 0
    %702 = vmatprep.subr.bf16.mxu0 0
    %703 = vmatpush2.bf16.msra.mxu0 0
    %704 = vmatprep.mubr.bf16.mxu0 0
    %705 = vmatmul.mubr.bf16.gmra.mxu0 %v670
    %v706 = vpop.f32.mrf.mxu0
    %v707 = vadd.f32 0.0, %v706
    %v708 = vpop.f32.mrf.mxu0
    %v709 = vpop.f32.mrf.mxu0
    %v710 = vpop.f32.mrf.mxu0
    %711 = vdwg.mxu0
    %v712 = vmul.f32 %v195, %v707
    %v713 = vadd.f32 %v610, %v712
    %v714 = vmul.f32 %v462, %v178
    %v715 = vmul.f32 %v465, %v179
    %v716 = vmul.f32 %v470, %v180
    %s717 = scalar_lea.vmem %s12, 24
    %v718 = vld [vmem:[%s717] sm:$0xf]
    %v719 = vld [vmem:[%s717 + $0x4] sm:$0xf]
    %v720 = vpack.c.bf16 %v715, %v714
    %v721 = vpack.c.bf16 %v716, %v716
    %724 = vrot.lane.b32.xlu0 %v720, 64
    %v725 = vpop.permute.xlu0 %724
    %726 = vrot.lane.b32.xlu0 %v721, 64
    %v727 = vpop.permute.xlu0 %726
    %v730 = vunpack.c.l.b16 %v718
    %v731 = vunpack.c.l.b16 %v719
    %v732 = vpack.c.b16 %v731, %v730
    %v735 = vsel %vm522, %v725, 0
    %v738 = vsel %vm522, %v727, 0
    %740 = vmatprep.subr.bf16.mxu0 0
    %741 = vmatpush1.bf16.msra.mxu0 0
    %742 = vmatprep.subr.bf16.mxu0 0
    %743 = vmatpush1.bf16.msra.mxu0 0
    %744 = vmatprep.subr.bf16.mxu0 0
    %745 = vmatpush1.bf16.msra.mxu0 0
    %746 = vmatprep.subr.bf16.mxu0 0
    %747 = vmatpush1.bf16.msra.mxu0 0
    %748 = vmatprep.subr.bf16.mxu0 0
    %749 = vmatpush1.bf16.msra.mxu0 0
    %750 = vmatprep.subr.bf16.mxu0 0
    %751 = vmatpush1.bf16.msra.mxu0 0
    %752 = vmatprep.subr.bf16.mxu0 0
    %753 = vmatpush1.bf16.msra.mxu0 0
    %754 = vmatprep.subr.bf16.mxu0 0
    %755 = vmatpush1.bf16.msra.mxu0 %v732
    %756 = vmatprep.subr.bf16.mxu0 0
    %757 = vmatpush2.bf16.msra.mxu0 0
    %758 = vmatprep.subr.bf16.mxu0 0
    %759 = vmatpush2.bf16.msra.mxu0 0
    %760 = vmatprep.subr.bf16.mxu0 0
    %761 = vmatpush2.bf16.msra.mxu0 0
    %762 = vmatprep.subr.bf16.mxu0 0
    %763 = vmatpush2.bf16.msra.mxu0 0
    %764 = vmatprep.subr.bf16.mxu0 0
    %765 = vmatpush2.bf16.msra.mxu0 0
    %766 = vmatprep.subr.bf16.mxu0 0
    %767 = vmatpush2.bf16.msra.mxu0 0
    %768 = vmatprep.subr.bf16.mxu0 0
    %769 = vmatpush2.bf16.msra.mxu0 0
    %770 = vmatprep.subr.bf16.mxu0 0
    %771 = vmatpush2.bf16.msra.mxu0 0
    %772 = vmatprep.mubr.bf16.mxu0 0
    %773 = vmatmul.mubr.bf16.gmra.mxu0 %v735
    %v774 = vpop.f32.mrf.mxu0
    %v775 = vadd.f32 0.0, %v774
    %v776 = vpop.f32.mrf.mxu0
    %v777 = vpop.f32.mrf.mxu0
    %v778 = vadd.f32 0.0, %v777
    %v779 = vpop.f32.mrf.mxu0
    %780 = vmatprep.mubr.bf16.mxu0 0
    %781 = vmatmul.mubr.bf16.gmra.mxu0 %v738
    %v782 = vpop.f32.mrf.mxu0
    %v783 = vadd.f32 0.0, %v782
    %v784 = vpop.f32.mrf.mxu0
    %v785 = vpop.f32.mrf.mxu0
    %v786 = vpop.f32.mrf.mxu0
    %787 = vdwg.mxu0
    %790 = vrot.lane.b32.xlu0 %v617, 64
    %v791 = vpop.permute.xlu0 %790
    %792 = vrot.lane.b32.xlu0 %v618, 64
    %v793 = vpop.permute.xlu0 %792
    %v796 = vunpack.c.l.b16 %v615
    %v797 = vunpack.c.l.b16 %v616
    %v798 = vpack.c.b16 %v797, %v796
    %v801 = vsel %vm522, %v791, 0
    %v804 = vsel %vm522, %v793, 0
    %806 = vmatprep.subr.bf16.mxu0 0
    %807 = vmatpush1.bf16.msra.mxu0 0
    %808 = vmatprep.subr.bf16.mxu0 0
    %809 = vmatpush1.bf16.msra.mxu0 0
    %810 = vmatprep.subr.bf16.mxu0 0
    %811 = vmatpush1.bf16.msra.mxu0 0
    %812 = vmatprep.subr.bf16.mxu0 0
    %813 = vmatpush1.bf16.msra.mxu0 0
    %814 = vmatprep.subr.bf16.mxu0 0
    %815 = vmatpush1.bf16.msra.mxu0 0
    %816 = vmatprep.subr.bf16.mxu0 0
    %817 = vmatpush1.bf16.msra.mxu0 0
    %818 = vmatprep.subr.bf16.mxu0 0
    %819 = vmatpush1.bf16.msra.mxu0 0
    %820 = vmatprep.subr.bf16.mxu0 0
    %821 = vmatpush1.bf16.msra.mxu0 %v798
    %822 = vmatprep.subr.bf16.mxu0 0
    %823 = vmatpush2.bf16.msra.mxu0 0
    %824 = vmatprep.subr.bf16.mxu0 0
    %825 = vmatpush2.bf16.msra.mxu0 0
    %826 = vmatprep.subr.bf16.mxu0 0
    %827 = vmatpush2.bf16.msra.mxu0 0
    %828 = vmatprep.subr.bf16.mxu0 0
    %829 = vmatpush2.bf16.msra.mxu0 0
    %830 = vmatprep.subr.bf16.mxu0 0
    %831 = vmatpush2.bf16.msra.mxu0 0
    %832 = vmatprep.subr.bf16.mxu0 0
    %833 = vmatpush2.bf16.msra.mxu0 0
    %834 = vmatprep.subr.bf16.mxu0 0
    %835 = vmatpush2.bf16.msra.mxu0 0
    %836 = vmatprep.subr.bf16.mxu0 0
    %837 = vmatpush2.bf16.msra.mxu0 0
    %838 = vmatprep.mubr.bf16.mxu0 0
    %839 = vmatmul.mubr.bf16.gmra.mxu0 %v801
    %v840 = vpop.f32.mrf.mxu0
    %v841 = vadd.f32 %v775, %v840
    %v842 = vpop.f32.mrf.mxu0
    %v843 = vpop.f32.mrf.mxu0
    %v844 = vadd.f32 %v778, %v843
    %v845 = vpop.f32.mrf.mxu0
    %846 = vmatprep.mubr.bf16.mxu0 0
    %847 = vmatmul.mubr.bf16.gmra.mxu0 %v804
    %v848 = vpop.f32.mrf.mxu0
    %v849 = vadd.f32 %v783, %v848
    %v850 = vpop.f32.mrf.mxu0
    %v851 = vpop.f32.mrf.mxu0
    %v852 = vpop.f32.mrf.mxu0
    %853 = vdwg.mxu0
    %vm854 = vcmp.gt.f32.partialorder %v196, 0.0
    %v855 = vsel %vm854, %v713, -1e+30
    %vm856 = vcmask 195584
    %v857 = vsel %vm856, %v855, -inf
    %858 = vmax.xlane.f32.xlu0 %v857
    %v859 = vpop.xlane.xlu0 %858
    %v860 = vsub.f32 %v855, %v859
    %v861 = vmul.f32 %v860, 1.442695
    %v862 = vpow.pop %v861
    %v863 = vmul.f32 %v862, %v196
    %v864 = vsel %vm856, %v863, 0.0
    %865 = vadd.xlane.f32.xlu0 %v864
    %v866 = vpop.xlane.xlu0 %865
    %v867 = vpack.c.bf16 %v863, %v863
    %v868 = vpack.c.bf16 %v844, %v841
    %v869 = vpack.c.bf16 %v849, %v849
    %v871 = vsel %vm856, %v867, 0
    %vm873 = vcmask 1043456
    %v875 = vsel %vm873, %v869, 0
    %877 = vmatprep.subr.bf16.mxu0 0
    %878 = vmatpush1.bf16.msra.mxu0 0
    %879 = vmatprep.subr.bf16.mxu0 0
    %880 = vmatpush1.bf16.msra.mxu0 0
    %881 = vmatprep.subr.bf16.mxu0 0
    %882 = vmatpush1.bf16.msra.mxu0 0
    %883 = vmatprep.subr.bf16.mxu0 0
    %884 = vmatpush1.bf16.msra.mxu0 0
    %885 = vmatprep.subr.bf16.mxu0 0
    %886 = vmatpush1.bf16.msra.mxu0 0
    %887 = vmatprep.subr.bf16.mxu0 0
    %888 = vmatpush1.bf16.msra.mxu0 0
    %889 = vmatprep.subr.bf16.mxu0 0
    %890 = vmatpush1.bf16.msra.mxu0 %v875
    %891 = vmatprep.subr.bf16.mxu0 0
    %892 = vmatpush1.bf16.msra.mxu0 %v868
    %893 = vmatprep.subr.bf16.mxu0 0
    %894 = vmatpush2.bf16.msra.mxu0 0
    %895 = vmatprep.subr.bf16.mxu0 0
    %896 = vmatpush2.bf16.msra.mxu0 0
    %897 = vmatprep.subr.bf16.mxu0 0
    %898 = vmatpush2.bf16.msra.mxu0 0
    %899 = vmatprep.subr.bf16.mxu0 0
    %900 = vmatpush2.bf16.msra.mxu0 0
    %901 = vmatprep.subr.bf16.mxu0 0
    %902 = vmatpush2.bf16.msra.mxu0 0
    %903 = vmatprep.subr.bf16.mxu0 0
    %904 = vmatpush2.bf16.msra.mxu0 0
    %905 = vmatprep.subr.bf16.mxu0 0
    %906 = vmatpush2.bf16.msra.mxu0 0
    %907 = vmatprep.subr.bf16.mxu0 0
    %908 = vmatpush2.bf16.msra.mxu0 0
    %909 = vmatprep.mubr.bf16.mxu0 0
    %910 = vmatmul.mubr.bf16.gmra.mxu0 %v871
    %v911 = vpop.f32.mrf.mxu0
    %v912 = vadd.f32 0.0, %v911
    %v913 = vpop.f32.mrf.mxu0
    %v914 = vpop.f32.mrf.mxu0
    %v915 = vpop.f32.mrf.mxu0
    %916 = vdwg.mxu0
    %vm917 = vcmp.gt.f32.partialorder %v866, 0.0
    %v918 = vsel %vm917, %v866, 1.0
    %v919 = vrcp.pop %v918
    %v920 = vmul.f32 %v912, %v919
    %v921 = vld [vmem:[%s11] sm:$0xf]
    %v922 = vld [vmem:[%s11 + $0x4] sm:$0xf]
    %v923 = vpack.c.bf16 %v465, %v465
    %925 = vrot.lane.b32.xlu0 %v923, 96
    %v926 = vpop.permute.xlu0 %925
    %v929 = vunpack.c.l.b16 %v921
    %v930 = vunpack.c.l.b16 %v922
    %v931 = vpack.c.b16 %v930, %v929
    %v934 = vsel %vm522, %v926, 0
    %936 = vmatprep.subr.bf16.mxu0 0
    %937 = vmatpush1.bf16.msra.mxu0 0
    %938 = vmatprep.subr.bf16.mxu0 0
    %939 = vmatpush1.bf16.msra.mxu0 0
    %940 = vmatprep.subr.bf16.mxu0 0
    %941 = vmatpush1.bf16.msra.mxu0 0
    %942 = vmatprep.subr.bf16.mxu0 0
    %943 = vmatpush1.bf16.msra.mxu0 0
    %944 = vmatprep.subr.bf16.mxu0 0
    %945 = vmatpush1.bf16.msra.mxu0 0
    %946 = vmatprep.subr.bf16.mxu0 0
    %947 = vmatpush1.bf16.msra.mxu0 0
    %948 = vmatprep.subr.bf16.mxu0 0
    %949 = vmatpush1.bf16.msra.mxu0 0
    %950 = vmatprep.subr.bf16.mxu0 0
    %951 = vmatpush1.bf16.msra.mxu0 %v931
    %952 = vmatprep.subr.bf16.mxu0 0
    %953 = vmatpush2.bf16.msra.mxu0 0
    %954 = vmatprep.subr.bf16.mxu0 0
    %955 = vmatpush2.bf16.msra.mxu0 0
    %956 = vmatprep.subr.bf16.mxu0 0
    %957 = vmatpush2.bf16.msra.mxu0 0
    %958 = vmatprep.subr.bf16.mxu0 0
    %959 = vmatpush2.bf16.msra.mxu0 0
    %960 = vmatprep.subr.bf16.mxu0 0
    %961 = vmatpush2.bf16.msra.mxu0 0
    %962 = vmatprep.subr.bf16.mxu0 0
    %963 = vmatpush2.bf16.msra.mxu0 0
    %964 = vmatprep.subr.bf16.mxu0 0
    %965 = vmatpush2.bf16.msra.mxu0 0
    %966 = vmatprep.subr.bf16.mxu0 0
    %967 = vmatpush2.bf16.msra.mxu0 0
    %968 = vmatprep.mubr.bf16.mxu0 0
    %969 = vmatmul.mubr.bf16.gmra.mxu0 %v934
    %v970 = vpop.f32.mrf.mxu0
    %v971 = vadd.f32 0.0, %v970
    %v972 = vpop.f32.mrf.mxu0
    %v973 = vpop.f32.mrf.mxu0
    %v974 = vpop.f32.mrf.mxu0
    %975 = vdwg.mxu0
    %v976 = vpack.c.bf16 %v971, %v971
    %v978 = vsel %vm522, %v976, 0
    %980 = vmatprep.subr.bf16.mxu0 0
    %981 = vmatpush1.bf16.msra.mxu0 0
    %982 = vmatprep.subr.bf16.mxu0 0
    %983 = vmatpush1.bf16.msra.mxu0 0
    %984 = vmatprep.subr.bf16.mxu0 0
    %985 = vmatpush1.bf16.msra.mxu0 0
    %986 = vmatprep.subr.bf16.mxu0 0
    %987 = vmatpush1.bf16.msra.mxu0 0
    %988 = vmatprep.subr.bf16.mxu0 0
    %989 = vmatpush1.bf16.msra.mxu0 0
    %990 = vmatprep.subr.bf16.mxu0 0
    %991 = vmatpush1.bf16.msra.mxu0 0
    %992 = vmatprep.subr.bf16.mxu0 0
    %993 = vmatpush1.bf16.msra.mxu0 0
    %994 = vmatprep.subr.bf16.mxu0 0
    %995 = vmatpush1.bf16.msra.mxu0 %v507
    %996 = vmatprep.subr.bf16.mxu0 0
    %997 = vmatpush2.bf16.msra.mxu0 0
    %998 = vmatprep.subr.bf16.mxu0 0
    %999 = vmatpush2.bf16.msra.mxu0 0
    %1000 = vmatprep.subr.bf16.mxu0 0
    %1001 = vmatpush2.bf16.msra.mxu0 0
    %1002 = vmatprep.subr.bf16.mxu0 0
    %1003 = vmatpush2.bf16.msra.mxu0 0
    %1004 = vmatprep.subr.bf16.mxu0 0
    %1005 = vmatpush2.bf16.msra.mxu0 0
    %1006 = vmatprep.subr.bf16.mxu0 0
    %1007 = vmatpush2.bf16.msra.mxu0 0
    %1008 = vmatprep.subr.bf16.mxu0 0
    %1009 = vmatpush2.bf16.msra.mxu0 0
    %1010 = vmatprep.subr.bf16.mxu0 0
    %1011 = vmatpush2.bf16.msra.mxu0 0
    %1012 = vmatprep.mubr.bf16.mxu0 0
    %1013 = vmatmul.mubr.bf16.gmra.mxu0 %v978
    %v1014 = vpop.f32.mrf.mxu0
    %v1015 = vadd.f32 0.0, %v1014
    %v1016 = vpop.f32.mrf.mxu0
    %v1017 = vpop.f32.mrf.mxu0
    %v1018 = vpop.f32.mrf.mxu0
    %1019 = vdwg.mxu0
    %v1020 = vmul.f32 %v185, %v1015
    %v1021 = vmul.f32 %v462, %v148
    %v1022 = vmul.f32 %v465, %v149
    %v1023 = vmul.f32 %v470, %v150
    %v1024 = vld [vmem:[%s12] sm:$0xf]
    %v1025 = vld [vmem:[%s12 + $0x4] sm:$0xf]
    %v1026 = vpack.c.bf16 %v1022, %v1021
    %v1027 = vpack.c.bf16 %v1023, %v1023
    %1030 = vrot.lane.b32.xlu0 %v1026, 64
    %v1031 = vpop.permute.xlu0 %1030
    %1032 = vrot.lane.b32.xlu0 %v1027, 64
    %v1033 = vpop.permute.xlu0 %1032
    %v1036 = vunpack.c.l.b16 %v1024
    %v1037 = vunpack.c.l.b16 %v1025
    %v1038 = vpack.c.b16 %v1037, %v1036
    %v1041 = vsel %vm522, %v1031, 0
    %v1044 = vsel %vm522, %v1033, 0
    %1046 = vmatprep.subr.bf16.mxu0 0
    %1047 = vmatpush1.bf16.msra.mxu0 0
    %1048 = vmatprep.subr.bf16.mxu0 0
    %1049 = vmatpush1.bf16.msra.mxu0 0
    %1050 = vmatprep.subr.bf16.mxu0 0
    %1051 = vmatpush1.bf16.msra.mxu0 0
    %1052 = vmatprep.subr.bf16.mxu0 0
    %1053 = vmatpush1.bf16.msra.mxu0 0
    %1054 = vmatprep.subr.bf16.mxu0 0
    %1055 = vmatpush1.bf16.msra.mxu0 0
    %1056 = vmatprep.subr.bf16.mxu0 0
    %1057 = vmatpush1.bf16.msra.mxu0 0
    %1058 = vmatprep.subr.bf16.mxu0 0
    %1059 = vmatpush1.bf16.msra.mxu0 0
    %1060 = vmatprep.subr.bf16.mxu0 0
    %1061 = vmatpush1.bf16.msra.mxu0 %v1038
    %1062 = vmatprep.subr.bf16.mxu0 0
    %1063 = vmatpush2.bf16.msra.mxu0 0
    %1064 = vmatprep.subr.bf16.mxu0 0
    %1065 = vmatpush2.bf16.msra.mxu0 0
    %1066 = vmatprep.subr.bf16.mxu0 0
    %1067 = vmatpush2.bf16.msra.mxu0 0
    %1068 = vmatprep.subr.bf16.mxu0 0
    %1069 = vmatpush2.bf16.msra.mxu0 0
    %1070 = vmatprep.subr.bf16.mxu0 0
    %1071 = vmatpush2.bf16.msra.mxu0 0
    %1072 = vmatprep.subr.bf16.mxu0 0
    %1073 = vmatpush2.bf16.msra.mxu0 0
    %1074 = vmatprep.subr.bf16.mxu0 0
    %1075 = vmatpush2.bf16.msra.mxu0 0
    %1076 = vmatprep.subr.bf16.mxu0 0
    %1077 = vmatpush2.bf16.msra.mxu0 0
    %1078 = vmatprep.mubr.bf16.mxu0 0
    %1079 = vmatmul.mubr.bf16.gmra.mxu0 %v1041
    %v1080 = vpop.f32.mrf.mxu0
    %v1081 = vadd.f32 0.0, %v1080
    %v1082 = vpop.f32.mrf.mxu0
    %v1083 = vpop.f32.mrf.mxu0
    %v1084 = vadd.f32 0.0, %v1083
    %v1085 = vpop.f32.mrf.mxu0
    %1086 = vmatprep.mubr.bf16.mxu0 0
    %1087 = vmatmul.mubr.bf16.gmra.mxu0 %v1044
    %v1088 = vpop.f32.mrf.mxu0
    %v1089 = vadd.f32 0.0, %v1088
    %v1090 = vpop.f32.mrf.mxu0
    %v1091 = vpop.f32.mrf.mxu0
    %v1092 = vpop.f32.mrf.mxu0
    %1093 = vdwg.mxu0
    %vm1094 = vcmp.gt.f32.partialorder %v197, 0.0
    %v1095 = vsel %vm1094, %v1020, -1e+30
    %v1096 = vsel %vm856, %v1095, -inf
    %1097 = vmax.xlane.f32.xlu0 %v1096
    %v1098 = vpop.xlane.xlu0 %1097
    %v1099 = vsub.f32 %v1095, %v1098
    %v1100 = vmul.f32 %v1099, 1.442695
    %v1101 = vpow.pop %v1100
    %v1102 = vmul.f32 %v1101, %v197
    %v1103 = vsel %vm856, %v1102, 0.0
    %1104 = vadd.xlane.f32.xlu0 %v1103
    %v1105 = vpop.xlane.xlu0 %1104
    %v1106 = vpack.c.bf16 %v1102, %v1102
    %v1107 = vpack.c.bf16 %v1084, %v1081
    %v1108 = vpack.c.bf16 %v1089, %v1089
    %v1110 = vsel %vm856, %v1106, 0
    %v1113 = vsel %vm873, %v1108, 0
    %1115 = vmatprep.subr.bf16.mxu0 0
    %1116 = vmatpush1.bf16.msra.mxu0 0
    %1117 = vmatprep.subr.bf16.mxu0 0
    %1118 = vmatpush1.bf16.msra.mxu0 0
    %1119 = vmatprep.subr.bf16.mxu0 0
    %1120 = vmatpush1.bf16.msra.mxu0 0
    %1121 = vmatprep.subr.bf16.mxu0 0
    %1122 = vmatpush1.bf16.msra.mxu0 0
    %1123 = vmatprep.subr.bf16.mxu0 0
    %1124 = vmatpush1.bf16.msra.mxu0 0
    %1125 = vmatprep.subr.bf16.mxu0 0
    %1126 = vmatpush1.bf16.msra.mxu0 0
    %1127 = vmatprep.subr.bf16.mxu0 0
    %1128 = vmatpush1.bf16.msra.mxu0 %v1113
    %1129 = vmatprep.subr.bf16.mxu0 0
    %1130 = vmatpush1.bf16.msra.mxu0 %v1107
    %1131 = vmatprep.subr.bf16.mxu0 0
    %1132 = vmatpush2.bf16.msra.mxu0 0
    %1133 = vmatprep.subr.bf16.mxu0 0
    %1134 = vmatpush2.bf16.msra.mxu0 0
    %1135 = vmatprep.subr.bf16.mxu0 0
    %1136 = vmatpush2.bf16.msra.mxu0 0
    %1137 = vmatprep.subr.bf16.mxu0 0
    %1138 = vmatpush2.bf16.msra.mxu0 0
    %1139 = vmatprep.subr.bf16.mxu0 0
    %1140 = vmatpush2.bf16.msra.mxu0 0
    %1141 = vmatprep.subr.bf16.mxu0 0
    %1142 = vmatpush2.bf16.msra.mxu0 0
    %1143 = vmatprep.subr.bf16.mxu0 0
    %1144 = vmatpush2.bf16.msra.mxu0 0
    %1145 = vmatprep.subr.bf16.mxu0 0
    %1146 = vmatpush2.bf16.msra.mxu0 0
    %1147 = vmatprep.mubr.bf16.mxu0 0
    %1148 = vmatmul.mubr.bf16.gmra.mxu0 %v1110
    %v1149 = vpop.f32.mrf.mxu0
    %v1150 = vadd.f32 0.0, %v1149
    %v1151 = vpop.f32.mrf.mxu0
    %v1152 = vpop.f32.mrf.mxu0
    %v1153 = vpop.f32.mrf.mxu0
    %1154 = vdwg.mxu0
    %vm1155 = vcmp.gt.f32.partialorder %v1105, 0.0
    %v1156 = vsel %vm1155, %v1105, 1.0
    %v1157 = vrcp.pop %v1156
    %v1158 = vmul.f32 %v1150, %v1157
    %s1159 = scalar_lea.vmem %s11, 16
    %v1160 = vld [vmem:[%s1159] sm:$0xf]
    %v1161 = vld [vmem:[%s1159 + $0x4] sm:$0xf]
    %v1162 = vpack.c.bf16 %v470, %v470
    %1164 = vrot.lane.b32.xlu0 %v1162, 96
    %v1165 = vpop.permute.xlu0 %1164
    %v1168 = vunpack.c.l.b16 %v1160
    %v1169 = vunpack.c.l.b16 %v1161
    %v1170 = vpack.c.b16 %v1169, %v1168
    %v1173 = vsel %vm522, %v1165, 0
    %1175 = vmatprep.subr.bf16.mxu0 0
    %1176 = vmatpush1.bf16.msra.mxu0 0
    %1177 = vmatprep.subr.bf16.mxu0 0
    %1178 = vmatpush1.bf16.msra.mxu0 0
    %1179 = vmatprep.subr.bf16.mxu0 0
    %1180 = vmatpush1.bf16.msra.mxu0 0
    %1181 = vmatprep.subr.bf16.mxu0 0
    %1182 = vmatpush1.bf16.msra.mxu0 0
    %1183 = vmatprep.subr.bf16.mxu0 0
    %1184 = vmatpush1.bf16.msra.mxu0 0
    %1185 = vmatprep.subr.bf16.mxu0 0
    %1186 = vmatpush1.bf16.msra.mxu0 0
    %1187 = vmatprep.subr.bf16.mxu0 0
    %1188 = vmatpush1.bf16.msra.mxu0 0
    %1189 = vmatprep.subr.bf16.mxu0 0
    %1190 = vmatpush1.bf16.msra.mxu0 %v1170
    %1191 = vmatprep.subr.bf16.mxu0 0
    %1192 = vmatpush2.bf16.msra.mxu0 0
    %1193 = vmatprep.subr.bf16.mxu0 0
    %1194 = vmatpush2.bf16.msra.mxu0 0
    %1195 = vmatprep.subr.bf16.mxu0 0
    %1196 = vmatpush2.bf16.msra.mxu0 0
    %1197 = vmatprep.subr.bf16.mxu0 0
    %1198 = vmatpush2.bf16.msra.mxu0 0
    %1199 = vmatprep.subr.bf16.mxu0 0
    %1200 = vmatpush2.bf16.msra.mxu0 0
    %1201 = vmatprep.subr.bf16.mxu0 0
    %1202 = vmatpush2.bf16.msra.mxu0 0
    %1203 = vmatprep.subr.bf16.mxu0 0
    %1204 = vmatpush2.bf16.msra.mxu0 0
    %1205 = vmatprep.subr.bf16.mxu0 0
    %1206 = vmatpush2.bf16.msra.mxu0 0
    %1207 = vmatprep.mubr.bf16.mxu0 0
    %1208 = vmatmul.mubr.bf16.gmra.mxu0 %v1173
    %v1209 = vpop.f32.mrf.mxu0
    %v1210 = vadd.f32 0.0, %v1209
    %v1211 = vpop.f32.mrf.mxu0
    %v1212 = vpop.f32.mrf.mxu0
    %v1213 = vpop.f32.mrf.mxu0
    %1214 = vdwg.mxu0
    %v1215 = vpack.c.bf16 %v1210, %v1210
    %v1217 = vsel %vm522, %v1215, 0
    %1219 = vmatprep.subr.bf16.mxu0 0
    %1220 = vmatpush1.bf16.msra.mxu0 0
    %1221 = vmatprep.subr.bf16.mxu0 0
    %1222 = vmatpush1.bf16.msra.mxu0 0
    %1223 = vmatprep.subr.bf16.mxu0 0
    %1224 = vmatpush1.bf16.msra.mxu0 0
    %1225 = vmatprep.subr.bf16.mxu0 0
    %1226 = vmatpush1.bf16.msra.mxu0 0
    %1227 = vmatprep.subr.bf16.mxu0 0
    %1228 = vmatpush1.bf16.msra.mxu0 0
    %1229 = vmatprep.subr.bf16.mxu0 0
    %1230 = vmatpush1.bf16.msra.mxu0 0
    %1231 = vmatprep.subr.bf16.mxu0 0
    %1232 = vmatpush1.bf16.msra.mxu0 0
    %1233 = vmatprep.subr.bf16.mxu0 0
    %1234 = vmatpush1.bf16.msra.mxu0 %v507
    %1235 = vmatprep.subr.bf16.mxu0 0
    %1236 = vmatpush2.bf16.msra.mxu0 0
    %1237 = vmatprep.subr.bf16.mxu0 0
    %1238 = vmatpush2.bf16.msra.mxu0 0
    %1239 = vmatprep.subr.bf16.mxu0 0
    %1240 = vmatpush2.bf16.msra.mxu0 0
    %1241 = vmatprep.subr.bf16.mxu0 0
    %1242 = vmatpush2.bf16.msra.mxu0 0
    %1243 = vmatprep.subr.bf16.mxu0 0
    %1244 = vmatpush2.bf16.msra.mxu0 0
    %1245 = vmatprep.subr.bf16.mxu0 0
    %1246 = vmatpush2.bf16.msra.mxu0 0
    %1247 = vmatprep.subr.bf16.mxu0 0
    %1248 = vmatpush2.bf16.msra.mxu0 0
    %1249 = vmatprep.subr.bf16.mxu0 0
    %1250 = vmatpush2.bf16.msra.mxu0 0
    %1251 = vmatprep.mubr.bf16.mxu0 0
    %1252 = vmatmul.mubr.bf16.gmra.mxu0 %v1217
    %v1253 = vpop.f32.mrf.mxu0
    %v1254 = vadd.f32 0.0, %v1253
    %v1255 = vpop.f32.mrf.mxu0
    %v1256 = vpop.f32.mrf.mxu0
    %v1257 = vpop.f32.mrf.mxu0
    %1258 = vdwg.mxu0
    %v1259 = vmul.f32 %v185, %v1254
    %s1260 = scalar_lea.vmem %s12, 16
    %v1261 = vld [vmem:[%s1260] sm:$0xf]
    %v1262 = vld [vmem:[%s1260 + $0x4] sm:$0xf]
    %v1265 = vunpack.c.l.b16 %v1261
    %v1266 = vunpack.c.l.b16 %v1262
    %v1267 = vpack.c.b16 %v1266, %v1265
    %1269 = vmatprep.subr.bf16.mxu0 0
    %1270 = vmatpush1.bf16.msra.mxu0 0
    %1271 = vmatprep.subr.bf16.mxu0 0
    %1272 = vmatpush1.bf16.msra.mxu0 0
    %1273 = vmatprep.subr.bf16.mxu0 0
    %1274 = vmatpush1.bf16.msra.mxu0 0
    %1275 = vmatprep.subr.bf16.mxu0 0
    %1276 = vmatpush1.bf16.msra.mxu0 0
    %1277 = vmatprep.subr.bf16.mxu0 0
    %1278 = vmatpush1.bf16.msra.mxu0 0
    %1279 = vmatprep.subr.bf16.mxu0 0
    %1280 = vmatpush1.bf16.msra.mxu0 0
    %1281 = vmatprep.subr.bf16.mxu0 0
    %1282 = vmatpush1.bf16.msra.mxu0 0
    %1283 = vmatprep.subr.bf16.mxu0 0
    %1284 = vmatpush1.bf16.msra.mxu0 %v1267
    %1285 = vmatprep.subr.bf16.mxu0 0
    %1286 = vmatpush2.bf16.msra.mxu0 0
    %1287 = vmatprep.subr.bf16.mxu0 0
    %1288 = vmatpush2.bf16.msra.mxu0 0
    %1289 = vmatprep.subr.bf16.mxu0 0
    %1290 = vmatpush2.bf16.msra.mxu0 0
    %1291 = vmatprep.subr.bf16.mxu0 0
    %1292 = vmatpush2.bf16.msra.mxu0 0
    %1293 = vmatprep.subr.bf16.mxu0 0
    %1294 = vmatpush2.bf16.msra.mxu0 0
    %1295 = vmatprep.subr.bf16.mxu0 0
    %1296 = vmatpush2.bf16.msra.mxu0 0
    %1297 = vmatprep.subr.bf16.mxu0 0
    %1298 = vmatpush2.bf16.msra.mxu0 0
    %1299 = vmatprep.subr.bf16.mxu0 0
    %1300 = vmatpush2.bf16.msra.mxu0 0
    %1301 = vmatprep.mubr.bf16.mxu0 0
    %1302 = vmatmul.mubr.bf16.gmra.mxu0 %v1041
    %v1303 = vpop.f32.mrf.mxu0
    %v1304 = vadd.f32 0.0, %v1303
    %v1305 = vpop.f32.mrf.mxu0
    %v1306 = vpop.f32.mrf.mxu0
    %v1307 = vadd.f32 0.0, %v1306
    %v1308 = vpop.f32.mrf.mxu0
    %1309 = vmatprep.mubr.bf16.mxu0 0
    %1310 = vmatmul.mubr.bf16.gmra.mxu0 %v1044
    %v1311 = vpop.f32.mrf.mxu0
    %v1312 = vadd.f32 0.0, %v1311
    %v1313 = vpop.f32.mrf.mxu0
    %v1314 = vpop.f32.mrf.mxu0
    %v1315 = vpop.f32.mrf.mxu0
    %1316 = vdwg.mxu0
    %vm1317 = vcmp.gt.f32.partialorder %v198, 0.0
    %v1318 = vsel %vm1317, %v1259, -1e+30
    %v1319 = vsel %vm856, %v1318, -inf
    %1320 = vmax.xlane.f32.xlu0 %v1319
    %v1321 = vpop.xlane.xlu0 %1320
    %v1322 = vsub.f32 %v1318, %v1321
    %v1323 = vmul.f32 %v1322, 1.442695
    %v1324 = vpow.pop %v1323
    %v1325 = vmul.f32 %v1324, %v198
    %v1326 = vsel %vm856, %v1325, 0.0
    %1327 = vadd.xlane.f32.xlu0 %v1326
    %v1328 = vpop.xlane.xlu0 %1327
    %v1329 = vpack.c.bf16 %v1325, %v1325
    %v1330 = vpack.c.bf16 %v1307, %v1304
    %v1331 = vpack.c.bf16 %v1312, %v1312
    %v1333 = vsel %vm856, %v1329, 0
    %v1336 = vsel %vm873, %v1331, 0
    %1338 = vmatprep.subr.bf16.mxu0 0
    %1339 = vmatpush1.bf16.msra.mxu0 0
    %1340 = vmatprep.subr.bf16.mxu0 0
    %1341 = vmatpush1.bf16.msra.mxu0 0
    %1342 = vmatprep.subr.bf16.mxu0 0
    %1343 = vmatpush1.bf16.msra.mxu0 0
    %1344 = vmatprep.subr.bf16.mxu0 0
    %1345 = vmatpush1.bf16.msra.mxu0 0
    %1346 = vmatprep.subr.bf16.mxu0 0
    %1347 = vmatpush1.bf16.msra.mxu0 0
    %1348 = vmatprep.subr.bf16.mxu0 0
    %1349 = vmatpush1.bf16.msra.mxu0 0
    %1350 = vmatprep.subr.bf16.mxu0 0
    %1351 = vmatpush1.bf16.msra.mxu0 %v1336
    %1352 = vmatprep.subr.bf16.mxu0 0
    %1353 = vmatpush1.bf16.msra.mxu0 %v1330
    %1354 = vmatprep.subr.bf16.mxu0 0
    %1355 = vmatpush2.bf16.msra.mxu0 0
    %1356 = vmatprep.subr.bf16.mxu0 0
    %1357 = vmatpush2.bf16.msra.mxu0 0
    %1358 = vmatprep.subr.bf16.mxu0 0
    %1359 = vmatpush2.bf16.msra.mxu0 0
    %1360 = vmatprep.subr.bf16.mxu0 0
    %1361 = vmatpush2.bf16.msra.mxu0 0
    %1362 = vmatprep.subr.bf16.mxu0 0
    %1363 = vmatpush2.bf16.msra.mxu0 0
    %1364 = vmatprep.subr.bf16.mxu0 0
    %1365 = vmatpush2.bf16.msra.mxu0 0
    %1366 = vmatprep.subr.bf16.mxu0 0
    %1367 = vmatpush2.bf16.msra.mxu0 0
    %1368 = vmatprep.subr.bf16.mxu0 0
    %1369 = vmatpush2.bf16.msra.mxu0 0
    %1370 = vmatprep.mubr.bf16.mxu0 0
    %1371 = vmatmul.mubr.bf16.gmra.mxu0 %v1333
    %v1372 = vpop.f32.mrf.mxu0
    %v1373 = vadd.f32 0.0, %v1372
    %v1374 = vpop.f32.mrf.mxu0
    %v1375 = vpop.f32.mrf.mxu0
    %v1376 = vpop.f32.mrf.mxu0
    %1377 = vdwg.mxu0
    %vm1378 = vcmp.gt.f32.partialorder %v1328, 0.0
    %v1379 = vsel %vm1378, %v1328, 1.0
    %v1380 = vrcp.pop %v1379
    %v1381 = vmul.f32 %v1373, %v1380
    %s1382 = scalar_lea.vmem %s11, 40
    %v1383 = vld [vmem:[%s1382] sm:$0xf]
    %v1384 = vld [vmem:[%s1382 + $0x4] sm:$0xf]
    %1385 = vrot.lane.b32.xlu0 %v512, 80
    %v1386 = vpop.permute.xlu0 %1385
    %v1389 = vunpack.c.l.b16 %v1383
    %v1390 = vunpack.c.l.b16 %v1384
    %v1391 = vpack.c.b16 %v1390, %v1389
    %v1394 = vsel %vm522, %v1386, 0
    %1396 = vmatprep.subr.bf16.mxu0 0
    %1397 = vmatpush1.bf16.msra.mxu0 0
    %1398 = vmatprep.subr.bf16.mxu0 0
    %1399 = vmatpush1.bf16.msra.mxu0 0
    %1400 = vmatprep.subr.bf16.mxu0 0
    %1401 = vmatpush1.bf16.msra.mxu0 0
    %1402 = vmatprep.subr.bf16.mxu0 0
    %1403 = vmatpush1.bf16.msra.mxu0 0
    %1404 = vmatprep.subr.bf16.mxu0 0
    %1405 = vmatpush1.bf16.msra.mxu0 0
    %1406 = vmatprep.subr.bf16.mxu0 0
    %1407 = vmatpush1.bf16.msra.mxu0 0
    %1408 = vmatprep.subr.bf16.mxu0 0
    %1409 = vmatpush1.bf16.msra.mxu0 0
    %1410 = vmatprep.subr.bf16.mxu0 0
    %1411 = vmatpush1.bf16.msra.mxu0 %v1391
    %1412 = vmatprep.subr.bf16.mxu0 0
    %1413 = vmatpush2.bf16.msra.mxu0 0
    %1414 = vmatprep.subr.bf16.mxu0 0
    %1415 = vmatpush2.bf16.msra.mxu0 0
    %1416 = vmatprep.subr.bf16.mxu0 0
    %1417 = vmatpush2.bf16.msra.mxu0 0
    %1418 = vmatprep.subr.bf16.mxu0 0
    %1419 = vmatpush2.bf16.msra.mxu0 0
    %1420 = vmatprep.subr.bf16.mxu0 0
    %1421 = vmatpush2.bf16.msra.mxu0 0
    %1422 = vmatprep.subr.bf16.mxu0 0
    %1423 = vmatpush2.bf16.msra.mxu0 0
    %1424 = vmatprep.subr.bf16.mxu0 0
    %1425 = vmatpush2.bf16.msra.mxu0 0
    %1426 = vmatprep.subr.bf16.mxu0 0
    %1427 = vmatpush2.bf16.msra.mxu0 0
    %1428 = vmatprep.mubr.bf16.mxu0 0
    %1429 = vmatmul.mubr.bf16.gmra.mxu0 %v1394
    %v1430 = vpop.f32.mrf.mxu0
    %v1431 = vadd.f32 0.0, %v1430
    %v1432 = vpop.f32.mrf.mxu0
    %v1433 = vpop.f32.mrf.mxu0
    %v1434 = vpop.f32.mrf.mxu0
    %1435 = vdwg.mxu0
    %v1436 = vpack.c.bf16 %v1431, %v1431
    %v1438 = vsel %vm522, %v1436, 0
    %1440 = vmatprep.subr.bf16.mxu0 0
    %1441 = vmatpush1.bf16.msra.mxu0 0
    %1442 = vmatprep.subr.bf16.mxu0 0
    %1443 = vmatpush1.bf16.msra.mxu0 0
    %1444 = vmatprep.subr.bf16.mxu0 0
    %1445 = vmatpush1.bf16.msra.mxu0 0
    %1446 = vmatprep.subr.bf16.mxu0 0
    %1447 = vmatpush1.bf16.msra.mxu0 0
    %1448 = vmatprep.subr.bf16.mxu0 0
    %1449 = vmatpush1.bf16.msra.mxu0 0
    %1450 = vmatprep.subr.bf16.mxu0 0
    %1451 = vmatpush1.bf16.msra.mxu0 0
    %1452 = vmatprep.subr.bf16.mxu0 0
    %1453 = vmatpush1.bf16.msra.mxu0 0
    %1454 = vmatprep.subr.bf16.mxu0 0
    %1455 = vmatpush1.bf16.msra.mxu0 %v508
    %1456 = vmatprep.subr.bf16.mxu0 0
    %1457 = vmatpush2.bf16.msra.mxu0 0
    %1458 = vmatprep.subr.bf16.mxu0 0
    %1459 = vmatpush2.bf16.msra.mxu0 0
    %1460 = vmatprep.subr.bf16.mxu0 0
    %1461 = vmatpush2.bf16.msra.mxu0 0
    %1462 = vmatprep.subr.bf16.mxu0 0
    %1463 = vmatpush2.bf16.msra.mxu0 0
    %1464 = vmatprep.subr.bf16.mxu0 0
    %1465 = vmatpush2.bf16.msra.mxu0 0
    %1466 = vmatprep.subr.bf16.mxu0 0
    %1467 = vmatpush2.bf16.msra.mxu0 0
    %1468 = vmatprep.subr.bf16.mxu0 0
    %1469 = vmatpush2.bf16.msra.mxu0 0
    %1470 = vmatprep.subr.bf16.mxu0 0
    %1471 = vmatpush2.bf16.msra.mxu0 0
    %1472 = vmatprep.mubr.bf16.mxu0 0
    %1473 = vmatmul.mubr.bf16.gmra.mxu0 %v1438
    %v1474 = vpop.f32.mrf.mxu0
    %v1475 = vadd.f32 0.0, %v1474
    %v1476 = vpop.f32.mrf.mxu0
    %v1477 = vpop.f32.mrf.mxu0
    %v1478 = vpop.f32.mrf.mxu0
    %1479 = vdwg.mxu0
    %v1480 = vmul.f32 %v190, %v1475
    %s1481 = scalar_lea.vmem %s12, 40
    %v1482 = vld [vmem:[%s1481] sm:$0xf]
    %v1483 = vld [vmem:[%s1481 + $0x4] sm:$0xf]
    %s1484 = scalar_lea.vmem %s11, 56
    %v1485 = vld [vmem:[%s1484] sm:$0xf]
    %v1486 = vld [vmem:[%s1484 + $0x4] sm:$0xf]
    %v1489 = vunpack.c.l.b16 %v1485
    %v1490 = vunpack.c.l.b16 %v1486
    %v1491 = vpack.c.b16 %v1490, %v1489
    %1493 = vmatprep.subr.bf16.mxu0 0
    %1494 = vmatpush1.bf16.msra.mxu0 0
    %1495 = vmatprep.subr.bf16.mxu0 0
    %1496 = vmatpush1.bf16.msra.mxu0 0
    %1497 = vmatprep.subr.bf16.mxu0 0
    %1498 = vmatpush1.bf16.msra.mxu0 0
    %1499 = vmatprep.subr.bf16.mxu0 0
    %1500 = vmatpush1.bf16.msra.mxu0 0
    %1501 = vmatprep.subr.bf16.mxu0 0
    %1502 = vmatpush1.bf16.msra.mxu0 0
    %1503 = vmatprep.subr.bf16.mxu0 0
    %1504 = vmatpush1.bf16.msra.mxu0 0
    %1505 = vmatprep.subr.bf16.mxu0 0
    %1506 = vmatpush1.bf16.msra.mxu0 0
    %1507 = vmatprep.subr.bf16.mxu0 0
    %1508 = vmatpush1.bf16.msra.mxu0 %v1491
    %1509 = vmatprep.subr.bf16.mxu0 0
    %1510 = vmatpush2.bf16.msra.mxu0 0
    %1511 = vmatprep.subr.bf16.mxu0 0
    %1512 = vmatpush2.bf16.msra.mxu0 0
    %1513 = vmatprep.subr.bf16.mxu0 0
    %1514 = vmatpush2.bf16.msra.mxu0 0
    %1515 = vmatprep.subr.bf16.mxu0 0
    %1516 = vmatpush2.bf16.msra.mxu0 0
    %1517 = vmatprep.subr.bf16.mxu0 0
    %1518 = vmatpush2.bf16.msra.mxu0 0
    %1519 = vmatprep.subr.bf16.mxu0 0
    %1520 = vmatpush2.bf16.msra.mxu0 0
    %1521 = vmatprep.subr.bf16.mxu0 0
    %1522 = vmatpush2.bf16.msra.mxu0 0
    %1523 = vmatprep.subr.bf16.mxu0 0
    %1524 = vmatpush2.bf16.msra.mxu0 0
    %1525 = vmatprep.mubr.bf16.mxu0 0
    %1526 = vmatmul.mubr.bf16.gmra.mxu0 %v1394
    %v1527 = vpop.f32.mrf.mxu0
    %v1528 = vadd.f32 0.0, %v1527
    %v1529 = vpop.f32.mrf.mxu0
    %v1530 = vpop.f32.mrf.mxu0
    %v1531 = vpop.f32.mrf.mxu0
    %1532 = vdwg.mxu0
    %v1533 = vpack.c.bf16 %v1528, %v1528
    %v1535 = vsel %vm522, %v1533, 0
    %1537 = vmatprep.subr.bf16.mxu0 0
    %1538 = vmatpush1.bf16.msra.mxu0 0
    %1539 = vmatprep.subr.bf16.mxu0 0
    %1540 = vmatpush1.bf16.msra.mxu0 0
    %1541 = vmatprep.subr.bf16.mxu0 0
    %1542 = vmatpush1.bf16.msra.mxu0 0
    %1543 = vmatprep.subr.bf16.mxu0 0
    %1544 = vmatpush1.bf16.msra.mxu0 0
    %1545 = vmatprep.subr.bf16.mxu0 0
    %1546 = vmatpush1.bf16.msra.mxu0 0
    %1547 = vmatprep.subr.bf16.mxu0 0
    %1548 = vmatpush1.bf16.msra.mxu0 0
    %1549 = vmatprep.subr.bf16.mxu0 0
    %1550 = vmatpush1.bf16.msra.mxu0 0
    %1551 = vmatprep.subr.bf16.mxu0 0
    %1552 = vmatpush1.bf16.msra.mxu0 %v508
    %1553 = vmatprep.subr.bf16.mxu0 0
    %1554 = vmatpush2.bf16.msra.mxu0 0
    %1555 = vmatprep.subr.bf16.mxu0 0
    %1556 = vmatpush2.bf16.msra.mxu0 0
    %1557 = vmatprep.subr.bf16.mxu0 0
    %1558 = vmatpush2.bf16.msra.mxu0 0
    %1559 = vmatprep.subr.bf16.mxu0 0
    %1560 = vmatpush2.bf16.msra.mxu0 0
    %1561 = vmatprep.subr.bf16.mxu0 0
    %1562 = vmatpush2.bf16.msra.mxu0 0
    %1563 = vmatprep.subr.bf16.mxu0 0
    %1564 = vmatpush2.bf16.msra.mxu0 0
    %1565 = vmatprep.subr.bf16.mxu0 0
    %1566 = vmatpush2.bf16.msra.mxu0 0
    %1567 = vmatprep.subr.bf16.mxu0 0
    %1568 = vmatpush2.bf16.msra.mxu0 0
    %1569 = vmatprep.mubr.bf16.mxu0 0
    %1570 = vmatmul.mubr.bf16.gmra.mxu0 %v1535
    %v1571 = vpop.f32.mrf.mxu0
    %v1572 = vadd.f32 0.0, %v1571
    %v1573 = vpop.f32.mrf.mxu0
    %v1574 = vpop.f32.mrf.mxu0
    %v1575 = vpop.f32.mrf.mxu0
    %1576 = vdwg.mxu0
    %v1577 = vmul.f32 %v195, %v1572
    %v1578 = vadd.f32 %v1480, %v1577
    %s1579 = scalar_lea.vmem %s12, 56
    %v1580 = vld [vmem:[%s1579] sm:$0xf]
    %v1581 = vld [vmem:[%s1579 + $0x4] sm:$0xf]
    %1582 = vrot.lane.b32.xlu0 %v720, 48
    %v1583 = vpop.permute.xlu0 %1582
    %1584 = vrot.lane.b32.xlu0 %v721, 48
    %v1585 = vpop.permute.xlu0 %1584
    %v1588 = vunpack.c.l.b16 %v1580
    %v1589 = vunpack.c.l.b16 %v1581
    %v1590 = vpack.c.b16 %v1589, %v1588
    %v1593 = vsel %vm522, %v1583, 0
    %v1596 = vsel %vm522, %v1585, 0
    %1598 = vmatprep.subr.bf16.mxu0 0
    %1599 = vmatpush1.bf16.msra.mxu0 0
    %1600 = vmatprep.subr.bf16.mxu0 0
    %1601 = vmatpush1.bf16.msra.mxu0 0
    %1602 = vmatprep.subr.bf16.mxu0 0
    %1603 = vmatpush1.bf16.msra.mxu0 0
    %1604 = vmatprep.subr.bf16.mxu0 0
    %1605 = vmatpush1.bf16.msra.mxu0 0
    %1606 = vmatprep.subr.bf16.mxu0 0
    %1607 = vmatpush1.bf16.msra.mxu0 0
    %1608 = vmatprep.subr.bf16.mxu0 0
    %1609 = vmatpush1.bf16.msra.mxu0 0
    %1610 = vmatprep.subr.bf16.mxu0 0
    %1611 = vmatpush1.bf16.msra.mxu0 0
    %1612 = vmatprep.subr.bf16.mxu0 0
    %1613 = vmatpush1.bf16.msra.mxu0 %v1590
    %1614 = vmatprep.subr.bf16.mxu0 0
    %1615 = vmatpush2.bf16.msra.mxu0 0
    %1616 = vmatprep.subr.bf16.mxu0 0
    %1617 = vmatpush2.bf16.msra.mxu0 0
    %1618 = vmatprep.subr.bf16.mxu0 0
    %1619 = vmatpush2.bf16.msra.mxu0 0
    %1620 = vmatprep.subr.bf16.mxu0 0
    %1621 = vmatpush2.bf16.msra.mxu0 0
    %1622 = vmatprep.subr.bf16.mxu0 0
    %1623 = vmatpush2.bf16.msra.mxu0 0
    %1624 = vmatprep.subr.bf16.mxu0 0
    %1625 = vmatpush2.bf16.msra.mxu0 0
    %1626 = vmatprep.subr.bf16.mxu0 0
    %1627 = vmatpush2.bf16.msra.mxu0 0
    %1628 = vmatprep.subr.bf16.mxu0 0
    %1629 = vmatpush2.bf16.msra.mxu0 0
    %1630 = vmatprep.mubr.bf16.mxu0 0
    %1631 = vmatmul.mubr.bf16.gmra.mxu0 %v1593
    %v1632 = vpop.f32.mrf.mxu0
    %v1633 = vadd.f32 0.0, %v1632
    %v1634 = vpop.f32.mrf.mxu0
    %v1635 = vpop.f32.mrf.mxu0
    %v1636 = vadd.f32 0.0, %v1635
    %v1637 = vpop.f32.mrf.mxu0
    %1638 = vmatprep.mubr.bf16.mxu0 0
    %1639 = vmatmul.mubr.bf16.gmra.mxu0 %v1596
    %v1640 = vpop.f32.mrf.mxu0
    %v1641 = vadd.f32 0.0, %v1640
    %v1642 = vpop.f32.mrf.mxu0
    %v1643 = vpop.f32.mrf.mxu0
    %v1644 = vpop.f32.mrf.mxu0
    %1645 = vdwg.mxu0
    %1646 = vrot.lane.b32.xlu0 %v617, 48
    %v1647 = vpop.permute.xlu0 %1646
    %1648 = vrot.lane.b32.xlu0 %v618, 48
    %v1649 = vpop.permute.xlu0 %1648
    %v1652 = vunpack.c.l.b16 %v1482
    %v1653 = vunpack.c.l.b16 %v1483
    %v1654 = vpack.c.b16 %v1653, %v1652
    %v1657 = vsel %vm522, %v1647, 0
    %v1660 = vsel %vm522, %v1649, 0
    %1662 = vmatprep.subr.bf16.mxu0 0
    %1663 = vmatpush1.bf16.msra.mxu0 0
    %1664 = vmatprep.subr.bf16.mxu0 0
    %1665 = vmatpush1.bf16.msra.mxu0 0
    %1666 = vmatprep.subr.bf16.mxu0 0
    %1667 = vmatpush1.bf16.msra.mxu0 0
    %1668 = vmatprep.subr.bf16.mxu0 0
    %1669 = vmatpush1.bf16.msra.mxu0 0
    %1670 = vmatprep.subr.bf16.mxu0 0
    %1671 = vmatpush1.bf16.msra.mxu0 0
    %1672 = vmatprep.subr.bf16.mxu0 0
    %1673 = vmatpush1.bf16.msra.mxu0 0
    %1674 = vmatprep.subr.bf16.mxu0 0
    %1675 = vmatpush1.bf16.msra.mxu0 0
    %1676 = vmatprep.subr.bf16.mxu0 0
    %1677 = vmatpush1.bf16.msra.mxu0 %v1654
    %1678 = vmatprep.subr.bf16.mxu0 0
    %1679 = vmatpush2.bf16.msra.mxu0 0
    %1680 = vmatprep.subr.bf16.mxu0 0
    %1681 = vmatpush2.bf16.msra.mxu0 0
    %1682 = vmatprep.subr.bf16.mxu0 0
    %1683 = vmatpush2.bf16.msra.mxu0 0
    %1684 = vmatprep.subr.bf16.mxu0 0
    %1685 = vmatpush2.bf16.msra.mxu0 0
    %1686 = vmatprep.subr.bf16.mxu0 0
    %1687 = vmatpush2.bf16.msra.mxu0 0
    %1688 = vmatprep.subr.bf16.mxu0 0
    %1689 = vmatpush2.bf16.msra.mxu0 0
    %1690 = vmatprep.subr.bf16.mxu0 0
    %1691 = vmatpush2.bf16.msra.mxu0 0
    %1692 = vmatprep.subr.bf16.mxu0 0
    %1693 = vmatpush2.bf16.msra.mxu0 0
    %1694 = vmatprep.mubr.bf16.mxu0 0
    %1695 = vmatmul.mubr.bf16.gmra.mxu0 %v1657
    %v1696 = vpop.f32.mrf.mxu0
    %v1697 = vadd.f32 %v1633, %v1696
    %v1698 = vpop.f32.mrf.mxu0
    %v1699 = vpop.f32.mrf.mxu0
    %v1700 = vadd.f32 %v1636, %v1699
    %v1701 = vpop.f32.mrf.mxu0
    %1702 = vmatprep.mubr.bf16.mxu0 0
    %1703 = vmatmul.mubr.bf16.gmra.mxu0 %v1660
    %v1704 = vpop.f32.mrf.mxu0
    %v1705 = vadd.f32 %v1641, %v1704
    %v1706 = vpop.f32.mrf.mxu0
    %v1707 = vpop.f32.mrf.mxu0
    %v1708 = vpop.f32.mrf.mxu0
    %1709 = vdwg.mxu0
    %v1710 = vsel %vm854, %v1578, -1e+30
    %v1711 = vsel %vm856, %v1710, -inf
    %1712 = vmax.xlane.f32.xlu0 %v1711
    %v1713 = vpop.xlane.xlu0 %1712
    %v1714 = vsub.f32 %v1710, %v1713
    %v1715 = vmul.f32 %v1714, 1.442695
    %v1716 = vpow.pop %v1715
    %v1717 = vmul.f32 %v1716, %v196
    %v1718 = vsel %vm856, %v1717, 0.0
    %1719 = vadd.xlane.f32.xlu0 %v1718
    %v1720 = vpop.xlane.xlu0 %1719
    %v1721 = vpack.c.bf16 %v1717, %v1717
    %v1722 = vpack.c.bf16 %v1700, %v1697
    %v1723 = vpack.c.bf16 %v1705, %v1705
    %v1725 = vsel %vm856, %v1721, 0
    %v1728 = vsel %vm873, %v1723, 0
    %1730 = vmatprep.subr.bf16.mxu0 0
    %1731 = vmatpush1.bf16.msra.mxu0 0
    %1732 = vmatprep.subr.bf16.mxu0 0
    %1733 = vmatpush1.bf16.msra.mxu0 0
    %1734 = vmatprep.subr.bf16.mxu0 0
    %1735 = vmatpush1.bf16.msra.mxu0 0
    %1736 = vmatprep.subr.bf16.mxu0 0
    %1737 = vmatpush1.bf16.msra.mxu0 0
    %1738 = vmatprep.subr.bf16.mxu0 0
    %1739 = vmatpush1.bf16.msra.mxu0 0
    %1740 = vmatprep.subr.bf16.mxu0 0
    %1741 = vmatpush1.bf16.msra.mxu0 0
    %1742 = vmatprep.subr.bf16.mxu0 0
    %1743 = vmatpush1.bf16.msra.mxu0 %v1728
    %1744 = vmatprep.subr.bf16.mxu0 0
    %1745 = vmatpush1.bf16.msra.mxu0 %v1722
    %1746 = vmatprep.subr.bf16.mxu0 0
    %1747 = vmatpush2.bf16.msra.mxu0 0
    %1748 = vmatprep.subr.bf16.mxu0 0
    %1749 = vmatpush2.bf16.msra.mxu0 0
    %1750 = vmatprep.subr.bf16.mxu0 0
    %1751 = vmatpush2.bf16.msra.mxu0 0
    %1752 = vmatprep.subr.bf16.mxu0 0
    %1753 = vmatpush2.bf16.msra.mxu0 0
    %1754 = vmatprep.subr.bf16.mxu0 0
    %1755 = vmatpush2.bf16.msra.mxu0 0
    %1756 = vmatprep.subr.bf16.mxu0 0
    %1757 = vmatpush2.bf16.msra.mxu0 0
    %1758 = vmatprep.subr.bf16.mxu0 0
    %1759 = vmatpush2.bf16.msra.mxu0 0
    %1760 = vmatprep.subr.bf16.mxu0 0
    %1761 = vmatpush2.bf16.msra.mxu0 0
    %1762 = vmatprep.mubr.bf16.mxu0 0
    %1763 = vmatmul.mubr.bf16.gmra.mxu0 %v1725
    %v1764 = vpop.f32.mrf.mxu0
    %v1765 = vadd.f32 0.0, %v1764
    %v1766 = vpop.f32.mrf.mxu0
    %v1767 = vpop.f32.mrf.mxu0
    %v1768 = vpop.f32.mrf.mxu0
    %1769 = vdwg.mxu0
    %vm1770 = vcmp.gt.f32.partialorder %v1720, 0.0
    %v1771 = vsel %vm1770, %v1720, 1.0
    %v1772 = vrcp.pop %v1771
    %v1773 = vmul.f32 %v1765, %v1772
    %s1774 = scalar_lea.vmem %s11, 32
    %v1775 = vld [vmem:[%s1774] sm:$0xf]
    %v1776 = vld [vmem:[%s1774 + $0x4] sm:$0xf]
    %1777 = vrot.lane.b32.xlu0 %v923, 80
    %v1778 = vpop.permute.xlu0 %1777
    %v1781 = vunpack.c.l.b16 %v1775
    %v1782 = vunpack.c.l.b16 %v1776
    %v1783 = vpack.c.b16 %v1782, %v1781
    %v1786 = vsel %vm522, %v1778, 0
    %1788 = vmatprep.subr.bf16.mxu0 0
    %1789 = vmatpush1.bf16.msra.mxu0 0
    %1790 = vmatprep.subr.bf16.mxu0 0
    %1791 = vmatpush1.bf16.msra.mxu0 0
    %1792 = vmatprep.subr.bf16.mxu0 0
    %1793 = vmatpush1.bf16.msra.mxu0 0
    %1794 = vmatprep.subr.bf16.mxu0 0
    %1795 = vmatpush1.bf16.msra.mxu0 0
    %1796 = vmatprep.subr.bf16.mxu0 0
    %1797 = vmatpush1.bf16.msra.mxu0 0
    %1798 = vmatprep.subr.bf16.mxu0 0
    %1799 = vmatpush1.bf16.msra.mxu0 0
    %1800 = vmatprep.subr.bf16.mxu0 0
    %1801 = vmatpush1.bf16.msra.mxu0 0
    %1802 = vmatprep.subr.bf16.mxu0 0
    %1803 = vmatpush1.bf16.msra.mxu0 %v1783
    %1804 = vmatprep.subr.bf16.mxu0 0
    %1805 = vmatpush2.bf16.msra.mxu0 0
    %1806 = vmatprep.subr.bf16.mxu0 0
    %1807 = vmatpush2.bf16.msra.mxu0 0
    %1808 = vmatprep.subr.bf16.mxu0 0
    %1809 = vmatpush2.bf16.msra.mxu0 0
    %1810 = vmatprep.subr.bf16.mxu0 0
    %1811 = vmatpush2.bf16.msra.mxu0 0
    %1812 = vmatprep.subr.bf16.mxu0 0
    %1813 = vmatpush2.bf16.msra.mxu0 0
    %1814 = vmatprep.subr.bf16.mxu0 0
    %1815 = vmatpush2.bf16.msra.mxu0 0
    %1816 = vmatprep.subr.bf16.mxu0 0
    %1817 = vmatpush2.bf16.msra.mxu0 0
    %1818 = vmatprep.subr.bf16.mxu0 0
    %1819 = vmatpush2.bf16.msra.mxu0 0
    %1820 = vmatprep.mubr.bf16.mxu0 0
    %1821 = vmatmul.mubr.bf16.gmra.mxu0 %v1786
    %v1822 = vpop.f32.mrf.mxu0
    %v1823 = vadd.f32 0.0, %v1822
    %v1824 = vpop.f32.mrf.mxu0
    %v1825 = vpop.f32.mrf.mxu0
    %v1826 = vpop.f32.mrf.mxu0
    %1827 = vdwg.mxu0
    %v1828 = vpack.c.bf16 %v1823, %v1823
    %v1830 = vsel %vm522, %v1828, 0
    %1832 = vmatprep.subr.bf16.mxu0 0
    %1833 = vmatpush1.bf16.msra.mxu0 0
    %1834 = vmatprep.subr.bf16.mxu0 0
    %1835 = vmatpush1.bf16.msra.mxu0 0
    %1836 = vmatprep.subr.bf16.mxu0 0
    %1837 = vmatpush1.bf16.msra.mxu0 0
    %1838 = vmatprep.subr.bf16.mxu0 0
    %1839 = vmatpush1.bf16.msra.mxu0 0
    %1840 = vmatprep.subr.bf16.mxu0 0
    %1841 = vmatpush1.bf16.msra.mxu0 0
    %1842 = vmatprep.subr.bf16.mxu0 0
    %1843 = vmatpush1.bf16.msra.mxu0 0
    %1844 = vmatprep.subr.bf16.mxu0 0
    %1845 = vmatpush1.bf16.msra.mxu0 0
    %1846 = vmatprep.subr.bf16.mxu0 0
    %1847 = vmatpush1.bf16.msra.mxu0 %v508
    %1848 = vmatprep.subr.bf16.mxu0 0
    %1849 = vmatpush2.bf16.msra.mxu0 0
    %1850 = vmatprep.subr.bf16.mxu0 0
    %1851 = vmatpush2.bf16.msra.mxu0 0
    %1852 = vmatprep.subr.bf16.mxu0 0
    %1853 = vmatpush2.bf16.msra.mxu0 0
    %1854 = vmatprep.subr.bf16.mxu0 0
    %1855 = vmatpush2.bf16.msra.mxu0 0
    %1856 = vmatprep.subr.bf16.mxu0 0
    %1857 = vmatpush2.bf16.msra.mxu0 0
    %1858 = vmatprep.subr.bf16.mxu0 0
    %1859 = vmatpush2.bf16.msra.mxu0 0
    %1860 = vmatprep.subr.bf16.mxu0 0
    %1861 = vmatpush2.bf16.msra.mxu0 0
    %1862 = vmatprep.subr.bf16.mxu0 0
    %1863 = vmatpush2.bf16.msra.mxu0 0
    %1864 = vmatprep.mubr.bf16.mxu0 0
    %1865 = vmatmul.mubr.bf16.gmra.mxu0 %v1830
    %v1866 = vpop.f32.mrf.mxu0
    %v1867 = vadd.f32 0.0, %v1866
    %v1868 = vpop.f32.mrf.mxu0
    %v1869 = vpop.f32.mrf.mxu0
    %v1870 = vpop.f32.mrf.mxu0
    %1871 = vdwg.mxu0
    %v1872 = vmul.f32 %v185, %v1867
    %s1873 = scalar_lea.vmem %s12, 32
    %v1874 = vld [vmem:[%s1873] sm:$0xf]
    %v1875 = vld [vmem:[%s1873 + $0x4] sm:$0xf]
    %1876 = vrot.lane.b32.xlu0 %v1026, 48
    %v1877 = vpop.permute.xlu0 %1876
    %1878 = vrot.lane.b32.xlu0 %v1027, 48
    %v1879 = vpop.permute.xlu0 %1878
    %v1882 = vunpack.c.l.b16 %v1874
    %v1883 = vunpack.c.l.b16 %v1875
    %v1884 = vpack.c.b16 %v1883, %v1882
    %v1887 = vsel %vm522, %v1877, 0
    %v1890 = vsel %vm522, %v1879, 0
    %1892 = vmatprep.subr.bf16.mxu0 0
    %1893 = vmatpush1.bf16.msra.mxu0 0
    %1894 = vmatprep.subr.bf16.mxu0 0
    %1895 = vmatpush1.bf16.msra.mxu0 0
    %1896 = vmatprep.subr.bf16.mxu0 0
    %1897 = vmatpush1.bf16.msra.mxu0 0
    %1898 = vmatprep.subr.bf16.mxu0 0
    %1899 = vmatpush1.bf16.msra.mxu0 0
    %1900 = vmatprep.subr.bf16.mxu0 0
    %1901 = vmatpush1.bf16.msra.mxu0 0
    %1902 = vmatprep.subr.bf16.mxu0 0
    %1903 = vmatpush1.bf16.msra.mxu0 0
    %1904 = vmatprep.subr.bf16.mxu0 0
    %1905 = vmatpush1.bf16.msra.mxu0 0
    %1906 = vmatprep.subr.bf16.mxu0 0
    %1907 = vmatpush1.bf16.msra.mxu0 %v1884
    %1908 = vmatprep.subr.bf16.mxu0 0
    %1909 = vmatpush2.bf16.msra.mxu0 0
    %1910 = vmatprep.subr.bf16.mxu0 0
    %1911 = vmatpush2.bf16.msra.mxu0 0
    %1912 = vmatprep.subr.bf16.mxu0 0
    %1913 = vmatpush2.bf16.msra.mxu0 0
    %1914 = vmatprep.subr.bf16.mxu0 0
    %1915 = vmatpush2.bf16.msra.mxu0 0
    %1916 = vmatprep.subr.bf16.mxu0 0
    %1917 = vmatpush2.bf16.msra.mxu0 0
    %1918 = vmatprep.subr.bf16.mxu0 0
    %1919 = vmatpush2.bf16.msra.mxu0 0
    %1920 = vmatprep.subr.bf16.mxu0 0
    %1921 = vmatpush2.bf16.msra.mxu0 0
    %1922 = vmatprep.subr.bf16.mxu0 0
    %1923 = vmatpush2.bf16.msra.mxu0 0
    %1924 = vmatprep.mubr.bf16.mxu0 0
    %1925 = vmatmul.mubr.bf16.gmra.mxu0 %v1887
    %v1926 = vpop.f32.mrf.mxu0
    %v1927 = vadd.f32 0.0, %v1926
    %v1928 = vpop.f32.mrf.mxu0
    %v1929 = vpop.f32.mrf.mxu0
    %v1930 = vadd.f32 0.0, %v1929
    %v1931 = vpop.f32.mrf.mxu0
    %1932 = vmatprep.mubr.bf16.mxu0 0
    %1933 = vmatmul.mubr.bf16.gmra.mxu0 %v1890
    %v1934 = vpop.f32.mrf.mxu0
    %v1935 = vadd.f32 0.0, %v1934
    %v1936 = vpop.f32.mrf.mxu0
    %v1937 = vpop.f32.mrf.mxu0
    %v1938 = vpop.f32.mrf.mxu0
    %1939 = vdwg.mxu0
    %v1940 = vsel %vm1094, %v1872, -1e+30
    %v1941 = vsel %vm856, %v1940, -inf
    %1942 = vmax.xlane.f32.xlu0 %v1941
    %v1943 = vpop.xlane.xlu0 %1942
    %v1944 = vsub.f32 %v1940, %v1943
    %v1945 = vmul.f32 %v1944, 1.442695
    %v1946 = vpow.pop %v1945
    %v1947 = vmul.f32 %v1946, %v197
    %v1948 = vsel %vm856, %v1947, 0.0
    %1949 = vadd.xlane.f32.xlu0 %v1948
    %v1950 = vpop.xlane.xlu0 %1949
    %v1951 = vpack.c.bf16 %v1947, %v1947
    %v1952 = vpack.c.bf16 %v1930, %v1927
    %v1953 = vpack.c.bf16 %v1935, %v1935
    %v1955 = vsel %vm856, %v1951, 0
    %v1958 = vsel %vm873, %v1953, 0
    %1960 = vmatprep.subr.bf16.mxu0 0
    %1961 = vmatpush1.bf16.msra.mxu0 0
    %1962 = vmatprep.subr.bf16.mxu0 0
    %1963 = vmatpush1.bf16.msra.mxu0 0
    %1964 = vmatprep.subr.bf16.mxu0 0
    %1965 = vmatpush1.bf16.msra.mxu0 0
    %1966 = vmatprep.subr.bf16.mxu0 0
    %1967 = vmatpush1.bf16.msra.mxu0 0
    %1968 = vmatprep.subr.bf16.mxu0 0
    %1969 = vmatpush1.bf16.msra.mxu0 0
    %1970 = vmatprep.subr.bf16.mxu0 0
    %1971 = vmatpush1.bf16.msra.mxu0 0
    %1972 = vmatprep.subr.bf16.mxu0 0
    %1973 = vmatpush1.bf16.msra.mxu0 %v1958
    %1974 = vmatprep.subr.bf16.mxu0 0
    %1975 = vmatpush1.bf16.msra.mxu0 %v1952
    %1976 = vmatprep.subr.bf16.mxu0 0
    %1977 = vmatpush2.bf16.msra.mxu0 0
    %1978 = vmatprep.subr.bf16.mxu0 0
    %1979 = vmatpush2.bf16.msra.mxu0 0
    %1980 = vmatprep.subr.bf16.mxu0 0
    %1981 = vmatpush2.bf16.msra.mxu0 0
    %1982 = vmatprep.subr.bf16.mxu0 0
    %1983 = vmatpush2.bf16.msra.mxu0 0
    %1984 = vmatprep.subr.bf16.mxu0 0
    %1985 = vmatpush2.bf16.msra.mxu0 0
    %1986 = vmatprep.subr.bf16.mxu0 0
    %1987 = vmatpush2.bf16.msra.mxu0 0
    %1988 = vmatprep.subr.bf16.mxu0 0
    %1989 = vmatpush2.bf16.msra.mxu0 0
    %1990 = vmatprep.subr.bf16.mxu0 0
    %1991 = vmatpush2.bf16.msra.mxu0 0
    %1992 = vmatprep.mubr.bf16.mxu0 0
    %1993 = vmatmul.mubr.bf16.gmra.mxu0 %v1955
    %v1994 = vpop.f32.mrf.mxu0
    %v1995 = vadd.f32 0.0, %v1994
    %v1996 = vpop.f32.mrf.mxu0
    %v1997 = vpop.f32.mrf.mxu0
    %v1998 = vpop.f32.mrf.mxu0
    %1999 = vdwg.mxu0
    %vm2000 = vcmp.gt.f32.partialorder %v1950, 0.0
    %v2001 = vsel %vm2000, %v1950, 1.0
    %v2002 = vrcp.pop %v2001
    %v2003 = vmul.f32 %v1995, %v2002
    %s2004 = scalar_lea.vmem %s11, 48
    %v2005 = vld [vmem:[%s2004] sm:$0xf]
    %v2006 = vld [vmem:[%s2004 + $0x4] sm:$0xf]
    %2007 = vrot.lane.b32.xlu0 %v1162, 80
    %v2008 = vpop.permute.xlu0 %2007
    %v2011 = vunpack.c.l.b16 %v2005
    %v2012 = vunpack.c.l.b16 %v2006
    %v2013 = vpack.c.b16 %v2012, %v2011
    %v2016 = vsel %vm522, %v2008, 0
    %2018 = vmatprep.subr.bf16.mxu0 0
    %2019 = vmatpush1.bf16.msra.mxu0 0
    %2020 = vmatprep.subr.bf16.mxu0 0
    %2021 = vmatpush1.bf16.msra.mxu0 0
    %2022 = vmatprep.subr.bf16.mxu0 0
    %2023 = vmatpush1.bf16.msra.mxu0 0
    %2024 = vmatprep.subr.bf16.mxu0 0
    %2025 = vmatpush1.bf16.msra.mxu0 0
    %2026 = vmatprep.subr.bf16.mxu0 0
    %2027 = vmatpush1.bf16.msra.mxu0 0
    %2028 = vmatprep.subr.bf16.mxu0 0
    %2029 = vmatpush1.bf16.msra.mxu0 0
    %2030 = vmatprep.subr.bf16.mxu0 0
    %2031 = vmatpush1.bf16.msra.mxu0 0
    %2032 = vmatprep.subr.bf16.mxu0 0
    %2033 = vmatpush1.bf16.msra.mxu0 %v2013
    %2034 = vmatprep.subr.bf16.mxu0 0
    %2035 = vmatpush2.bf16.msra.mxu0 0
    %2036 = vmatprep.subr.bf16.mxu0 0
    %2037 = vmatpush2.bf16.msra.mxu0 0
    %2038 = vmatprep.subr.bf16.mxu0 0
    %2039 = vmatpush2.bf16.msra.mxu0 0
    %2040 = vmatprep.subr.bf16.mxu0 0
    %2041 = vmatpush2.bf16.msra.mxu0 0
    %2042 = vmatprep.subr.bf16.mxu0 0
    %2043 = vmatpush2.bf16.msra.mxu0 0
    %2044 = vmatprep.subr.bf16.mxu0 0
    %2045 = vmatpush2.bf16.msra.mxu0 0
    %2046 = vmatprep.subr.bf16.mxu0 0
    %2047 = vmatpush2.bf16.msra.mxu0 0
    %2048 = vmatprep.subr.bf16.mxu0 0
    %2049 = vmatpush2.bf16.msra.mxu0 0
    %2050 = vmatprep.mubr.bf16.mxu0 0
    %2051 = vmatmul.mubr.bf16.gmra.mxu0 %v2016
    %v2052 = vpop.f32.mrf.mxu0
    %v2053 = vadd.f32 0.0, %v2052
    %v2054 = vpop.f32.mrf.mxu0
    %v2055 = vpop.f32.mrf.mxu0
    %v2056 = vpop.f32.mrf.mxu0
    %2057 = vdwg.mxu0
    %v2058 = vpack.c.bf16 %v2053, %v2053
    %v2060 = vsel %vm522, %v2058, 0
    %2062 = vmatprep.subr.bf16.mxu0 0
    %2063 = vmatpush1.bf16.msra.mxu0 0
    %2064 = vmatprep.subr.bf16.mxu0 0
    %2065 = vmatpush1.bf16.msra.mxu0 0
    %2066 = vmatprep.subr.bf16.mxu0 0
    %2067 = vmatpush1.bf16.msra.mxu0 0
    %2068 = vmatprep.subr.bf16.mxu0 0
    %2069 = vmatpush1.bf16.msra.mxu0 0
    %2070 = vmatprep.subr.bf16.mxu0 0
    %2071 = vmatpush1.bf16.msra.mxu0 0
    %2072 = vmatprep.subr.bf16.mxu0 0
    %2073 = vmatpush1.bf16.msra.mxu0 0
    %2074 = vmatprep.subr.bf16.mxu0 0
    %2075 = vmatpush1.bf16.msra.mxu0 0
    %2076 = vmatprep.subr.bf16.mxu0 0
    %2077 = vmatpush1.bf16.msra.mxu0 %v508
    %2078 = vmatprep.subr.bf16.mxu0 0
    %2079 = vmatpush2.bf16.msra.mxu0 0
    %2080 = vmatprep.subr.bf16.mxu0 0
    %2081 = vmatpush2.bf16.msra.mxu0 0
    %2082 = vmatprep.subr.bf16.mxu0 0
    %2083 = vmatpush2.bf16.msra.mxu0 0
    %2084 = vmatprep.subr.bf16.mxu0 0
    %2085 = vmatpush2.bf16.msra.mxu0 0
    %2086 = vmatprep.subr.bf16.mxu0 0
    %2087 = vmatpush2.bf16.msra.mxu0 0
    %2088 = vmatprep.subr.bf16.mxu0 0
    %2089 = vmatpush2.bf16.msra.mxu0 0
    %2090 = vmatprep.subr.bf16.mxu0 0
    %2091 = vmatpush2.bf16.msra.mxu0 0
    %2092 = vmatprep.subr.bf16.mxu0 0
    %2093 = vmatpush2.bf16.msra.mxu0 0
    %2094 = vmatprep.mubr.bf16.mxu0 0
    %2095 = vmatmul.mubr.bf16.gmra.mxu0 %v2060
    %v2096 = vpop.f32.mrf.mxu0
    %v2097 = vadd.f32 0.0, %v2096
    %v2098 = vpop.f32.mrf.mxu0
    %v2099 = vpop.f32.mrf.mxu0
    %v2100 = vpop.f32.mrf.mxu0
    %2101 = vdwg.mxu0
    %v2102 = vmul.f32 %v185, %v2097
    %s2103 = scalar_lea.vmem %s12, 48
    %v2104 = vld [vmem:[%s2103] sm:$0xf]
    %v2105 = vld [vmem:[%s2103 + $0x4] sm:$0xf]
    %v2108 = vunpack.c.l.b16 %v2104
    %v2109 = vunpack.c.l.b16 %v2105
    %v2110 = vpack.c.b16 %v2109, %v2108
    %2112 = vmatprep.subr.bf16.mxu0 0
    %2113 = vmatpush1.bf16.msra.mxu0 0
    %2114 = vmatprep.subr.bf16.mxu0 0
    %2115 = vmatpush1.bf16.msra.mxu0 0
    %2116 = vmatprep.subr.bf16.mxu0 0
    %2117 = vmatpush1.bf16.msra.mxu0 0
    %2118 = vmatprep.subr.bf16.mxu0 0
    %2119 = vmatpush1.bf16.msra.mxu0 0
    %2120 = vmatprep.subr.bf16.mxu0 0
    %2121 = vmatpush1.bf16.msra.mxu0 0
    %2122 = vmatprep.subr.bf16.mxu0 0
    %2123 = vmatpush1.bf16.msra.mxu0 0
    %2124 = vmatprep.subr.bf16.mxu0 0
    %2125 = vmatpush1.bf16.msra.mxu0 0
    %2126 = vmatprep.subr.bf16.mxu0 0
    %2127 = vmatpush1.bf16.msra.mxu0 %v2110
    %2128 = vmatprep.subr.bf16.mxu0 0
    %2129 = vmatpush2.bf16.msra.mxu0 0
    %2130 = vmatprep.subr.bf16.mxu0 0
    %2131 = vmatpush2.bf16.msra.mxu0 0
    %2132 = vmatprep.subr.bf16.mxu0 0
    %2133 = vmatpush2.bf16.msra.mxu0 0
    %2134 = vmatprep.subr.bf16.mxu0 0
    %2135 = vmatpush2.bf16.msra.mxu0 0
    %2136 = vmatprep.subr.bf16.mxu0 0
    %2137 = vmatpush2.bf16.msra.mxu0 0
    %2138 = vmatprep.subr.bf16.mxu0 0
    %2139 = vmatpush2.bf16.msra.mxu0 0
    %2140 = vmatprep.subr.bf16.mxu0 0
    %2141 = vmatpush2.bf16.msra.mxu0 0
    %2142 = vmatprep.subr.bf16.mxu0 0
    %2143 = vmatpush2.bf16.msra.mxu0 0
    %2144 = vmatprep.mubr.bf16.mxu0 0
    %2145 = vmatmul.mubr.bf16.gmra.mxu0 %v1887
    %v2146 = vpop.f32.mrf.mxu0
    %v2147 = vadd.f32 0.0, %v2146
    %v2148 = vpop.f32.mrf.mxu0
    %v2149 = vpop.f32.mrf.mxu0
    %v2150 = vadd.f32 0.0, %v2149
    %v2151 = vpop.f32.mrf.mxu0
    %2152 = vmatprep.mubr.bf16.mxu0 0
    %2153 = vmatmul.mubr.bf16.gmra.mxu0 %v1890
    %v2154 = vpop.f32.mrf.mxu0
    %v2155 = vadd.f32 0.0, %v2154
    %v2156 = vpop.f32.mrf.mxu0
    %v2157 = vpop.f32.mrf.mxu0
    %v2158 = vpop.f32.mrf.mxu0
    %2159 = vdwg.mxu0
    %v2160 = vsel %vm1317, %v2102, -1e+30
    %v2161 = vsel %vm856, %v2160, -inf
    %2162 = vmax.xlane.f32.xlu0 %v2161
    %v2163 = vpop.xlane.xlu0 %2162
    %v2164 = vsub.f32 %v2160, %v2163
    %v2165 = vmul.f32 %v2164, 1.442695
    %v2166 = vpow.pop %v2165
    %v2167 = vmul.f32 %v2166, %v198
    %v2168 = vsel %vm856, %v2167, 0.0
    %2169 = vadd.xlane.f32.xlu0 %v2168
    %v2170 = vpop.xlane.xlu0 %2169
    %v2171 = vpack.c.bf16 %v2167, %v2167
    %v2172 = vpack.c.bf16 %v2150, %v2147
    %v2173 = vpack.c.bf16 %v2155, %v2155
    %v2175 = vsel %vm856, %v2171, 0
    %v2178 = vsel %vm873, %v2173, 0
    %2180 = vmatprep.subr.bf16.mxu0 0
    %2181 = vmatpush1.bf16.msra.mxu0 0
    %2182 = vmatprep.subr.bf16.mxu0 0
    %2183 = vmatpush1.bf16.msra.mxu0 0
    %2184 = vmatprep.subr.bf16.mxu0 0
    %2185 = vmatpush1.bf16.msra.mxu0 0
    %2186 = vmatprep.subr.bf16.mxu0 0
    %2187 = vmatpush1.bf16.msra.mxu0 0
    %2188 = vmatprep.subr.bf16.mxu0 0
    %2189 = vmatpush1.bf16.msra.mxu0 0
    %2190 = vmatprep.subr.bf16.mxu0 0
    %2191 = vmatpush1.bf16.msra.mxu0 0
    %2192 = vmatprep.subr.bf16.mxu0 0
    %2193 = vmatpush1.bf16.msra.mxu0 %v2178
    %2194 = vmatprep.subr.bf16.mxu0 0
    %2195 = vmatpush1.bf16.msra.mxu0 %v2172
    %2196 = vmatprep.subr.bf16.mxu0 0
    %2197 = vmatpush2.bf16.msra.mxu0 0
    %2198 = vmatprep.subr.bf16.mxu0 0
    %2199 = vmatpush2.bf16.msra.mxu0 0
    %2200 = vmatprep.subr.bf16.mxu0 0
    %2201 = vmatpush2.bf16.msra.mxu0 0
    %2202 = vmatprep.subr.bf16.mxu0 0
    %2203 = vmatpush2.bf16.msra.mxu0 0
    %2204 = vmatprep.subr.bf16.mxu0 0
    %2205 = vmatpush2.bf16.msra.mxu0 0
    %2206 = vmatprep.subr.bf16.mxu0 0
    %2207 = vmatpush2.bf16.msra.mxu0 0
    %2208 = vmatprep.subr.bf16.mxu0 0
    %2209 = vmatpush2.bf16.msra.mxu0 0
    %2210 = vmatprep.subr.bf16.mxu0 0
    %2211 = vmatpush2.bf16.msra.mxu0 0
    %2212 = vmatprep.mubr.bf16.mxu0 0
    %2213 = vmatmul.mubr.bf16.gmra.mxu0 %v2175
    %v2214 = vpop.f32.mrf.mxu0
    %v2215 = vadd.f32 0.0, %v2214
    %v2216 = vpop.f32.mrf.mxu0
    %v2217 = vpop.f32.mrf.mxu0
    %v2218 = vpop.f32.mrf.mxu0
    %2219 = vdwg.mxu0
    %vm2220 = vcmp.gt.f32.partialorder %v2170, 0.0
    %v2221 = vsel %vm2220, %v2170, 1.0
    %v2222 = vrcp.pop %v2221
    %v2223 = vmul.f32 %v2215, %v2222
    %2227 = vrot.lane.b32.xlu0 %v1773, 16
    %v2228 = vpop.permute.xlu0 %2227
    %2229 = vrot.lane.b32.xlu0 %v2003, 16
    %v2230 = vpop.permute.xlu0 %2229
    %2231 = vrot.lane.b32.xlu0 %v2223, 16
    %v2232 = vpop.permute.xlu0 %2231
    %v2236 = vsel %vm522, %v920, %v2228
    %v2237 = vsel %vm522, %v1158, %v2230
    %v2238 = vsel %vm522, %v1381, %v2232
    %v2239 = vmul.f32 %v2236, %v148
    %v2240 = vmul.f32 %v2237, %v149
    %v2241 = vmul.f32 %v2238, %v150
    %v2242 = vmul.f32 %v2236, %v163
    %v2243 = vmul.f32 %v2237, %v164
    %v2244 = vmul.f32 %v2238, %v165
    %v2245 = vmul.f32 %v2236, %v178
    %v2246 = vmul.f32 %v2237, %v179
    %v2247 = vmul.f32 %v2238, %v180
    %2251 = vrot.lane.b32.xlu0 %v2242, 32
    %v2252 = vpop.permute.xlu0 %2251
    %2253 = vrot.lane.b32.xlu0 %v2243, 32
    %v2254 = vpop.permute.xlu0 %2253
    %2255 = vrot.lane.b32.xlu0 %v2244, 32
    %v2256 = vpop.permute.xlu0 %2255
    %2263 = vrot.lane.b32.xlu0 %v2245, 64
    %v2264 = vpop.permute.xlu0 %2263
    %2265 = vrot.lane.b32.xlu0 %v2246, 64
    %v2266 = vpop.permute.xlu0 %2265
    %2267 = vrot.lane.b32.xlu0 %v2247, 64
    %v2268 = vpop.permute.xlu0 %2267
    %vm2272 = vcmask 261120
    %v2273 = vsel %vm2272, %v2239, %v2252
    %v2274 = vsel %vm2272, %v2240, %v2254
    %v2275 = vsel %vm2272, %v2241, %v2256
    %vm2276 = vcmask 523264
    %v2277 = vsel %vm2276, %v2273, %v2264
    %v2278 = vsel %vm2276, %v2274, %v2266
    %v2279 = vsel %vm2276, %v2275, %v2268
    %v2280 = vld [vmem:[%s13] sm:$0xf]
    %v2281 = vld [vmem:[%s13 + $0x4] sm:$0xf]
    %v2282 = vld [vmem:[%s13 + $0x8] sm:$0xf]
    %v2283 = vld [vmem:[%s13 + $0xc] sm:$0xf]
    %v2284 = vld [vmem:[%s13 + $0x10] sm:$0xf]
    %v2285 = vld [vmem:[%s13 + $0x14] sm:$0xf]
    %v2286 = vld [vmem:[%s13 + $0x18] sm:$0xf]
    %v2287 = vld [vmem:[%s13 + $0x1c] sm:$0xf]
    %v2288 = vld [vmem:[%s13 + $0x20] sm:$0xf]
    %v2289 = vld [vmem:[%s13 + $0x24] sm:$0xf]
    %v2290 = vld [vmem:[%s13 + $0x28] sm:$0xf]
    %v2291 = vld [vmem:[%s13 + $0x2c] sm:$0xf]
    %v2292 = vpack.c.bf16 %v2278, %v2277
    %v2293 = vpack.c.bf16 %v2279, %v2279
    %v2306 = vunpack.c.l.b16 %v2280
    %v2307 = vunpack.c.l.b16 %v2281
    %v2308 = vunpack.c.l.b16 %v2282
    %v2309 = vunpack.c.l.b16 %v2283
    %v2310 = vunpack.c.l.b16 %v2284
    %v2311 = vunpack.c.l.b16 %v2285
    %v2312 = vunpack.c.l.b16 %v2286
    %v2313 = vunpack.c.l.b16 %v2287
    %v2314 = vunpack.c.l.b16 %v2288
    %v2315 = vunpack.c.l.b16 %v2289
    %v2316 = vunpack.c.l.b16 %v2290
    %v2317 = vunpack.c.l.b16 %v2291
    %v2318 = vpack.c.b16 %v2307, %v2306
    %v2319 = vpack.c.b16 %v2309, %v2308
    %v2320 = vpack.c.b16 %v2311, %v2310
    %v2321 = vpack.c.b16 %v2313, %v2312
    %v2322 = vpack.c.b16 %v2315, %v2314
    %v2323 = vpack.c.b16 %v2317, %v2316
    %vm2330 = vcmask 785408
    %v2332 = vsel %vm2330, %v2292, 0
    %v2335 = vsel %vm2330, %v2293, 0
    %2337 = vmatprep.subr.bf16.mxu0 0
    %2338 = vmatpush1.bf16.msra.mxu0 0
    %2339 = vmatprep.subr.bf16.mxu0 0
    %2340 = vmatpush1.bf16.msra.mxu0 0
    %2341 = vmatprep.subr.bf16.mxu0 0
    %2342 = vmatpush1.bf16.msra.mxu0 %v2323
    %2343 = vmatprep.subr.bf16.mxu0 0
    %2344 = vmatpush1.bf16.msra.mxu0 %v2322
    %2345 = vmatprep.subr.bf16.mxu0 0
    %2346 = vmatpush1.bf16.msra.mxu0 %v2321
    %2347 = vmatprep.subr.bf16.mxu0 0
    %2348 = vmatpush1.bf16.msra.mxu0 %v2320
    %2349 = vmatprep.subr.bf16.mxu0 0
    %2350 = vmatpush1.bf16.msra.mxu0 %v2319
    %2351 = vmatprep.subr.bf16.mxu0 0
    %2352 = vmatpush1.bf16.msra.mxu0 %v2318
    %2353 = vmatprep.subr.bf16.mxu0 0
    %2354 = vmatpush2.bf16.msra.mxu0 0
    %2355 = vmatprep.subr.bf16.mxu0 0
    %2356 = vmatpush2.bf16.msra.mxu0 0
    %2357 = vmatprep.subr.bf16.mxu0 0
    %2358 = vmatpush2.bf16.msra.mxu0 0
    %2359 = vmatprep.subr.bf16.mxu0 0
    %2360 = vmatpush2.bf16.msra.mxu0 0
    %2361 = vmatprep.subr.bf16.mxu0 0
    %2362 = vmatpush2.bf16.msra.mxu0 0
    %2363 = vmatprep.subr.bf16.mxu0 0
    %2364 = vmatpush2.bf16.msra.mxu0 0
    %2365 = vmatprep.subr.bf16.mxu0 0
    %2366 = vmatpush2.bf16.msra.mxu0 0
    %2367 = vmatprep.subr.bf16.mxu0 0
    %2368 = vmatpush2.bf16.msra.mxu0 0
    %2369 = vmatprep.mubr.bf16.mxu0 0
    %2370 = vmatmul.mubr.bf16.gmra.mxu0 %v2332
    %v2371 = vpop.f32.mrf.mxu0
    %v2372 = vadd.f32 0.0, %v2371
    %v2373 = vpop.f32.mrf.mxu0
    %v2374 = vpop.f32.mrf.mxu0
    %v2375 = vadd.f32 0.0, %v2374
    %v2376 = vpop.f32.mrf.mxu0
    %2377 = vmatprep.mubr.bf16.mxu0 0
    %2378 = vmatmul.mubr.bf16.gmra.mxu0 %v2335
    %v2379 = vpop.f32.mrf.mxu0
    %v2380 = vadd.f32 0.0, %v2379
    %v2381 = vpop.f32.mrf.mxu0
    %v2382 = vpop.f32.mrf.mxu0
    %v2383 = vpop.f32.mrf.mxu0
    %2384 = vdwg.mxu0
    %v2385 = vmul.f32 %v2372, %v2372
    %v2386 = vmul.f32 %v2375, %v2375
    %v2387 = vmul.f32 %v2380, %v2380
    %v2388 = vmul.f32 %v2372, %v2385
    %v2389 = vmul.f32 %v2375, %v2386
    %v2390 = vmul.f32 %v2380, %v2387
    %v2391 = vmul.f32 %v2388, 0.044715
    %v2392 = vmul.f32 %v2389, 0.044715
    %v2393 = vmul.f32 %v2390, 0.044715
    %v2394 = vadd.f32 %v2372, %v2391
    %v2395 = vadd.f32 %v2375, %v2392
    %v2396 = vadd.f32 %v2380, %v2393
    %v2397 = vmul.f32 %v2394, 0.7978846
    %v2398 = vmul.f32 %v2395, 0.7978846
    %v2399 = vmul.f32 %v2396, 0.7978846
    %v2400 = vtanh.pop %v2397
    %v2401 = vtanh.pop %v2398
    %v2402 = vtanh.pop %v2399
    %v2403 = vadd.f32 %v2400, 1.0
    %v2404 = vadd.f32 %v2401, 1.0
    %v2405 = vadd.f32 %v2402, 1.0
    %v2406 = vmul.f32 %v2403, 0.5
    %v2407 = vmul.f32 %v2404, 0.5
    %v2408 = vmul.f32 %v2405, 0.5
    %v2409 = vmul.f32 %v2372, %v2406
    %v2410 = vmul.f32 %v2375, %v2407
    %v2411 = vmul.f32 %v2380, %v2408
    %v2412 = vld [vmem:[%s14] sm:$0xf]
    %v2413 = vld [vmem:[%s14 + $0x4] sm:$0xf]
    %v2414 = vld [vmem:[%s14 + $0x8] sm:$0xf]
    %v2415 = vld [vmem:[%s14 + $0xc] sm:$0xf]
    %v2416 = vld [vmem:[%s14 + $0x10] sm:$0xf]
    %v2417 = vld [vmem:[%s14 + $0x14] sm:$0xf]
    %v2418 = vld [vmem:[%s14 + $0x18] sm:$0xf]
    %v2419 = vld [vmem:[%s14 + $0x1c] sm:$0x3]
    %v2428 = vunpack.c.l.b16 %v2412
    %v2429 = vunpack.c.l.b16 %v2413
    %v2430 = vunpack.c.l.b16 %v2414
    %v2431 = vunpack.c.l.b16 %v2415
    %v2432 = vunpack.c.l.b16 %v2416
    %v2433 = vunpack.c.l.b16 %v2417
    %v2434 = vunpack.c.l.b16 %v2418
    %v2435 = vunpack.c.l.b16 %v2419
    %v2436 = vpack.c.b16 %v2429, %v2428
    %v2437 = vpack.c.b16 %v2431, %v2430
    %v2438 = vpack.c.b16 %v2433, %v2432
    %v2439 = vpack.c.b16 %v2435, %v2434
    %v2444 = vsel %vm423, %v2439, 0
    %2446 = vmatprep.subr.bf16.mxu0 0
    %2447 = vmatpush1.bf16.msra.mxu0 0
    %2448 = vmatprep.subr.bf16.mxu0 0
    %2449 = vmatpush1.bf16.msra.mxu0 0
    %2450 = vmatprep.subr.bf16.mxu0 0
    %2451 = vmatpush1.bf16.msra.mxu0 0
    %2452 = vmatprep.subr.bf16.mxu0 0
    %2453 = vmatpush1.bf16.msra.mxu0 0
    %2454 = vmatprep.subr.bf16.mxu0 0
    %2455 = vmatpush1.bf16.msra.mxu0 %v2444
    %2456 = vmatprep.subr.bf16.mxu0 0
    %2457 = vmatpush1.bf16.msra.mxu0 %v2438
    %2458 = vmatprep.subr.bf16.mxu0 0
    %2459 = vmatpush1.bf16.msra.mxu0 %v2437
    %2460 = vmatprep.subr.bf16.mxu0 0
    %2461 = vmatpush1.bf16.msra.mxu0 %v2436
    %2462 = vmatprep.subr.bf16.mxu0 0
    %2463 = vmatpush2.bf16.msra.mxu0 0
    %2464 = vmatprep.subr.bf16.mxu0 0
    %2465 = vmatpush2.bf16.msra.mxu0 0
    %2466 = vmatprep.subr.bf16.mxu0 0
    %2467 = vmatpush2.bf16.msra.mxu0 0
    %2468 = vmatprep.subr.bf16.mxu0 0
    %2469 = vmatpush2.bf16.msra.mxu0 0
    %2470 = vmatprep.subr.bf16.mxu0 0
    %2471 = vmatpush2.bf16.msra.mxu0 0
    %2472 = vmatprep.subr.bf16.mxu0 0
    %2473 = vmatpush2.bf16.msra.mxu0 0
    %2474 = vmatprep.subr.bf16.mxu0 0
    %2475 = vmatpush2.bf16.msra.mxu0 0
    %2476 = vmatprep.subr.bf16.mxu0 0
    %2477 = vmatpush2.bf16.msra.mxu0 0
    %2478 = vmatprep.mubr.bf16.mxu0 0
    %2479 = vmatmul.mubr.bf16.gmra.mxu0 %v418
    %v2480 = vpop.f32.mrf.mxu0
    %v2481 = vadd.f32 0.0, %v2480
    %v2482 = vpop.f32.mrf.mxu0
    %v2483 = vpop.f32.mrf.mxu0
    %v2484 = vadd.f32 0.0, %v2483
    %v2485 = vpop.f32.mrf.mxu0
    %2486 = vmatprep.mubr.bf16.mxu0 0
    %2487 = vmatmul.mubr.bf16.gmra.mxu0 %v421
    %v2488 = vpop.f32.mrf.mxu0
    %v2489 = vadd.f32 0.0, %v2488
    %v2490 = vpop.f32.mrf.mxu0
    %v2491 = vpop.f32.mrf.mxu0
    %v2492 = vpop.f32.mrf.mxu0
    %2493 = vdwg.mxu0
    %s2494 = sld [smem:[#allocation2]]
    %v2495 = vstv %s2494
    %v2496 = vmul.f32 %v2495, %v148
    %v2497 = vmul.f32 %v2495, %v149
    %v2498 = vmul.f32 %v2495, %v150
    %s2499 = sld [smem:[#allocation2 + $0x1]]
    %v2500 = vstv %s2499
    %v2501 = vmul.f32 %v2500, %v163
    %v2502 = vmul.f32 %v2500, %v164
    %v2503 = vmul.f32 %v2500, %v165
    %v2504 = vadd.f32 %v2496, %v2501
    %v2505 = vadd.f32 %v2497, %v2502
    %v2506 = vadd.f32 %v2498, %v2503
    %s2507 = sld [smem:[#allocation2 + $0x2]]
    %v2508 = vstv %s2507
    %v2509 = vmul.f32 %v2508, %v178
    %v2510 = vmul.f32 %v2508, %v179
    %v2511 = vmul.f32 %v2508, %v180
    %v2512 = vadd.f32 %v2504, %v2509
    %v2513 = vadd.f32 %v2505, %v2510
    %v2514 = vadd.f32 %v2506, %v2511
    %v2515 = vmul.f32 %v2409, %v2512
    %v2516 = vmul.f32 %v2410, %v2513
    %v2517 = vmul.f32 %v2411, %v2514
    %v2518 = vsub.f32 1.0, %v2512
    %v2519 = vsub.f32 1.0, %v2513
    %v2520 = vsub.f32 1.0, %v2514
    %v2521 = vmul.f32 %v2481, %v2518
    %v2522 = vmul.f32 %v2484, %v2519
    %v2523 = vmul.f32 %v2489, %v2520
    %v2524 = vadd.f32 %v2515, %v2521
    %v2525 = vadd.f32 %v2516, %v2522
    %v2526 = vadd.f32 %v2517, %v2523
    %v2527 = vmul.f32 %v2524, %v148
    %v2528 = vmul.f32 %v2525, %v149
    %v2529 = vmul.f32 %v2526, %v150
    %v2530 = vmul.f32 %v2524, %v163
    %v2531 = vmul.f32 %v2525, %v164
    %v2532 = vmul.f32 %v2526, %v165
    %v2533 = vmul.f32 %v2524, %v178
    %v2534 = vmul.f32 %v2525, %v179
    %v2535 = vmul.f32 %v2526, %v180
    %2539 = vrot.lane.b32.xlu0 %v2530, 32
    %v2540 = vpop.permute.xlu0 %2539
    %2541 = vrot.lane.b32.xlu0 %v2531, 32
    %v2542 = vpop.permute.xlu0 %2541
    %2543 = vrot.lane.b32.xlu0 %v2532, 32
    %v2544 = vpop.permute.xlu0 %2543
    %2551 = vrot.lane.b32.xlu0 %v2533, 64
    %v2552 = vpop.permute.xlu0 %2551
    %2553 = vrot.lane.b32.xlu0 %v2534, 64
    %v2554 = vpop.permute.xlu0 %2553
    %2555 = vrot.lane.b32.xlu0 %v2535, 64
    %v2556 = vpop.permute.xlu0 %2555
    %v2560 = vsel %vm2272, %v2527, %v2540
    %v2561 = vsel %vm2272, %v2528, %v2542
    %v2562 = vsel %vm2272, %v2529, %v2544
    %v2563 = vsel %vm2276, %v2560, %v2552
    %v2564 = vsel %vm2276, %v2561, %v2554
    %v2565 = vsel %vm2276, %v2562, %v2556
    %v2566 = vld [vmem:[%s15] sm:$0xf]
    %v2567 = vld [vmem:[%s15 + $0x4] sm:$0xf]
    %v2568 = vld [vmem:[%s15 + $0x8] sm:$0xf]
    %v2569 = vld [vmem:[%s15 + $0xc] sm:$0xf]
    %v2570 = vld [vmem:[%s15 + $0x10] sm:$0xf]
    %v2571 = vld [vmem:[%s15 + $0x14] sm:$0xf]
    %v2572 = vld [vmem:[%s15 + $0x18] sm:$0xf]
    %v2573 = vld [vmem:[%s15 + $0x1c] sm:$0xf]
    %v2574 = vld [vmem:[%s15 + $0x20] sm:$0xf]
    %v2575 = vld [vmem:[%s15 + $0x24] sm:$0xf]
    %v2576 = vld [vmem:[%s15 + $0x28] sm:$0xf]
    %v2577 = vld [vmem:[%s15 + $0x2c] sm:$0xf]
    %v2578 = vpack.c.bf16 %v2564, %v2563
    %v2579 = vpack.c.bf16 %v2565, %v2565
    %v2592 = vunpack.c.l.b16 %v2566
    %v2593 = vunpack.c.l.b16 %v2567
    %v2594 = vunpack.c.l.b16 %v2568
    %v2595 = vunpack.c.l.b16 %v2569
    %v2596 = vunpack.c.l.b16 %v2570
    %v2597 = vunpack.c.l.b16 %v2571
    %v2598 = vunpack.c.l.b16 %v2572
    %v2599 = vunpack.c.l.b16 %v2573
    %v2600 = vunpack.c.l.b16 %v2574
    %v2601 = vunpack.c.l.b16 %v2575
    %v2602 = vunpack.c.l.b16 %v2576
    %v2603 = vunpack.c.l.b16 %v2577
    %v2604 = vpack.c.b16 %v2593, %v2592
    %v2605 = vpack.c.b16 %v2595, %v2594
    %v2606 = vpack.c.b16 %v2597, %v2596
    %v2607 = vpack.c.b16 %v2599, %v2598
    %v2608 = vpack.c.b16 %v2601, %v2600
    %v2609 = vpack.c.b16 %v2603, %v2602
    %v2617 = vsel %vm2330, %v2578, 0
    %v2620 = vsel %vm2330, %v2579, 0
    %2622 = vmatprep.subr.bf16.mxu0 0
    %2623 = vmatpush1.bf16.msra.mxu0 0
    %2624 = vmatprep.subr.bf16.mxu0 0
    %2625 = vmatpush1.bf16.msra.mxu0 0
    %2626 = vmatprep.subr.bf16.mxu0 0
    %2627 = vmatpush1.bf16.msra.mxu0 %v2609
    %2628 = vmatprep.subr.bf16.mxu0 0
    %2629 = vmatpush1.bf16.msra.mxu0 %v2608
    %2630 = vmatprep.subr.bf16.mxu0 0
    %2631 = vmatpush1.bf16.msra.mxu0 %v2607
    %2632 = vmatprep.subr.bf16.mxu0 0
    %2633 = vmatpush1.bf16.msra.mxu0 %v2606
    %2634 = vmatprep.subr.bf16.mxu0 0
    %2635 = vmatpush1.bf16.msra.mxu0 %v2605
    %2636 = vmatprep.subr.bf16.mxu0 0
    %2637 = vmatpush1.bf16.msra.mxu0 %v2604
    %2638 = vmatprep.subr.bf16.mxu0 0
    %2639 = vmatpush2.bf16.msra.mxu0 0
    %2640 = vmatprep.subr.bf16.mxu0 0
    %2641 = vmatpush2.bf16.msra.mxu0 0
    %2642 = vmatprep.subr.bf16.mxu0 0
    %2643 = vmatpush2.bf16.msra.mxu0 0
    %2644 = vmatprep.subr.bf16.mxu0 0
    %2645 = vmatpush2.bf16.msra.mxu0 0
    %2646 = vmatprep.subr.bf16.mxu0 0
    %2647 = vmatpush2.bf16.msra.mxu0 0
    %2648 = vmatprep.subr.bf16.mxu0 0
    %2649 = vmatpush2.bf16.msra.mxu0 0
    %2650 = vmatprep.subr.bf16.mxu0 0
    %2651 = vmatpush2.bf16.msra.mxu0 0
    %2652 = vmatprep.subr.bf16.mxu0 0
    %2653 = vmatpush2.bf16.msra.mxu0 0
    %2654 = vmatprep.mubr.bf16.mxu0 0
    %2655 = vmatmul.mubr.bf16.gmra.mxu0 %v2617
    %v2656 = vpop.f32.mrf.mxu0
    %v2657 = vadd.f32 0.0, %v2656
    %v2658 = vpop.f32.mrf.mxu0
    %v2659 = vpop.f32.mrf.mxu0
    %v2660 = vadd.f32 0.0, %v2659
    %v2661 = vpop.f32.mrf.mxu0
    %2662 = vmatprep.mubr.bf16.mxu0 0
    %2663 = vmatmul.mubr.bf16.gmra.mxu0 %v2620
    %v2664 = vpop.f32.mrf.mxu0
    %v2665 = vadd.f32 0.0, %v2664
    %v2666 = vpop.f32.mrf.mxu0
    %v2667 = vpop.f32.mrf.mxu0
    %v2668 = vpop.f32.mrf.mxu0
    %2669 = vdwg.mxu0
    %2670 = vxpose.xlu0.b32.start [1/16] %v2657, 128
    %2671 = vxpose.xlu0.b32.cont [2/16] %v2660, 128
    %2672 = vxpose.xlu0.b32.cont [3/16] %v2665, 128
    %2673 = vxpose.xlu0.b32.cont [4/16] 0.0, 128
    %2674 = vxpose.xlu0.b32.cont [5/16] 0.0, 128
    %2675 = vxpose.xlu0.b32.cont [6/16] 0.0, 128
    %2676 = vxpose.xlu0.b32.cont [7/16] 0.0, 128
    %2677 = vxpose.xlu0.b32.cont [8/16] 0.0, 128
    %2678 = vxpose.xlu0.b32.cont [9/16] 0.0, 128
    %2679 = vxpose.xlu0.b32.cont [10/16] 0.0, 128
    %2680 = vxpose.xlu0.b32.cont [11/16] 0.0, 128
    %2681 = vxpose.xlu0.b32.cont [12/16] 0.0, 128
    %2682 = vxpose.xlu0.b32.cont [13/16] 0.0, 128
    %2683 = vxpose.xlu0.b32.cont [14/16] 0.0, 128
    %2684 = vxpose.xlu0.b32.cont [15/16] 0.0, 128
    %2685 = vxpose.xlu0.b32.end [16/16] 0.0, 128
    %v2686 = vpop.trf.xlu0
    %v2687 = vpop.trf.xlu0
    %v2688 = vpop.trf.xlu0
    %v2689 = vpop.trf.xlu0
    %v2690 = vpop.trf.xlu0
    %v2691 = vpop.trf.xlu0
    %v2692 = vpop.trf.xlu0
    %v2693 = vpop.trf.xlu0
    %v2694 = vpop.trf.xlu0
    %v2695 = vpop.trf.xlu0
    %v2696 = vpop.trf.xlu0
    %v2697 = vpop.trf.xlu0
    %v2698 = vpop.trf.xlu0
    %v2699 = vpop.trf.xlu0
    %v2700 = vpop.trf.xlu0
    %v2701 = vpop.trf.xlu0
    %v2702 = vpack.c.bf16 %v2686, %v2686
    %s2703 = scalar_lea.vmem [#allocation8], 2
    %v2704 = vld [vmem:[%s2703] sm:$0x3]
    %v2705 = vpack.c.bf16 %v2657, %v2657
    %2707 = vrot.lane.b32.xlu0 %v2705, 124
    %v2708 = vpop.permute.xlu0 %2707
    %vm2709 = vcmask 31744
    %v2711 = vsel %vm2709, %v2708, 0
    %vm2713 = vcmask 1041408
    %v2715 = vsel %vm2713, %v2704, 0
    %2717 = vmatprep.subr.bf16.mxu0 0
    %2718 = vmatpush1.bf16.msra.mxu0 0
    %2719 = vmatprep.subr.bf16.mxu0 0
    %2720 = vmatpush1.bf16.msra.mxu0 0
    %2721 = vmatprep.subr.bf16.mxu0 0
    %2722 = vmatpush1.bf16.msra.mxu0 0
    %2723 = vmatprep.subr.bf16.mxu0 0
    %2724 = vmatpush1.bf16.msra.mxu0 0
    %2725 = vmatprep.subr.bf16.mxu0 0
    %2726 = vmatpush1.bf16.msra.mxu0 0
    %2727 = vmatprep.subr.bf16.mxu0 0
    %2728 = vmatpush1.bf16.msra.mxu0 0
    %2729 = vmatprep.subr.bf16.mxu0 0
    %2730 = vmatpush1.bf16.msra.mxu0 0
    %2731 = vmatprep.subr.bf16.mxu0 0
    %2732 = vmatpush1.bf16.msra.mxu0 %v2715
    %2733 = vmatprep.subr.bf16.mxu0 0
    %2734 = vmatpush2.bf16.msra.mxu0 0
    %2735 = vmatprep.subr.bf16.mxu0 0
    %2736 = vmatpush2.bf16.msra.mxu0 0
    %2737 = vmatprep.subr.bf16.mxu0 0
    %2738 = vmatpush2.bf16.msra.mxu0 0
    %2739 = vmatprep.subr.bf16.mxu0 0
    %2740 = vmatpush2.bf16.msra.mxu0 0
    %2741 = vmatprep.subr.bf16.mxu0 0
    %2742 = vmatpush2.bf16.msra.mxu0 0
    %2743 = vmatprep.subr.bf16.mxu0 0
    %2744 = vmatpush2.bf16.msra.mxu0 0
    %2745 = vmatprep.subr.bf16.mxu0 0
    %2746 = vmatpush2.bf16.msra.mxu0 0
    %2747 = vmatprep.subr.bf16.mxu0 0
    %2748 = vmatpush2.bf16.msra.mxu0 0
    %2749 = vmatprep.mubr.bf16.mxu0 0
    %2750 = vmatmul.mubr.bf16.gmra.mxu0 %v2711
    %v2751 = vpop.f32.mrf.mxu0
    %v2752 = vadd.f32 0.0, %v2751
    %v2753 = vpop.f32.mrf.mxu0
    %v2754 = vpop.f32.mrf.mxu0
    %v2755 = vpop.f32.mrf.mxu0
    %2756 = vdwg.mxu0
    %v2757 = vpack.c.bf16 %v2752, %v2752
    %v2759 = vsel %vm2709, %v2757, 0
    %v2762 = vsel %vm2713, %v2702, 0
    %2764 = vmatprep.subr.bf16.mxu0 0
    %2765 = vmatpush1.bf16.msra.mxu0 0
    %2766 = vmatprep.subr.bf16.mxu0 0
    %2767 = vmatpush1.bf16.msra.mxu0 0
    %2768 = vmatprep.subr.bf16.mxu0 0
    %2769 = vmatpush1.bf16.msra.mxu0 0
    %2770 = vmatprep.subr.bf16.mxu0 0
    %2771 = vmatpush1.bf16.msra.mxu0 0
    %2772 = vmatprep.subr.bf16.mxu0 0
    %2773 = vmatpush1.bf16.msra.mxu0 0
    %2774 = vmatprep.subr.bf16.mxu0 0
    %2775 = vmatpush1.bf16.msra.mxu0 0
    %2776 = vmatprep.subr.bf16.mxu0 0
    %2777 = vmatpush1.bf16.msra.mxu0 0
    %2778 = vmatprep.subr.bf16.mxu0 0
    %2779 = vmatpush1.bf16.msra.mxu0 %v2762
    %2780 = vmatprep.subr.bf16.mxu0 0
    %2781 = vmatpush2.bf16.msra.mxu0 0
    %2782 = vmatprep.subr.bf16.mxu0 0
    %2783 = vmatpush2.bf16.msra.mxu0 0
    %2784 = vmatprep.subr.bf16.mxu0 0
    %2785 = vmatpush2.bf16.msra.mxu0 0
    %2786 = vmatprep.subr.bf16.mxu0 0
    %2787 = vmatpush2.bf16.msra.mxu0 0
    %2788 = vmatprep.subr.bf16.mxu0 0
    %2789 = vmatpush2.bf16.msra.mxu0 0
    %2790 = vmatprep.subr.bf16.mxu0 0
    %2791 = vmatpush2.bf16.msra.mxu0 0
    %2792 = vmatprep.subr.bf16.mxu0 0
    %2793 = vmatpush2.bf16.msra.mxu0 0
    %2794 = vmatprep.subr.bf16.mxu0 0
    %2795 = vmatpush2.bf16.msra.mxu0 0
    %2796 = vmatprep.mubr.bf16.mxu0 0
    %2797 = vmatmul.mubr.bf16.gmra.mxu0 %v2759
    %v2798 = vpop.f32.mrf.mxu0
    %v2799 = vadd.f32 0.0, %v2798
    %v2800 = vpop.f32.mrf.mxu0
    %v2801 = vpop.f32.mrf.mxu0
    %v2802 = vpop.f32.mrf.mxu0
    %2803 = vdwg.mxu0
    %v2804 = vmul.f32 %v190, %v2799
    %v2805 = vmul.f32 %v2657, %v163
    %v2806 = vmul.f32 %v2660, %v164
    %v2807 = vmul.f32 %v2665, %v165
    %s2808 = scalar_lea.vmem [#allocation9], 2
    %v2809 = vld [vmem:[%s2808] sm:$0x3]
    %v2810 = vpack.c.bf16 %v2806, %v2805
    %v2811 = vpack.c.bf16 %v2807, %v2807
    %s2812 = scalar_lea.vmem [#allocation8], 6
    %v2813 = vld [vmem:[%s2812] sm:$0x3]
    %v2815 = vsel %vm2713, %v2813, 0
    %2817 = vmatprep.subr.bf16.mxu0 0
    %2818 = vmatpush1.bf16.msra.mxu0 0
    %2819 = vmatprep.subr.bf16.mxu0 0
    %2820 = vmatpush1.bf16.msra.mxu0 0
    %2821 = vmatprep.subr.bf16.mxu0 0
    %2822 = vmatpush1.bf16.msra.mxu0 0
    %2823 = vmatprep.subr.bf16.mxu0 0
    %2824 = vmatpush1.bf16.msra.mxu0 0
    %2825 = vmatprep.subr.bf16.mxu0 0
    %2826 = vmatpush1.bf16.msra.mxu0 0
    %2827 = vmatprep.subr.bf16.mxu0 0
    %2828 = vmatpush1.bf16.msra.mxu0 0
    %2829 = vmatprep.subr.bf16.mxu0 0
    %2830 = vmatpush1.bf16.msra.mxu0 0
    %2831 = vmatprep.subr.bf16.mxu0 0
    %2832 = vmatpush1.bf16.msra.mxu0 %v2815
    %2833 = vmatprep.subr.bf16.mxu0 0
    %2834 = vmatpush2.bf16.msra.mxu0 0
    %2835 = vmatprep.subr.bf16.mxu0 0
    %2836 = vmatpush2.bf16.msra.mxu0 0
    %2837 = vmatprep.subr.bf16.mxu0 0
    %2838 = vmatpush2.bf16.msra.mxu0 0
    %2839 = vmatprep.subr.bf16.mxu0 0
    %2840 = vmatpush2.bf16.msra.mxu0 0
    %2841 = vmatprep.subr.bf16.mxu0 0
    %2842 = vmatpush2.bf16.msra.mxu0 0
    %2843 = vmatprep.subr.bf16.mxu0 0
    %2844 = vmatpush2.bf16.msra.mxu0 0
    %2845 = vmatprep.subr.bf16.mxu0 0
    %2846 = vmatpush2.bf16.msra.mxu0 0
    %2847 = vmatprep.subr.bf16.mxu0 0
    %2848 = vmatpush2.bf16.msra.mxu0 0
    %2849 = vmatprep.mubr.bf16.mxu0 0
    %2850 = vmatmul.mubr.bf16.gmra.mxu0 %v2711
    %v2851 = vpop.f32.mrf.mxu0
    %v2852 = vadd.f32 0.0, %v2851
    %v2853 = vpop.f32.mrf.mxu0
    %v2854 = vpop.f32.mrf.mxu0
    %v2855 = vpop.f32.mrf.mxu0
    %2856 = vdwg.mxu0
    %v2857 = vpack.c.bf16 %v2852, %v2852
    %v2859 = vsel %vm2709, %v2857, 0
    %2861 = vmatprep.subr.bf16.mxu0 0
    %2862 = vmatpush1.bf16.msra.mxu0 0
    %2863 = vmatprep.subr.bf16.mxu0 0
    %2864 = vmatpush1.bf16.msra.mxu0 0
    %2865 = vmatprep.subr.bf16.mxu0 0
    %2866 = vmatpush1.bf16.msra.mxu0 0
    %2867 = vmatprep.subr.bf16.mxu0 0
    %2868 = vmatpush1.bf16.msra.mxu0 0
    %2869 = vmatprep.subr.bf16.mxu0 0
    %2870 = vmatpush1.bf16.msra.mxu0 0
    %2871 = vmatprep.subr.bf16.mxu0 0
    %2872 = vmatpush1.bf16.msra.mxu0 0
    %2873 = vmatprep.subr.bf16.mxu0 0
    %2874 = vmatpush1.bf16.msra.mxu0 0
    %2875 = vmatprep.subr.bf16.mxu0 0
    %2876 = vmatpush1.bf16.msra.mxu0 %v2762
    %2877 = vmatprep.subr.bf16.mxu0 0
    %2878 = vmatpush2.bf16.msra.mxu0 0
    %2879 = vmatprep.subr.bf16.mxu0 0
    %2880 = vmatpush2.bf16.msra.mxu0 0
    %2881 = vmatprep.subr.bf16.mxu0 0
    %2882 = vmatpush2.bf16.msra.mxu0 0
    %2883 = vmatprep.subr.bf16.mxu0 0
    %2884 = vmatpush2.bf16.msra.mxu0 0
    %2885 = vmatprep.subr.bf16.mxu0 0
    %2886 = vmatpush2.bf16.msra.mxu0 0
    %2887 = vmatprep.subr.bf16.mxu0 0
    %2888 = vmatpush2.bf16.msra.mxu0 0
    %2889 = vmatprep.subr.bf16.mxu0 0
    %2890 = vmatpush2.bf16.msra.mxu0 0
    %2891 = vmatprep.subr.bf16.mxu0 0
    %2892 = vmatpush2.bf16.msra.mxu0 0
    %2893 = vmatprep.mubr.bf16.mxu0 0
    %2894 = vmatmul.mubr.bf16.gmra.mxu0 %v2859
    %v2895 = vpop.f32.mrf.mxu0
    %v2896 = vadd.f32 0.0, %v2895
    %v2897 = vpop.f32.mrf.mxu0
    %v2898 = vpop.f32.mrf.mxu0
    %v2899 = vpop.f32.mrf.mxu0
    %2900 = vdwg.mxu0
    %v2901 = vmul.f32 %v195, %v2896
    %v2902 = vadd.f32 %v2804, %v2901
    %v2903 = vmul.f32 %v2657, %v178
    %v2904 = vmul.f32 %v2660, %v179
    %v2905 = vmul.f32 %v2665, %v180
    %s2906 = scalar_lea.vmem [#allocation9], 6
    %v2907 = vld [vmem:[%s2906] sm:$0x3]
    %v2908 = vpack.c.bf16 %v2904, %v2903
    %v2909 = vpack.c.bf16 %v2905, %v2905
    %2912 = vrot.lane.b32.xlu0 %v2908, 120
    %v2913 = vpop.permute.xlu0 %2912
    %2914 = vrot.lane.b32.xlu0 %v2909, 120
    %v2915 = vpop.permute.xlu0 %2914
    %v2917 = vsel %vm2709, %v2913, 0
    %v2920 = vsel %vm2709, %v2915, 0
    %v2923 = vsel %vm2713, %v2907, 0
    %2925 = vmatprep.subr.bf16.mxu0 0
    %2926 = vmatpush1.bf16.msra.mxu0 0
    %2927 = vmatprep.subr.bf16.mxu0 0
    %2928 = vmatpush1.bf16.msra.mxu0 0
    %2929 = vmatprep.subr.bf16.mxu0 0
    %2930 = vmatpush1.bf16.msra.mxu0 0
    %2931 = vmatprep.subr.bf16.mxu0 0
    %2932 = vmatpush1.bf16.msra.mxu0 0
    %2933 = vmatprep.subr.bf16.mxu0 0
    %2934 = vmatpush1.bf16.msra.mxu0 0
    %2935 = vmatprep.subr.bf16.mxu0 0
    %2936 = vmatpush1.bf16.msra.mxu0 0
    %2937 = vmatprep.subr.bf16.mxu0 0
    %2938 = vmatpush1.bf16.msra.mxu0 0
    %2939 = vmatprep.subr.bf16.mxu0 0
    %2940 = vmatpush1.bf16.msra.mxu0 %v2923
    %2941 = vmatprep.subr.bf16.mxu0 0
    %2942 = vmatpush2.bf16.msra.mxu0 0
    %2943 = vmatprep.subr.bf16.mxu0 0
    %2944 = vmatpush2.bf16.msra.mxu0 0
    %2945 = vmatprep.subr.bf16.mxu0 0
    %2946 = vmatpush2.bf16.msra.mxu0 0
    %2947 = vmatprep.subr.bf16.mxu0 0
    %2948 = vmatpush2.bf16.msra.mxu0 0
    %2949 = vmatprep.subr.bf16.mxu0 0
    %2950 = vmatpush2.bf16.msra.mxu0 0
    %2951 = vmatprep.subr.bf16.mxu0 0
    %2952 = vmatpush2.bf16.msra.mxu0 0
    %2953 = vmatprep.subr.bf16.mxu0 0
    %2954 = vmatpush2.bf16.msra.mxu0 0
    %2955 = vmatprep.subr.bf16.mxu0 0
    %2956 = vmatpush2.bf16.msra.mxu0 0
    %2957 = vmatprep.mubr.bf16.mxu0 0
    %2958 = vmatmul.mubr.bf16.gmra.mxu0 %v2917
    %v2959 = vpop.f32.mrf.mxu0
    %v2960 = vadd.f32 0.0, %v2959
    %v2961 = vpop.f32.mrf.mxu0
    %v2962 = vpop.f32.mrf.mxu0
    %v2963 = vadd.f32 0.0, %v2962
    %v2964 = vpop.f32.mrf.mxu0
    %2965 = vmatprep.mubr.bf16.mxu0 0
    %2966 = vmatmul.mubr.bf16.gmra.mxu0 %v2920
    %v2967 = vpop.f32.mrf.mxu0
    %v2968 = vadd.f32 0.0, %v2967
    %v2969 = vpop.f32.mrf.mxu0
    %v2970 = vpop.f32.mrf.mxu0
    %v2971 = vpop.f32.mrf.mxu0
    %2972 = vdwg.mxu0
    %2975 = vrot.lane.b32.xlu0 %v2810, 120
    %v2976 = vpop.permute.xlu0 %2975
    %2977 = vrot.lane.b32.xlu0 %v2811, 120
    %v2978 = vpop.permute.xlu0 %2977
    %v2980 = vsel %vm2709, %v2976, 0
    %v2983 = vsel %vm2709, %v2978, 0
    %v2986 = vsel %vm2713, %v2809, 0
    %2988 = vmatprep.subr.bf16.mxu0 0
    %2989 = vmatpush1.bf16.msra.mxu0 0
    %2990 = vmatprep.subr.bf16.mxu0 0
    %2991 = vmatpush1.bf16.msra.mxu0 0
    %2992 = vmatprep.subr.bf16.mxu0 0
    %2993 = vmatpush1.bf16.msra.mxu0 0
    %2994 = vmatprep.subr.bf16.mxu0 0
    %2995 = vmatpush1.bf16.msra.mxu0 0
    %2996 = vmatprep.subr.bf16.mxu0 0
    %2997 = vmatpush1.bf16.msra.mxu0 0
    %2998 = vmatprep.subr.bf16.mxu0 0
    %2999 = vmatpush1.bf16.msra.mxu0 0
    %3000 = vmatprep.subr.bf16.mxu0 0
    %3001 = vmatpush1.bf16.msra.mxu0 0
    %3002 = vmatprep.subr.bf16.mxu0 0
    %3003 = vmatpush1.bf16.msra.mxu0 %v2986
    %3004 = vmatprep.subr.bf16.mxu0 0
    %3005 = vmatpush2.bf16.msra.mxu0 0
    %3006 = vmatprep.subr.bf16.mxu0 0
    %3007 = vmatpush2.bf16.msra.mxu0 0
    %3008 = vmatprep.subr.bf16.mxu0 0
    %3009 = vmatpush2.bf16.msra.mxu0 0
    %3010 = vmatprep.subr.bf16.mxu0 0
    %3011 = vmatpush2.bf16.msra.mxu0 0
    %3012 = vmatprep.subr.bf16.mxu0 0
    %3013 = vmatpush2.bf16.msra.mxu0 0
    %3014 = vmatprep.subr.bf16.mxu0 0
    %3015 = vmatpush2.bf16.msra.mxu0 0
    %3016 = vmatprep.subr.bf16.mxu0 0
    %3017 = vmatpush2.bf16.msra.mxu0 0
    %3018 = vmatprep.subr.bf16.mxu0 0
    %3019 = vmatpush2.bf16.msra.mxu0 0
    %3020 = vmatprep.mubr.bf16.mxu0 0
    %3021 = vmatmul.mubr.bf16.gmra.mxu0 %v2980
    %v3022 = vpop.f32.mrf.mxu0
    %v3023 = vadd.f32 %v2960, %v3022
    %v3024 = vpop.f32.mrf.mxu0
    %v3025 = vpop.f32.mrf.mxu0
    %v3026 = vadd.f32 %v2963, %v3025
    %v3027 = vpop.f32.mrf.mxu0
    %3028 = vmatprep.mubr.bf16.mxu0 0
    %3029 = vmatmul.mubr.bf16.gmra.mxu0 %v2983
    %v3030 = vpop.f32.mrf.mxu0
    %v3031 = vadd.f32 %v2968, %v3030
    %v3032 = vpop.f32.mrf.mxu0
    %v3033 = vpop.f32.mrf.mxu0
    %v3034 = vpop.f32.mrf.mxu0
    %3035 = vdwg.mxu0
    %v3036 = vsel %vm854, %v2902, -1e+30
    %v3037 = vsel %vm856, %v3036, -inf
    %3038 = vmax.xlane.f32.xlu0 %v3037
    %v3039 = vpop.xlane.xlu0 %3038
    %v3040 = vsub.f32 %v3036, %v3039
    %v3041 = vmul.f32 %v3040, 1.442695
    %v3042 = vpow.pop %v3041
    %v3043 = vmul.f32 %v3042, %v196
    %v3044 = vsel %vm856, %v3043, 0.0
    %3045 = vadd.xlane.f32.xlu0 %v3044
    %v3046 = vpop.xlane.xlu0 %3045
    %v3047 = vpack.c.bf16 %v3043, %v3043
    %v3048 = vpack.c.bf16 %v3026, %v3023
    %v3049 = vpack.c.bf16 %v3031, %v3031
    %v3051 = vsel %vm856, %v3047, 0
    %v3054 = vsel %vm873, %v3049, 0
    %3056 = vmatprep.subr.bf16.mxu0 0
    %3057 = vmatpush1.bf16.msra.mxu0 0
    %3058 = vmatprep.subr.bf16.mxu0 0
    %3059 = vmatpush1.bf16.msra.mxu0 0
    %3060 = vmatprep.subr.bf16.mxu0 0
    %3061 = vmatpush1.bf16.msra.mxu0 0
    %3062 = vmatprep.subr.bf16.mxu0 0
    %3063 = vmatpush1.bf16.msra.mxu0 0
    %3064 = vmatprep.subr.bf16.mxu0 0
    %3065 = vmatpush1.bf16.msra.mxu0 0
    %3066 = vmatprep.subr.bf16.mxu0 0
    %3067 = vmatpush1.bf16.msra.mxu0 0
    %3068 = vmatprep.subr.bf16.mxu0 0
    %3069 = vmatpush1.bf16.msra.mxu0 %v3054
    %3070 = vmatprep.subr.bf16.mxu0 0
    %3071 = vmatpush1.bf16.msra.mxu0 %v3048
    %3072 = vmatprep.subr.bf16.mxu0 0
    %3073 = vmatpush2.bf16.msra.mxu0 0
    %3074 = vmatprep.subr.bf16.mxu0 0
    %3075 = vmatpush2.bf16.msra.mxu0 0
    %3076 = vmatprep.subr.bf16.mxu0 0
    %3077 = vmatpush2.bf16.msra.mxu0 0
    %3078 = vmatprep.subr.bf16.mxu0 0
    %3079 = vmatpush2.bf16.msra.mxu0 0
    %3080 = vmatprep.subr.bf16.mxu0 0
    %3081 = vmatpush2.bf16.msra.mxu0 0
    %3082 = vmatprep.subr.bf16.mxu0 0
    %3083 = vmatpush2.bf16.msra.mxu0 0
    %3084 = vmatprep.subr.bf16.mxu0 0
    %3085 = vmatpush2.bf16.msra.mxu0 0
    %3086 = vmatprep.subr.bf16.mxu0 0
    %3087 = vmatpush2.bf16.msra.mxu0 0
    %3088 = vmatprep.mubr.bf16.mxu0 0
    %3089 = vmatmul.mubr.bf16.gmra.mxu0 %v3051
    %v3090 = vpop.f32.mrf.mxu0
    %v3091 = vadd.f32 0.0, %v3090
    %v3092 = vpop.f32.mrf.mxu0
    %v3093 = vpop.f32.mrf.mxu0
    %v3094 = vpop.f32.mrf.mxu0
    %3095 = vdwg.mxu0
    %vm3096 = vcmp.gt.f32.partialorder %v3046, 0.0
    %v3097 = vsel %vm3096, %v3046, 1.0
    %v3098 = vrcp.pop %v3097
    %v3099 = vmul.f32 %v3091, %v3098
    %v3100 = vld [vmem:[#allocation8] sm:$0x3]
    %v3101 = vpack.c.bf16 %v2660, %v2660
    %3103 = vrot.lane.b32.xlu0 %v3101, 124
    %v3104 = vpop.permute.xlu0 %3103
    %v3106 = vsel %vm2709, %v3104, 0
    %v3109 = vsel %vm2713, %v3100, 0
    %3111 = vmatprep.subr.bf16.mxu0 0
    %3112 = vmatpush1.bf16.msra.mxu0 0
    %3113 = vmatprep.subr.bf16.mxu0 0
    %3114 = vmatpush1.bf16.msra.mxu0 0
    %3115 = vmatprep.subr.bf16.mxu0 0
    %3116 = vmatpush1.bf16.msra.mxu0 0
    %3117 = vmatprep.subr.bf16.mxu0 0
    %3118 = vmatpush1.bf16.msra.mxu0 0
    %3119 = vmatprep.subr.bf16.mxu0 0
    %3120 = vmatpush1.bf16.msra.mxu0 0
    %3121 = vmatprep.subr.bf16.mxu0 0
    %3122 = vmatpush1.bf16.msra.mxu0 0
    %3123 = vmatprep.subr.bf16.mxu0 0
    %3124 = vmatpush1.bf16.msra.mxu0 0
    %3125 = vmatprep.subr.bf16.mxu0 0
    %3126 = vmatpush1.bf16.msra.mxu0 %v3109
    %3127 = vmatprep.subr.bf16.mxu0 0
    %3128 = vmatpush2.bf16.msra.mxu0 0
    %3129 = vmatprep.subr.bf16.mxu0 0
    %3130 = vmatpush2.bf16.msra.mxu0 0
    %3131 = vmatprep.subr.bf16.mxu0 0
    %3132 = vmatpush2.bf16.msra.mxu0 0
    %3133 = vmatprep.subr.bf16.mxu0 0
    %3134 = vmatpush2.bf16.msra.mxu0 0
    %3135 = vmatprep.subr.bf16.mxu0 0
    %3136 = vmatpush2.bf16.msra.mxu0 0
    %3137 = vmatprep.subr.bf16.mxu0 0
    %3138 = vmatpush2.bf16.msra.mxu0 0
    %3139 = vmatprep.subr.bf16.mxu0 0
    %3140 = vmatpush2.bf16.msra.mxu0 0
    %3141 = vmatprep.subr.bf16.mxu0 0
    %3142 = vmatpush2.bf16.msra.mxu0 0
    %3143 = vmatprep.mubr.bf16.mxu0 0
    %3144 = vmatmul.mubr.bf16.gmra.mxu0 %v3106
    %v3145 = vpop.f32.mrf.mxu0
    %v3146 = vadd.f32 0.0, %v3145
    %v3147 = vpop.f32.mrf.mxu0
    %v3148 = vpop.f32.mrf.mxu0
    %v3149 = vpop.f32.mrf.mxu0
    %3150 = vdwg.mxu0
    %v3151 = vpack.c.bf16 %v3146, %v3146
    %v3153 = vsel %vm2709, %v3151, 0
    %3155 = vmatprep.subr.bf16.mxu0 0
    %3156 = vmatpush1.bf16.msra.mxu0 0
    %3157 = vmatprep.subr.bf16.mxu0 0
    %3158 = vmatpush1.bf16.msra.mxu0 0
    %3159 = vmatprep.subr.bf16.mxu0 0
    %3160 = vmatpush1.bf16.msra.mxu0 0
    %3161 = vmatprep.subr.bf16.mxu0 0
    %3162 = vmatpush1.bf16.msra.mxu0 0
    %3163 = vmatprep.subr.bf16.mxu0 0
    %3164 = vmatpush1.bf16.msra.mxu0 0
    %3165 = vmatprep.subr.bf16.mxu0 0
    %3166 = vmatpush1.bf16.msra.mxu0 0
    %3167 = vmatprep.subr.bf16.mxu0 0
    %3168 = vmatpush1.bf16.msra.mxu0 0
    %3169 = vmatprep.subr.bf16.mxu0 0
    %3170 = vmatpush1.bf16.msra.mxu0 %v2762
    %3171 = vmatprep.subr.bf16.mxu0 0
    %3172 = vmatpush2.bf16.msra.mxu0 0
    %3173 = vmatprep.subr.bf16.mxu0 0
    %3174 = vmatpush2.bf16.msra.mxu0 0
    %3175 = vmatprep.subr.bf16.mxu0 0
    %3176 = vmatpush2.bf16.msra.mxu0 0
    %3177 = vmatprep.subr.bf16.mxu0 0
    %3178 = vmatpush2.bf16.msra.mxu0 0
    %3179 = vmatprep.subr.bf16.mxu0 0
    %3180 = vmatpush2.bf16.msra.mxu0 0
    %3181 = vmatprep.subr.bf16.mxu0 0
    %3182 = vmatpush2.bf16.msra.mxu0 0
    %3183 = vmatprep.subr.bf16.mxu0 0
    %3184 = vmatpush2.bf16.msra.mxu0 0
    %3185 = vmatprep.subr.bf16.mxu0 0
    %3186 = vmatpush2.bf16.msra.mxu0 0
    %3187 = vmatprep.mubr.bf16.mxu0 0
    %3188 = vmatmul.mubr.bf16.gmra.mxu0 %v3153
    %v3189 = vpop.f32.mrf.mxu0
    %v3190 = vadd.f32 0.0, %v3189
    %v3191 = vpop.f32.mrf.mxu0
    %v3192 = vpop.f32.mrf.mxu0
    %v3193 = vpop.f32.mrf.mxu0
    %3194 = vdwg.mxu0
    %v3195 = vmul.f32 %v185, %v3190
    %v3196 = vmul.f32 %v2657, %v148
    %v3197 = vmul.f32 %v2660, %v149
    %v3198 = vmul.f32 %v2665, %v150
    %v3199 = vld [vmem:[#allocation9] sm:$0x3]
    %v3200 = vpack.c.bf16 %v3197, %v3196
    %v3201 = vpack.c.bf16 %v3198, %v3198
    %3204 = vrot.lane.b32.xlu0 %v3200, 120
    %v3205 = vpop.permute.xlu0 %3204
    %3206 = vrot.lane.b32.xlu0 %v3201, 120
    %v3207 = vpop.permute.xlu0 %3206
    %v3209 = vsel %vm2709, %v3205, 0
    %v3212 = vsel %vm2709, %v3207, 0
    %v3215 = vsel %vm2713, %v3199, 0
    %3217 = vmatprep.subr.bf16.mxu0 0
    %3218 = vmatpush1.bf16.msra.mxu0 0
    %3219 = vmatprep.subr.bf16.mxu0 0
    %3220 = vmatpush1.bf16.msra.mxu0 0
    %3221 = vmatprep.subr.bf16.mxu0 0
    %3222 = vmatpush1.bf16.msra.mxu0 0
    %3223 = vmatprep.subr.bf16.mxu0 0
    %3224 = vmatpush1.bf16.msra.mxu0 0
    %3225 = vmatprep.subr.bf16.mxu0 0
    %3226 = vmatpush1.bf16.msra.mxu0 0
    %3227 = vmatprep.subr.bf16.mxu0 0
    %3228 = vmatpush1.bf16.msra.mxu0 0
    %3229 = vmatprep.subr.bf16.mxu0 0
    %3230 = vmatpush1.bf16.msra.mxu0 0
    %3231 = vmatprep.subr.bf16.mxu0 0
    %3232 = vmatpush1.bf16.msra.mxu0 %v3215
    %3233 = vmatprep.subr.bf16.mxu0 0
    %3234 = vmatpush2.bf16.msra.mxu0 0
    %3235 = vmatprep.subr.bf16.mxu0 0
    %3236 = vmatpush2.bf16.msra.mxu0 0
    %3237 = vmatprep.subr.bf16.mxu0 0
    %3238 = vmatpush2.bf16.msra.mxu0 0
    %3239 = vmatprep.subr.bf16.mxu0 0
    %3240 = vmatpush2.bf16.msra.mxu0 0
    %3241 = vmatprep.subr.bf16.mxu0 0
    %3242 = vmatpush2.bf16.msra.mxu0 0
    %3243 = vmatprep.subr.bf16.mxu0 0
    %3244 = vmatpush2.bf16.msra.mxu0 0
    %3245 = vmatprep.subr.bf16.mxu0 0
    %3246 = vmatpush2.bf16.msra.mxu0 0
    %3247 = vmatprep.subr.bf16.mxu0 0
    %3248 = vmatpush2.bf16.msra.mxu0 0
    %3249 = vmatprep.mubr.bf16.mxu0 0
    %3250 = vmatmul.mubr.bf16.gmra.mxu0 %v3209
    %v3251 = vpop.f32.mrf.mxu0
    %v3252 = vadd.f32 0.0, %v3251
    %v3253 = vpop.f32.mrf.mxu0
    %v3254 = vpop.f32.mrf.mxu0
    %v3255 = vadd.f32 0.0, %v3254
    %v3256 = vpop.f32.mrf.mxu0
    %3257 = vmatprep.mubr.bf16.mxu0 0
    %3258 = vmatmul.mubr.bf16.gmra.mxu0 %v3212
    %v3259 = vpop.f32.mrf.mxu0
    %v3260 = vadd.f32 0.0, %v3259
    %v3261 = vpop.f32.mrf.mxu0
    %v3262 = vpop.f32.mrf.mxu0
    %v3263 = vpop.f32.mrf.mxu0
    %3264 = vdwg.mxu0
    %v3265 = vsel %vm1094, %v3195, -1e+30
    %v3266 = vsel %vm856, %v3265, -inf
    %3267 = vmax.xlane.f32.xlu0 %v3266
    %v3268 = vpop.xlane.xlu0 %3267
    %v3269 = vsub.f32 %v3265, %v3268
    %v3270 = vmul.f32 %v3269, 1.442695
    %v3271 = vpow.pop %v3270
    %v3272 = vmul.f32 %v3271, %v197
    %v3273 = vsel %vm856, %v3272, 0.0
    %3274 = vadd.xlane.f32.xlu0 %v3273
    %v3275 = vpop.xlane.xlu0 %3274
    %v3276 = vpack.c.bf16 %v3272, %v3272
    %v3277 = vpack.c.bf16 %v3255, %v3252
    %v3278 = vpack.c.bf16 %v3260, %v3260
    %v3280 = vsel %vm856, %v3276, 0
    %v3283 = vsel %vm873, %v3278, 0
    %3285 = vmatprep.subr.bf16.mxu0 0
    %3286 = vmatpush1.bf16.msra.mxu0 0
    %3287 = vmatprep.subr.bf16.mxu0 0
    %3288 = vmatpush1.bf16.msra.mxu0 0
    %3289 = vmatprep.subr.bf16.mxu0 0
    %3290 = vmatpush1.bf16.msra.mxu0 0
    %3291 = vmatprep.subr.bf16.mxu0 0
    %3292 = vmatpush1.bf16.msra.mxu0 0
    %3293 = vmatprep.subr.bf16.mxu0 0
    %3294 = vmatpush1.bf16.msra.mxu0 0
    %3295 = vmatprep.subr.bf16.mxu0 0
    %3296 = vmatpush1.bf16.msra.mxu0 0
    %3297 = vmatprep.subr.bf16.mxu0 0
    %3298 = vmatpush1.bf16.msra.mxu0 %v3283
    %3299 = vmatprep.subr.bf16.mxu0 0
    %3300 = vmatpush1.bf16.msra.mxu0 %v3277
    %3301 = vmatprep.subr.bf16.mxu0 0
    %3302 = vmatpush2.bf16.msra.mxu0 0
    %3303 = vmatprep.subr.bf16.mxu0 0
    %3304 = vmatpush2.bf16.msra.mxu0 0
    %3305 = vmatprep.subr.bf16.mxu0 0
    %3306 = vmatpush2.bf16.msra.mxu0 0
    %3307 = vmatprep.subr.bf16.mxu0 0
    %3308 = vmatpush2.bf16.msra.mxu0 0
    %3309 = vmatprep.subr.bf16.mxu0 0
    %3310 = vmatpush2.bf16.msra.mxu0 0
    %3311 = vmatprep.subr.bf16.mxu0 0
    %3312 = vmatpush2.bf16.msra.mxu0 0
    %3313 = vmatprep.subr.bf16.mxu0 0
    %3314 = vmatpush2.bf16.msra.mxu0 0
    %3315 = vmatprep.subr.bf16.mxu0 0
    %3316 = vmatpush2.bf16.msra.mxu0 0
    %3317 = vmatprep.mubr.bf16.mxu0 0
    %3318 = vmatmul.mubr.bf16.gmra.mxu0 %v3280
    %v3319 = vpop.f32.mrf.mxu0
    %v3320 = vadd.f32 0.0, %v3319
    %v3321 = vpop.f32.mrf.mxu0
    %v3322 = vpop.f32.mrf.mxu0
    %v3323 = vpop.f32.mrf.mxu0
    %3324 = vdwg.mxu0
    %vm3325 = vcmp.gt.f32.partialorder %v3275, 0.0
    %v3326 = vsel %vm3325, %v3275, 1.0
    %v3327 = vrcp.pop %v3326
    %v3328 = vmul.f32 %v3320, %v3327
    %s3329 = scalar_lea.vmem [#allocation8], 4
    %v3330 = vld [vmem:[%s3329] sm:$0x3]
    %v3331 = vpack.c.bf16 %v2665, %v2665
    %3333 = vrot.lane.b32.xlu0 %v3331, 124
    %v3334 = vpop.permute.xlu0 %3333
    %v3336 = vsel %vm2709, %v3334, 0
    %v3339 = vsel %vm2713, %v3330, 0
    %3341 = vmatprep.subr.bf16.mxu0 0
    %3342 = vmatpush1.bf16.msra.mxu0 0
    %3343 = vmatprep.subr.bf16.mxu0 0
    %3344 = vmatpush1.bf16.msra.mxu0 0
    %3345 = vmatprep.subr.bf16.mxu0 0
    %3346 = vmatpush1.bf16.msra.mxu0 0
    %3347 = vmatprep.subr.bf16.mxu0 0
    %3348 = vmatpush1.bf16.msra.mxu0 0
    %3349 = vmatprep.subr.bf16.mxu0 0
    %3350 = vmatpush1.bf16.msra.mxu0 0
    %3351 = vmatprep.subr.bf16.mxu0 0
    %3352 = vmatpush1.bf16.msra.mxu0 0
    %3353 = vmatprep.subr.bf16.mxu0 0
    %3354 = vmatpush1.bf16.msra.mxu0 0
    %3355 = vmatprep.subr.bf16.mxu0 0
    %3356 = vmatpush1.bf16.msra.mxu0 %v3339
    %3357 = vmatprep.subr.bf16.mxu0 0
    %3358 = vmatpush2.bf16.msra.mxu0 0
    %3359 = vmatprep.subr.bf16.mxu0 0
    %3360 = vmatpush2.bf16.msra.mxu0 0
    %3361 = vmatprep.subr.bf16.mxu0 0
    %3362 = vmatpush2.bf16.msra.mxu0 0
    %3363 = vmatprep.subr.bf16.mxu0 0
    %3364 = vmatpush2.bf16.msra.mxu0 0
    %3365 = vmatprep.subr.bf16.mxu0 0
    %3366 = vmatpush2.bf16.msra.mxu0 0
    %3367 = vmatprep.subr.bf16.mxu0 0
    %3368 = vmatpush2.bf16.msra.mxu0 0
    %3369 = vmatprep.subr.bf16.mxu0 0
    %3370 = vmatpush2.bf16.msra.mxu0 0
    %3371 = vmatprep.subr.bf16.mxu0 0
    %3372 = vmatpush2.bf16.msra.mxu0 0
    %3373 = vmatprep.mubr.bf16.mxu0 0
    %3374 = vmatmul.mubr.bf16.gmra.mxu0 %v3336
    %v3375 = vpop.f32.mrf.mxu0
    %v3376 = vadd.f32 0.0, %v3375
    %v3377 = vpop.f32.mrf.mxu0
    %v3378 = vpop.f32.mrf.mxu0
    %v3379 = vpop.f32.mrf.mxu0
    %3380 = vdwg.mxu0
    %v3381 = vpack.c.bf16 %v3376, %v3376
    %v3383 = vsel %vm2709, %v3381, 0
    %3385 = vmatprep.subr.bf16.mxu0 0
    %3386 = vmatpush1.bf16.msra.mxu0 0
    %3387 = vmatprep.subr.bf16.mxu0 0
    %3388 = vmatpush1.bf16.msra.mxu0 0
    %3389 = vmatprep.subr.bf16.mxu0 0
    %3390 = vmatpush1.bf16.msra.mxu0 0
    %3391 = vmatprep.subr.bf16.mxu0 0
    %3392 = vmatpush1.bf16.msra.mxu0 0
    %3393 = vmatprep.subr.bf16.mxu0 0
    %3394 = vmatpush1.bf16.msra.mxu0 0
    %3395 = vmatprep.subr.bf16.mxu0 0
    %3396 = vmatpush1.bf16.msra.mxu0 0
    %3397 = vmatprep.subr.bf16.mxu0 0
    %3398 = vmatpush1.bf16.msra.mxu0 0
    %3399 = vmatprep.subr.bf16.mxu0 0
    %3400 = vmatpush1.bf16.msra.mxu0 %v2762
    %3401 = vmatprep.subr.bf16.mxu0 0
    %3402 = vmatpush2.bf16.msra.mxu0 0
    %3403 = vmatprep.subr.bf16.mxu0 0
    %3404 = vmatpush2.bf16.msra.mxu0 0
    %3405 = vmatprep.subr.bf16.mxu0 0
    %3406 = vmatpush2.bf16.msra.mxu0 0
    %3407 = vmatprep.subr.bf16.mxu0 0
    %3408 = vmatpush2.bf16.msra.mxu0 0
    %3409 = vmatprep.subr.bf16.mxu0 0
    %3410 = vmatpush2.bf16.msra.mxu0 0
    %3411 = vmatprep.subr.bf16.mxu0 0
    %3412 = vmatpush2.bf16.msra.mxu0 0
    %3413 = vmatprep.subr.bf16.mxu0 0
    %3414 = vmatpush2.bf16.msra.mxu0 0
    %3415 = vmatprep.subr.bf16.mxu0 0
    %3416 = vmatpush2.bf16.msra.mxu0 0
    %3417 = vmatprep.mubr.bf16.mxu0 0
    %3418 = vmatmul.mubr.bf16.gmra.mxu0 %v3383
    %v3419 = vpop.f32.mrf.mxu0
    %v3420 = vadd.f32 0.0, %v3419
    %v3421 = vpop.f32.mrf.mxu0
    %v3422 = vpop.f32.mrf.mxu0
    %v3423 = vpop.f32.mrf.mxu0
    %3424 = vdwg.mxu0
    %v3425 = vmul.f32 %v185, %v3420
    %s3426 = scalar_lea.vmem [#allocation9], 4
    %v3427 = vld [vmem:[%s3426] sm:$0x3]
    %v3429 = vsel %vm2713, %v3427, 0
    %3431 = vmatprep.subr.bf16.mxu0 0
    %3432 = vmatpush1.bf16.msra.mxu0 0
    %3433 = vmatprep.subr.bf16.mxu0 0
    %3434 = vmatpush1.bf16.msra.mxu0 0
    %3435 = vmatprep.subr.bf16.mxu0 0
    %3436 = vmatpush1.bf16.msra.mxu0 0
    %3437 = vmatprep.subr.bf16.mxu0 0
    %3438 = vmatpush1.bf16.msra.mxu0 0
    %3439 = vmatprep.subr.bf16.mxu0 0
    %3440 = vmatpush1.bf16.msra.mxu0 0
    %3441 = vmatprep.subr.bf16.mxu0 0
    %3442 = vmatpush1.bf16.msra.mxu0 0
    %3443 = vmatprep.subr.bf16.mxu0 0
    %3444 = vmatpush1.bf16.msra.mxu0 0
    %3445 = vmatprep.subr.bf16.mxu0 0
    %3446 = vmatpush1.bf16.msra.mxu0 %v3429
    %3447 = vmatprep.subr.bf16.mxu0 0
    %3448 = vmatpush2.bf16.msra.mxu0 0
    %3449 = vmatprep.subr.bf16.mxu0 0
    %3450 = vmatpush2.bf16.msra.mxu0 0
    %3451 = vmatprep.subr.bf16.mxu0 0
    %3452 = vmatpush2.bf16.msra.mxu0 0
    %3453 = vmatprep.subr.bf16.mxu0 0
    %3454 = vmatpush2.bf16.msra.mxu0 0
    %3455 = vmatprep.subr.bf16.mxu0 0
    %3456 = vmatpush2.bf16.msra.mxu0 0
    %3457 = vmatprep.subr.bf16.mxu0 0
    %3458 = vmatpush2.bf16.msra.mxu0 0
    %3459 = vmatprep.subr.bf16.mxu0 0
    %3460 = vmatpush2.bf16.msra.mxu0 0
    %3461 = vmatprep.subr.bf16.mxu0 0
    %3462 = vmatpush2.bf16.msra.mxu0 0
    %3463 = vmatprep.mubr.bf16.mxu0 0
    %3464 = vmatmul.mubr.bf16.gmra.mxu0 %v3209
    %v3465 = vpop.f32.mrf.mxu0
    %v3466 = vadd.f32 0.0, %v3465
    %v3467 = vpop.f32.mrf.mxu0
    %v3468 = vpop.f32.mrf.mxu0
    %v3469 = vadd.f32 0.0, %v3468
    %v3470 = vpop.f32.mrf.mxu0
    %3471 = vmatprep.mubr.bf16.mxu0 0
    %3472 = vmatmul.mubr.bf16.gmra.mxu0 %v3212
    %v3473 = vpop.f32.mrf.mxu0
    %v3474 = vadd.f32 0.0, %v3473
    %v3475 = vpop.f32.mrf.mxu0
    %v3476 = vpop.f32.mrf.mxu0
    %v3477 = vpop.f32.mrf.mxu0
    %3478 = vdwg.mxu0
    %v3479 = vsel %vm1317, %v3425, -1e+30
    %v3480 = vsel %vm856, %v3479, -inf
    %3481 = vmax.xlane.f32.xlu0 %v3480
    %v3482 = vpop.xlane.xlu0 %3481
    %v3483 = vsub.f32 %v3479, %v3482
    %v3484 = vmul.f32 %v3483, 1.442695
    %v3485 = vpow.pop %v3484
    %v3486 = vmul.f32 %v3485, %v198
    %v3487 = vsel %vm856, %v3486, 0.0
    %3488 = vadd.xlane.f32.xlu0 %v3487
    %v3489 = vpop.xlane.xlu0 %3488
    %v3490 = vpack.c.bf16 %v3486, %v3486
    %v3491 = vpack.c.bf16 %v3469, %v3466
    %v3492 = vpack.c.bf16 %v3474, %v3474
    %v3494 = vsel %vm856, %v3490, 0
    %v3497 = vsel %vm873, %v3492, 0
    %3499 = vmatprep.subr.bf16.mxu0 0
    %3500 = vmatpush1.bf16.msra.mxu0 0
    %3501 = vmatprep.subr.bf16.mxu0 0
    %3502 = vmatpush1.bf16.msra.mxu0 0
    %3503 = vmatprep.subr.bf16.mxu0 0
    %3504 = vmatpush1.bf16.msra.mxu0 0
    %3505 = vmatprep.subr.bf16.mxu0 0
    %3506 = vmatpush1.bf16.msra.mxu0 0
    %3507 = vmatprep.subr.bf16.mxu0 0
    %3508 = vmatpush1.bf16.msra.mxu0 0
    %3509 = vmatprep.subr.bf16.mxu0 0
    %3510 = vmatpush1.bf16.msra.mxu0 0
    %3511 = vmatprep.subr.bf16.mxu0 0
    %3512 = vmatpush1.bf16.msra.mxu0 %v3497
    %3513 = vmatprep.subr.bf16.mxu0 0
    %3514 = vmatpush1.bf16.msra.mxu0 %v3491
    %3515 = vmatprep.subr.bf16.mxu0 0
    %3516 = vmatpush2.bf16.msra.mxu0 0
    %3517 = vmatprep.subr.bf16.mxu0 0
    %3518 = vmatpush2.bf16.msra.mxu0 0
    %3519 = vmatprep.subr.bf16.mxu0 0
    %3520 = vmatpush2.bf16.msra.mxu0 0
    %3521 = vmatprep.subr.bf16.mxu0 0
    %3522 = vmatpush2.bf16.msra.mxu0 0
    %3523 = vmatprep.subr.bf16.mxu0 0
    %3524 = vmatpush2.bf16.msra.mxu0 0
    %3525 = vmatprep.subr.bf16.mxu0 0
    %3526 = vmatpush2.bf16.msra.mxu0 0
    %3527 = vmatprep.subr.bf16.mxu0 0
    %3528 = vmatpush2.bf16.msra.mxu0 0
    %3529 = vmatprep.subr.bf16.mxu0 0
    %3530 = vmatpush2.bf16.msra.mxu0 0
    %3531 = vmatprep.mubr.bf16.mxu0 0
    %3532 = vmatmul.mubr.bf16.gmra.mxu0 %v3494
    %v3533 = vpop.f32.mrf.mxu0
    %v3534 = vadd.f32 0.0, %v3533
    %v3535 = vpop.f32.mrf.mxu0
    %v3536 = vpop.f32.mrf.mxu0
    %v3537 = vpop.f32.mrf.mxu0
    %3538 = vdwg.mxu0
    %vm3539 = vcmp.gt.f32.partialorder %v3489, 0.0
    %v3540 = vsel %vm3539, %v3489, 1.0
    %v3541 = vrcp.pop %v3540
    %v3542 = vmul.f32 %v3534, %v3541
    %v3543 = vmul.f32 %v3099, %v148
    %v3544 = vmul.f32 %v3328, %v149
    %v3545 = vmul.f32 %v3542, %v150
    %v3546 = vmul.f32 %v3099, %v163
    %v3547 = vmul.f32 %v3328, %v164
    %v3548 = vmul.f32 %v3542, %v165
    %v3549 = vmul.f32 %v3099, %v178
    %v3550 = vmul.f32 %v3328, %v179
    %v3551 = vmul.f32 %v3542, %v180
    %3555 = vrot.lane.b32.xlu0 %v3546, 4
    %v3556 = vpop.permute.xlu0 %3555
    %3557 = vrot.lane.b32.xlu0 %v3547, 4
    %v3558 = vpop.permute.xlu0 %3557
    %3559 = vrot.lane.b32.xlu0 %v3548, 4
    %v3560 = vpop.permute.xlu0 %3559
    %3567 = vrot.lane.b32.xlu0 %v3549, 8
    %v3568 = vpop.permute.xlu0 %3567
    %3569 = vrot.lane.b32.xlu0 %v3550, 8
    %v3570 = vpop.permute.xlu0 %3569
    %3571 = vrot.lane.b32.xlu0 %v3551, 8
    %v3572 = vpop.permute.xlu0 %3571
    %v3576 = vsel %vm2709, %v3543, %v3556
    %v3577 = vsel %vm2709, %v3544, %v3558
    %v3578 = vsel %vm2709, %v3545, %v3560
    %vm3579 = vcmask 64512
    %v3580 = vsel %vm3579, %v3576, %v3568
    %v3581 = vsel %vm3579, %v3577, %v3570
    %v3582 = vsel %vm3579, %v3578, %v3572
    %v3583 = vld [vmem:[%s18] sm:$0xf]
    %v3584 = vld [vmem:[%s18 + $0x4] sm:$0x3]
    %v3585 = vpack.c.bf16 %v3581, %v3580
    %v3586 = vpack.c.bf16 %v3582, %v3582
    %v3589 = vunpack.c.l.b16 %v3583
    %v3590 = vunpack.c.l.b16 %v3584
    %v3591 = vpack.c.b16 %v3590, %v3589
    %v3593 = vsel %vm212, %v3585, 0
    %v3596 = vsel %vm212, %v3586, 0
    %v3599 = vsel %vm423, %v3591, 0
    %3601 = vmatprep.subr.bf16.mxu0 0
    %3602 = vmatpush1.bf16.msra.mxu0 0
    %3603 = vmatprep.subr.bf16.mxu0 0
    %3604 = vmatpush1.bf16.msra.mxu0 0
    %3605 = vmatprep.subr.bf16.mxu0 0
    %3606 = vmatpush1.bf16.msra.mxu0 0
    %3607 = vmatprep.subr.bf16.mxu0 0
    %3608 = vmatpush1.bf16.msra.mxu0 0
    %3609 = vmatprep.subr.bf16.mxu0 0
    %3610 = vmatpush1.bf16.msra.mxu0 0
    %3611 = vmatprep.subr.bf16.mxu0 0
    %3612 = vmatpush1.bf16.msra.mxu0 0
    %3613 = vmatprep.subr.bf16.mxu0 0
    %3614 = vmatpush1.bf16.msra.mxu0 0
    %3615 = vmatprep.subr.bf16.mxu0 0
    %3616 = vmatpush1.bf16.msra.mxu0 %v3599
    %3617 = vmatprep.subr.bf16.mxu0 0
    %3618 = vmatpush2.bf16.msra.mxu0 0
    %3619 = vmatprep.subr.bf16.mxu0 0
    %3620 = vmatpush2.bf16.msra.mxu0 0
    %3621 = vmatprep.subr.bf16.mxu0 0
    %3622 = vmatpush2.bf16.msra.mxu0 0
    %3623 = vmatprep.subr.bf16.mxu0 0
    %3624 = vmatpush2.bf16.msra.mxu0 0
    %3625 = vmatprep.subr.bf16.mxu0 0
    %3626 = vmatpush2.bf16.msra.mxu0 0
    %3627 = vmatprep.subr.bf16.mxu0 0
    %3628 = vmatpush2.bf16.msra.mxu0 0
    %3629 = vmatprep.subr.bf16.mxu0 0
    %3630 = vmatpush2.bf16.msra.mxu0 0
    %3631 = vmatprep.subr.bf16.mxu0 0
    %3632 = vmatpush2.bf16.msra.mxu0 0
    %3633 = vmatprep.mubr.bf16.mxu0 0
    %3634 = vmatmul.mubr.bf16.gmra.mxu0 %v3593
    %v3635 = vpop.f32.mrf.mxu0
    %v3636 = vadd.f32 0.0, %v3635
    %v3637 = vpop.f32.mrf.mxu0
    %v3638 = vpop.f32.mrf.mxu0
    %v3639 = vpop.f32.mrf.mxu0
    %3640 = vmatprep.mubr.bf16.mxu0 0
    %3641 = vmatmul.mubr.bf16.gmra.mxu0 %v3596
    %v3642 = vpop.f32.mrf.mxu0
    %v3643 = vpop.f32.mrf.mxu0
    %v3644 = vpop.f32.mrf.mxu0
    %v3645 = vpop.f32.mrf.mxu0
    %3646 = vdwg.mxu0
    %v3647 = vmul.f32 %v3636, %v3636
    %v3648 = vmul.f32 %v3636, %v3647
    %v3649 = vmul.f32 %v3648, 0.044715
    %v3650 = vadd.f32 %v3636, %v3649
    %v3651 = vmul.f32 %v3650, 0.7978846
    %v3652 = vtanh.pop %v3651
    %v3653 = vadd.f32 %v3652, 1.0
    %v3654 = vmul.f32 %v3653, 0.5
    %v3655 = vmul.f32 %v3636, %v3654
    %v3656 = vld [vmem:[%s19] sm:$0xf]
    %v3657 = vld [vmem:[%s19 + $0x4] sm:$0xf]
    %v3658 = vld [vmem:[%s19 + $0x8] sm:$0xf]
    %v3659 = vld [vmem:[%s19 + $0xc] sm:$0xf]
    %v3660 = vld [vmem:[%s19 + $0x10] sm:$0xf]
    %v3661 = vld [vmem:[%s19 + $0x14] sm:$0xf]
    %v3662 = vld [vmem:[%s19 + $0x18] sm:$0xf]
    %v3663 = vld [vmem:[%s19 + $0x1c] sm:$0xf]
    %v3664 = vld [vmem:[%s19 + $0x20] sm:$0xf]
    %v3665 = vld [vmem:[%s19 + $0x24] sm:$0xf]
    %v3666 = vld [vmem:[%s19 + $0x28] sm:$0xf]
    %v3667 = vld [vmem:[%s19 + $0x2c] sm:$0xf]
    %v3680 = vunpack.c.l.b16 %v3656
    %v3681 = vunpack.c.l.b16 %v3657
    %v3682 = vunpack.c.l.b16 %v3658
    %v3683 = vunpack.c.l.b16 %v3659
    %v3684 = vunpack.c.l.b16 %v3660
    %v3685 = vunpack.c.l.b16 %v3661
    %v3686 = vunpack.c.l.b16 %v3662
    %v3687 = vunpack.c.l.b16 %v3663
    %v3688 = vunpack.c.l.b16 %v3664
    %v3689 = vunpack.c.l.b16 %v3665
    %v3690 = vunpack.c.l.b16 %v3666
    %v3691 = vunpack.c.l.b16 %v3667
    %v3692 = vpack.c.b16 %v3681, %v3680
    %v3693 = vpack.c.b16 %v3683, %v3682
    %v3694 = vpack.c.b16 %v3685, %v3684
    %v3695 = vpack.c.b16 %v3687, %v3686
    %v3696 = vpack.c.b16 %v3689, %v3688
    %v3697 = vpack.c.b16 %v3691, %v3690
    %3704 = vmatprep.subr.bf16.mxu0 0
    %3705 = vmatpush1.bf16.msra.mxu0 0
    %3706 = vmatprep.subr.bf16.mxu0 0
    %3707 = vmatpush1.bf16.msra.mxu0 0
    %3708 = vmatprep.subr.bf16.mxu0 0
    %3709 = vmatpush1.bf16.msra.mxu0 %v3697
    %3710 = vmatprep.subr.bf16.mxu0 0
    %3711 = vmatpush1.bf16.msra.mxu0 %v3696
    %3712 = vmatprep.subr.bf16.mxu0 0
    %3713 = vmatpush1.bf16.msra.mxu0 %v3695
    %3714 = vmatprep.subr.bf16.mxu0 0
    %3715 = vmatpush1.bf16.msra.mxu0 %v3694
    %3716 = vmatprep.subr.bf16.mxu0 0
    %3717 = vmatpush1.bf16.msra.mxu0 %v3693
    %3718 = vmatprep.subr.bf16.mxu0 0
    %3719 = vmatpush1.bf16.msra.mxu0 %v3692
    %3720 = vmatprep.subr.bf16.mxu0 0
    %3721 = vmatpush2.bf16.msra.mxu0 0
    %3722 = vmatprep.subr.bf16.mxu0 0
    %3723 = vmatpush2.bf16.msra.mxu0 0
    %3724 = vmatprep.subr.bf16.mxu0 0
    %3725 = vmatpush2.bf16.msra.mxu0 0
    %3726 = vmatprep.subr.bf16.mxu0 0
    %3727 = vmatpush2.bf16.msra.mxu0 0
    %3728 = vmatprep.subr.bf16.mxu0 0
    %3729 = vmatpush2.bf16.msra.mxu0 0
    %3730 = vmatprep.subr.bf16.mxu0 0
    %3731 = vmatpush2.bf16.msra.mxu0 0
    %3732 = vmatprep.subr.bf16.mxu0 0
    %3733 = vmatpush2.bf16.msra.mxu0 0
    %3734 = vmatprep.subr.bf16.mxu0 0
    %3735 = vmatpush2.bf16.msra.mxu0 0
    %3736 = vmatprep.mubr.bf16.mxu0 0
    %3737 = vmatmul.mubr.bf16.gmra.mxu0 %v2617
    %v3738 = vpop.f32.mrf.mxu0
    %v3739 = vadd.f32 0.0, %v3738
    %v3740 = vpop.f32.mrf.mxu0
    %v3741 = vpop.f32.mrf.mxu0
    %v3742 = vpop.f32.mrf.mxu0
    %3743 = vmatprep.mubr.bf16.mxu0 0
    %3744 = vmatmul.mubr.bf16.gmra.mxu0 %v2620
    %v3745 = vpop.f32.mrf.mxu0
    %v3746 = vpop.f32.mrf.mxu0
    %v3747 = vpop.f32.mrf.mxu0
    %v3748 = vpop.f32.mrf.mxu0
    %3749 = vdwg.mxu0
    %s3750 = sld [smem:[#allocation2 + $0x3]]
    %v3751 = vstv %s3750
    %v3752 = vmul.f32 %v3751, %v148
    %s3753 = sld [smem:[#allocation2 + $0x4]]
    %v3754 = vstv %s3753
    %v3755 = vmul.f32 %v3754, %v163
    %v3756 = vadd.f32 %v3752, %v3755
    %s3757 = sld [smem:[#allocation2 + $0x5]]
    %v3758 = vstv %s3757
    %v3759 = vmul.f32 %v3758, %v178
    %v3760 = vadd.f32 %v3756, %v3759
    %v3761 = vmul.f32 %v3655, %v3760
    %v3762 = vsub.f32 1.0, %v3760
    %v3763 = vmul.f32 %v3739, %v3762
    %v3764 = vadd.f32 %v3761, %v3763
    %3765 = vst.msk [vmem:[%s20] sm:$0xff] %vm2709, %v3764
    // Predicated region
    $region102: #{hgt_aug_forward.1} parent=1 // pred_check
      _
    $region103: #{hgt_aug_forward.1} parent=1 // pred_check_branch
      %3767 = sbr.rel (0) target = $region105
    $region104: #{hgt_aug_forward.1} parent=1 // pred_region
      _
    $region105: #{hgt_aug_forward.1} parent=1 // pred_fallthru
      _
    // Predicated region
    $region106: #{hgt_aug_forward.1} parent=1 // pred_check
      _
    $region107: #{hgt_aug_forward.1} parent=1 // pred_check_branch
      %3769 = sbr.rel (0) target = $region109
    $region108: #{hgt_aug_forward.1} parent=1 // pred_region
      _
    $region109: #{hgt_aug_forward.1} parent=1 // pred_fallthru
      _
    %3770 = vsyncpa [#allocation3], 1
    %3771 = vsyncpa [#allocation7], 1
    %3772 = vsyncpa [#allocation10], 1
    %3773 = vsyncpa [#allocation4], 1

</llo_original>
